<compile_context>
chip_gen: v7x
topology: tpu7x:2x2x1
jax: 0.10.0
libtpu: 0.0.40
codegen_flags: <defaults>
</compile_context>

<pallas_src>
import functools

import jax
import jax.numpy as jnp
import numpy as np
from jax.experimental import pallas as pl
from jax.experimental.pallas import tpu as pltpu


# ---------------------------------------------------------------------------
# Fused kernel: conv1 + conv2 (+ torch flatten) + value MLP + concat, all in VMEM
# ---------------------------------------------------------------------------
def _fused_input_multi_kernel(
    x_ref,    # (bt, 768) f32   raw image, flattened (h, w, c) row-major
    v_ref,    # (bt, 8)   f32   flat value observation
    w1_ref,   # (768, 784) bf16 Toeplitz conv1 weight, cols ordered (i, j, c1)
    b1_ref,   # (1, 784)   f32
    w2_ref,   # (784, 800) bf16 Toeplitz conv2 weight, cols ordered (c2, i2, j2)
    b2_ref,   # (1, 800)   f32
    w3_ref,   # (8, 32)    bf16
    b3_ref,   # (1, 32)    f32
    w4_ref,   # (32, 32)   bf16
    b4_ref,   # (1, 32)    f32
    o_ref,    # (bt, 832)  f32  concatenated output
    *, img_out,
):
    f32 = jnp.float32
    bf16 = jnp.bfloat16

    # ---- image branch: conv1+ReLU, conv2+ReLU, torch C-major flatten.
    #      Both convs are single lane-dense matmuls (Toeplitz weights built at init);
    #      conv2's column order already matches nn.Flatten() on the NCHW output, so
    #      no in-kernel transposes/reshapes are needed.
    x = x_ref[...].astype(bf16)                                     # (bt, 768)
    y1 = jnp.dot(x, w1_ref[...], preferred_element_type=f32)        # (bt, 784)
    y1 = jnp.maximum(y1 + b1_ref[...], 0.0).astype(bf16)            # NHWC-flat, on-chip
    y2 = jnp.dot(y1, w2_ref[...], preferred_element_type=f32)       # (bt, 800)
    y2 = jnp.maximum(y2 + b2_ref[...], 0.0)                         # torch-flatten order

    # ---- value branch: Flatten + Linear+ReLU x2.
    v = v_ref[...].astype(bf16)                                     # (bt, 8)
    h = jnp.dot(v, w3_ref[...], preferred_element_type=f32)
    h = jnp.maximum(h + b3_ref[...], 0.0).astype(bf16)
    h = jnp.dot(h, w4_ref[...], preferred_element_type=f32)
    h = jnp.maximum(h + b4_ref[...], 0.0)                           # (bt, 32)

    # ---- torch.cat([img_flat, value], dim=-1): two static lane-slice stores.
    o_ref[:, :img_out] = y2
    o_ref[:, img_out:] = h


# ---------------------------------------------------------------------------
# One-time Toeplitz expansions of the conv weights (init-time, numpy)
# ---------------------------------------------------------------------------
def _toeplitz_conv1(cw1_oihw, H, W, stride):
    """(Co,Ci,kh,kw) OIHW -> (H*W*Ci, Ho*Wo*Co); rows (h,w,c), cols (i,j,co)."""
    cw1 = np.asarray(cw1_oihw, np.float32)
    co, ci, kh, kw = cw1.shape
    ho = (H - kh) // stride + 1
    wo = (W - kw) // stride + 1
    wt = np.transpose(cw1, (2, 3, 1, 0))                 # (kh, kw, ci, co)
    big = np.zeros((H, W, ci, ho, wo, co), np.float32)
    for i in range(ho):
        for j in range(wo):
            big[stride * i:stride * i + kh, stride * j:stride * j + kw, :, i, j, :] = wt
    return big.reshape(H * W * ci, ho * wo * co), ho, wo


def _toeplitz_conv2_flatten(cw2_oihw, hi, wi):
    """(Co,Ci,kh,kw) OIHW -> (hi*wi*Ci, Co*Ho*Wo); rows (i,j,c1), cols (co,i2,j2)
    i.e. the columns are already in torch's NCHW-flatten order."""
    cw2 = np.asarray(cw2_oihw, np.float32)
    co, c1, kh, kw = cw2.shape
    ho = hi - kh + 1
    wo = wi - kw + 1
    wt = np.transpose(cw2, (2, 3, 1, 0))                 # (kh, kw, c1, co)
    big = np.zeros((hi, wi, c1, co, ho, wo), np.float32)
    for i2 in range(ho):
        for j2 in range(wo):
            big[i2:i2 + kh, j2:j2 + kw, :, :, i2, j2] = wt
    return big.reshape(hi * wi * c1, co * ho * wo), ho, wo


# ---------------------------------------------------------------------------
# InputMultiBlock (is_concat=True): image block + value block, concat on dim=-1
# ---------------------------------------------------------------------------
class InputMultiBlockPallas:
    def __init__(self, key, img_hwc=(16, 16, 3), val_dim=8, hidden=32):
        ks = jax.random.split(key, 8)
        H, W, C = img_hwc
        # torch-layout parameters (OIHW convs, (in,out) linears) -- used by the ref.
        self.cw1 = 0.1 * jax.random.normal(ks[0], (16, C, 4, 4), jnp.float32)
        self.cb1 = 0.1 * jax.random.normal(ks[1], (16,), jnp.float32)
        self.cw2 = 0.1 * jax.random.normal(ks[2], (32, 16, 3, 3), jnp.float32)
        self.cb2 = 0.1 * jax.random.normal(ks[3], (32,), jnp.float32)
        self.w1 = 0.1 * jax.random.normal(ks[4], (val_dim, hidden), jnp.float32)
        self.b1 = 0.1 * jax.random.normal(ks[5], (hidden,), jnp.float32)
        self.w2 = 0.1 * jax.random.normal(ks[6], (hidden, hidden), jnp.float32)
        self.b2 = 0.1 * jax.random.normal(ks[7], (hidden,), jnp.float32)

        # geometry
        self.c1, self.c2 = 16, 32
        self.img_in = H * W * C                                     # 768
        self.val_dim = val_dim
        self.hidden = hidden

        # One-time Toeplitz weight expansion: conv1 and conv2 become single
        # lane-dense matmuls; conv2 columns are in torch NCHW-flatten order.
        w1_big, self.ho1, self.wo1 = _toeplitz_conv1(self.cw1, H, W, stride=2)   # 7,7
        w2_big, self.ho2, self.wo2 = _toeplitz_conv2_flatten(self.cw2, self.ho1, self.wo1)  # 5,5
        self.img_out = self.c2 * self.ho2 * self.wo2                # 800
        self.out_size = self.img_out + hidden                       # 832

        cb1 = np.asarray(self.cb1, np.float32)
        cb2 = np.asarray(self.cb2, np.float32)
        # bf16 MXU operands, f32 biases (f32 epilogues on the VPU — v5e-friendly).
        self.k_w1 = jnp.asarray(w1_big, jnp.bfloat16)                       # (768, 784)
        self.k_b1 = jnp.asarray(np.tile(cb1, self.ho1 * self.wo1)[None, :]) # (1, 784)
        self.k_w2 = jnp.asarray(w2_big, jnp.bfloat16)                       # (784, 800)
        self.k_b2 = jnp.asarray(np.repeat(cb2, self.ho2 * self.wo2)[None, :])  # (1, 800)
        self.k_w3 = self.w1.astype(jnp.bfloat16)                            # (8, 32)
        self.k_b3 = self.b1.reshape(1, hidden)
        self.k_w4 = self.w2.astype(jnp.bfloat16)                            # (32, 32)
        self.k_b4 = self.b2.reshape(1, hidden)

        self._forward = jax.jit(self._forward_impl)

    def _forward_impl(self, x_img, x_val):
        B = x_img.shape[0]
        # Wrapper glue is only free contiguous reshapes of the raw inputs.
        x2d = x_img.reshape(B, self.img_in)          # (B, 768) f32
        v2d = x_val.reshape(B, -1)                   # (B, 8)   f32

        # Batch tiling: bt up to 128 (v5e-safe VMEM, few grid steps); large batches
        # are padded to a multiple of 128 so every block is sublane-aligned and the
        # "parallel" axis can shard across v7x's two TensorCores.
        bt_max = 128
        if B <= bt_max:
            bt, Bp = B, B
        else:
            bt = bt_max
            Bp = ((B + bt - 1) // bt) * bt
            if Bp != B:
                pad = Bp - B
                x2d = jnp.pad(x2d, ((0, pad), (0, 0)))
                v2d = jnp.pad(v2d, ((0, pad), (0, 0)))
        grid = (Bp // bt,)

        kern = functools.partial(_fused_input_multi_kernel, img_out=self.img_out)
        resident = lambda i: (0, 0)        # weights: constant block -> DMA'd once
        in_specs = [
            pl.BlockSpec((bt, self.img_in), lambda i: (i, 0)),
            pl.BlockSpec((bt, v2d.shape[1]), lambda i: (i, 0)),
            pl.BlockSpec(self.k_w1.shape, resident),
            pl.BlockSpec(self.k_b1.shape, resident),
            pl.BlockSpec(self.k_w2.shape, resident),
            pl.BlockSpec(self.k_b2.shape, resident),
            pl.BlockSpec(self.k_w3.shape, resident),
            pl.BlockSpec(self.k_b3.shape, resident),
            pl.BlockSpec(self.k_w4.shape, resident),
            pl.BlockSpec(self.k_b4.shape, resident),
        ]
        out_specs = pl.BlockSpec((bt, self.out_size), lambda i: (i, 0))

        out = pl.pallas_call(
            kern,
            out_shape=jax.ShapeDtypeStruct((Bp, self.out_size), jnp.float32),
            grid=grid,
            in_specs=in_specs,
            out_specs=out_specs,
            compiler_params=pltpu.CompilerParams(
                dimension_semantics=("parallel",),
                vmem_limit_bytes=32 * 1024 * 1024),
        )(x2d, v2d, self.k_w1, self.k_b1, self.k_w2, self.k_b2,
          self.k_w3, self.k_b3, self.k_w4, self.k_b4)
        return out[:B] if Bp != B else out

    def __call__(self, x_list):
        x_img, x_val = x_list   # in_indices order = space order in the MultiSpace
        return self._forward(x_img, x_val)


# pure-JAX f32 reference for a correctness sanity check
def _reference(block, x_list):
    x_img, x_val = x_list
    h = jnp.transpose(x_img, (0, 3, 1, 2))                       # NHWC -> NCHW
    h = jax.lax.conv_general_dilated(h, block.cw1, (2, 2), "VALID",
                                     dimension_numbers=("NCHW", "OIHW", "NCHW"))
    h = jnp.maximum(h + block.cb1[None, :, None, None], 0.0)
    h = jax.lax.conv_general_dilated(h, block.cw2, (1, 1), "VALID",
                                     dimension_numbers=("NCHW", "OIHW", "NCHW"))
    h = jnp.maximum(h + block.cb2[None, :, None, None], 0.0)
    h = h.reshape(h.shape[0], -1)                                # torch nn.Flatten()
    v = x_val.reshape(x_val.shape[0], -1)
    v = jnp.maximum(v @ block.w1 + block.b1, 0.0)
    v = jnp.maximum(v @ block.w2 + block.b2, 0.0)
    return jnp.concatenate([h, v], axis=-1)


if __name__ == "__main__":
    key = jax.random.PRNGKey(0)
    k_params, k_img, k_val = jax.random.split(key, 3)

    B = 2
    x_img = jax.random.normal(k_img, (B, 16, 16, 3), jnp.float32)  # COLOR obs (HWC)
    x_val = jax.random.normal(k_val, (B, 8), jnp.float32)          # flat value obs

    block = InputMultiBlockPallas(k_params, img_hwc=(16, 16, 3), val_dim=8, hidden=32)

    out = jax.block_until_ready(block([x_img, x_val]))
    assert out.shape == (B, block.out_size), out.shape

    ref = jax.block_until_ready(_reference(block, [x_img, x_val]))
    np.testing.assert_allclose(np.asarray(out), np.asarray(ref), rtol=2e-2, atol=2e-2)

    print("KERNEL_OK")
</pallas_src>

<mosaic_0001>
module attributes {stable_mosaic.version = 11 : i64} {
  func.func @_fused_input_multi_kernel(%arg0: i32, %arg1: memref<2x768xf32, #tpu.memory_space<vmem>>, %arg2: memref<2x8xf32, #tpu.memory_space<vmem>>, %arg3: memref<768x784xbf16, #tpu.memory_space<vmem>>, %arg4: memref<1x784xf32, #tpu.memory_space<vmem>>, %arg5: memref<784x800xbf16, #tpu.memory_space<vmem>>, %arg6: memref<1x800xf32, #tpu.memory_space<vmem>>, %arg7: memref<8x32xbf16, #tpu.memory_space<vmem>>, %arg8: memref<1x32xf32, #tpu.memory_space<vmem>>, %arg9: memref<32x32xbf16, #tpu.memory_space<vmem>>, %arg10: memref<1x32xf32, #tpu.memory_space<vmem>>, %arg11: memref<2x832xf32, #tpu.memory_space<vmem>>) attributes {dimension_semantics = [#tpu.dimension_semantics<parallel>], iteration_bounds = array<i64: 1>, scalar_prefetch = 0 : i64, scratch_operands = 0 : i64, tpu.core_type = #tpu.core_type<tc>, window_params = [{transform_indices = @transform_0, window_bounds = array<i64: 2, 768>}, {transform_indices = @transform_1, window_bounds = array<i64: 2, 8>}, {pipeline_mode = #tpu.pipeline_mode<synchronous>, transform_indices = @transform_2, window_bounds = array<i64: 768, 784>}, {pipeline_mode = #tpu.pipeline_mode<synchronous>, transform_indices = @transform_3, window_bounds = array<i64: 1, 784>}, {pipeline_mode = #tpu.pipeline_mode<synchronous>, transform_indices = @transform_4, window_bounds = array<i64: 784, 800>}, {pipeline_mode = #tpu.pipeline_mode<synchronous>, transform_indices = @transform_5, window_bounds = array<i64: 1, 800>}, {pipeline_mode = #tpu.pipeline_mode<synchronous>, transform_indices = @transform_6, window_bounds = array<i64: 8, 32>}, {pipeline_mode = #tpu.pipeline_mode<synchronous>, transform_indices = @transform_7, window_bounds = array<i64: 1, 32>}, {pipeline_mode = #tpu.pipeline_mode<synchronous>, transform_indices = @transform_8, window_bounds = array<i64: 32, 32>}, {pipeline_mode = #tpu.pipeline_mode<synchronous>, transform_indices = @transform_9, window_bounds = array<i64: 1, 32>}, {transform_indices = @transform_10, window_bounds = array<i64: 2, 832>}]} {
    %c0 = arith.constant 0 : index
    %c0_0 = arith.constant 0 : index
    %0 = vector.load %arg1[%c0, %c0_0] : memref<2x768xf32, #tpu.memory_space<vmem>>, vector<2x768xf32>
    %1 = arith.truncf %0 : vector<2x768xf32> to vector<2x768xbf16>
    %c0_1 = arith.constant 0 : index
    %c0_2 = arith.constant 0 : index
    %2 = vector.load %arg3[%c0_1, %c0_2] : memref<768x784xbf16, #tpu.memory_space<vmem>>, vector<768x784xbf16>
    %cst = arith.constant dense<0.000000e+00> : vector<2x784xf32>
    %3 = tpu.matmul %1, %2, %cst {dimension_numbers = #tpu.dot_dimension_numbers<[1], [0], [0], [1], [0, 0, 1, 1], [], []>} : vector<2x768xbf16>, vector<768x784xbf16>, vector<2x784xf32> -> vector<2x784xf32>
    %c0_3 = arith.constant 0 : index
    %c0_4 = arith.constant 0 : index
    %4 = vector.load %arg4[%c0_3, %c0_4] : memref<1x784xf32, #tpu.memory_space<vmem>>, vector<1x784xf32>
    %5 = vector.broadcast %4 : vector<1x784xf32> to vector<2x784xf32>
    %6 = arith.addf %3, %5 : vector<2x784xf32>
    %cst_5 = arith.constant 0.000000e+00 : f32
    %7 = vector.broadcast %cst_5 : f32 to vector<2x784xf32>
    %8 = arith.maximumf %6, %7 : vector<2x784xf32>
    %9 = arith.truncf %8 : vector<2x784xf32> to vector<2x784xbf16>
    %c0_6 = arith.constant 0 : index
    %c0_7 = arith.constant 0 : index
    %10 = vector.load %arg5[%c0_6, %c0_7] : memref<784x800xbf16, #tpu.memory_space<vmem>>, vector<784x800xbf16>
    %cst_8 = arith.constant dense<0.000000e+00> : vector<2x800xf32>
    %11 = tpu.matmul %9, %10, %cst_8 {dimension_numbers = #tpu.dot_dimension_numbers<[1], [0], [0], [1], [0, 0, 1, 1], [], []>} : vector<2x784xbf16>, vector<784x800xbf16>, vector<2x800xf32> -> vector<2x800xf32>
    %c0_9 = arith.constant 0 : index
    %c0_10 = arith.constant 0 : index
    %12 = vector.load %arg6[%c0_9, %c0_10] : memref<1x800xf32, #tpu.memory_space<vmem>>, vector<1x800xf32>
    %13 = vector.broadcast %12 : vector<1x800xf32> to vector<2x800xf32>
    %14 = arith.addf %11, %13 : vector<2x800xf32>
    %cst_11 = arith.constant 0.000000e+00 : f32
    %15 = vector.broadcast %cst_11 : f32 to vector<2x800xf32>
    %16 = arith.maximumf %14, %15 : vector<2x800xf32>
    %c0_12 = arith.constant 0 : index
    %c0_13 = arith.constant 0 : index
    %17 = vector.load %arg2[%c0_12, %c0_13] : memref<2x8xf32, #tpu.memory_space<vmem>>, vector<2x8xf32>
    %18 = arith.truncf %17 : vector<2x8xf32> to vector<2x8xbf16>
    %c0_14 = arith.constant 0 : index
    %c0_15 = arith.constant 0 : index
    %19 = vector.load %arg7[%c0_14, %c0_15] : memref<8x32xbf16, #tpu.memory_space<vmem>>, vector<8x32xbf16>
    %cst_16 = arith.constant dense<0.000000e+00> : vector<2x32xf32>
    %20 = tpu.matmul %18, %19, %cst_16 {dimension_numbers = #tpu.dot_dimension_numbers<[1], [0], [0], [1], [0, 0, 1, 1], [], []>} : vector<2x8xbf16>, vector<8x32xbf16>, vector<2x32xf32> -> vector<2x32xf32>
    %c0_17 = arith.constant 0 : index
    %c0_18 = arith.constant 0 : index
    %21 = vector.load %arg8[%c0_17, %c0_18] : memref<1x32xf32, #tpu.memory_space<vmem>>, vector<1x32xf32>
    %22 = vector.broadcast %21 : vector<1x32xf32> to vector<2x32xf32>
    %23 = arith.addf %20, %22 : vector<2x32xf32>
    %cst_19 = arith.constant 0.000000e+00 : f32
    %24 = vector.broadcast %cst_19 : f32 to vector<2x32xf32>
    %25 = arith.maximumf %23, %24 : vector<2x32xf32>
    %26 = arith.truncf %25 : vector<2x32xf32> to vector<2x32xbf16>
    %c0_20 = arith.constant 0 : index
    %c0_21 = arith.constant 0 : index
    %27 = vector.load %arg9[%c0_20, %c0_21] : memref<32x32xbf16, #tpu.memory_space<vmem>>, vector<32x32xbf16>
    %cst_22 = arith.constant dense<0.000000e+00> : vector<2x32xf32>
    %28 = tpu.matmul %26, %27, %cst_22 {dimension_numbers = #tpu.dot_dimension_numbers<[1], [0], [0], [1], [0, 0, 1, 1], [], []>} : vector<2x32xbf16>, vector<32x32xbf16>, vector<2x32xf32> -> vector<2x32xf32>
    %c0_23 = arith.constant 0 : index
    %c0_24 = arith.constant 0 : index
    %29 = vector.load %arg10[%c0_23, %c0_24] : memref<1x32xf32, #tpu.memory_space<vmem>>, vector<1x32xf32>
    %30 = vector.broadcast %29 : vector<1x32xf32> to vector<2x32xf32>
    %31 = arith.addf %28, %30 : vector<2x32xf32>
    %cst_25 = arith.constant 0.000000e+00 : f32
    %32 = vector.broadcast %cst_25 : f32 to vector<2x32xf32>
    %33 = arith.maximumf %31, %32 : vector<2x32xf32>
    %c0_26 = arith.constant 0 : index
    %c0_27 = arith.constant 0 : index
    %34 = vector.load %arg11[%c0_26, %c0_27] : memref<2x832xf32, #tpu.memory_space<vmem>>, vector<2x800xf32>
    tpu.vector_store %arg11[%c0_26, %c0_27], %16 {strides = array<i32>} : memref<2x832xf32, #tpu.memory_space<vmem>>, vector<2x800xf32>,
    %c0_28 = arith.constant 0 : index
    %c800 = arith.constant 800 : index
    %35 = vector.load %arg11[%c0_28, %c800] : memref<2x832xf32, #tpu.memory_space<vmem>>, vector<2x32xf32>
    tpu.vector_store %arg11[%c0_28, %c800], %33 {strides = array<i32>} : memref<2x832xf32, #tpu.memory_space<vmem>>, vector<2x32xf32>,
    return
  }
  func.func @transform_0(%arg0: i32) -> (i32, i32) {
    %c0_i32 = arith.constant 0 : i32
    %c0_i32_0 = arith.constant 0 : i32
    return %arg0, %c0_i32 : i32, i32
  }
  func.func @transform_1(%arg0: i32) -> (i32, i32) {
    %c0_i32 = arith.constant 0 : i32
    %c0_i32_0 = arith.constant 0 : i32
    return %arg0, %c0_i32 : i32, i32
  }
  func.func @transform_2(%arg0: i32) -> (i32, i32) {
    %c0_i32 = arith.constant 0 : i32
    %c0_i32_0 = arith.constant 0 : i32
    %c0_i32_1 = arith.constant 0 : i32
    return %c0_i32, %c0_i32_0 : i32, i32
  }
  func.func @transform_3(%arg0: i32) -> (i32, i32) {
    %c0_i32 = arith.constant 0 : i32
    %c0_i32_0 = arith.constant 0 : i32
    %c0_i32_1 = arith.constant 0 : i32
    return %c0_i32, %c0_i32_0 : i32, i32
  }
  func.func @transform_4(%arg0: i32) -> (i32, i32) {
    %c0_i32 = arith.constant 0 : i32
    %c0_i32_0 = arith.constant 0 : i32
    %c0_i32_1 = arith.constant 0 : i32
    return %c0_i32, %c0_i32_0 : i32, i32
  }
  func.func @transform_5(%arg0: i32) -> (i32, i32) {
    %c0_i32 = arith.constant 0 : i32
    %c0_i32_0 = arith.constant 0 : i32
    %c0_i32_1 = arith.constant 0 : i32
    return %c0_i32, %c0_i32_0 : i32, i32
  }
  func.func @transform_6(%arg0: i32) -> (i32, i32) {
    %c0_i32 = arith.constant 0 : i32
    %c0_i32_0 = arith.constant 0 : i32
    %c0_i32_1 = arith.constant 0 : i32
    return %c0_i32, %c0_i32_0 : i32, i32
  }
  func.func @transform_7(%arg0: i32) -> (i32, i32) {
    %c0_i32 = arith.constant 0 : i32
    %c0_i32_0 = arith.constant 0 : i32
    %c0_i32_1 = arith.constant 0 : i32
    return %c0_i32, %c0_i32_0 : i32, i32
  }
  func.func @transform_8(%arg0: i32) -> (i32, i32) {
    %c0_i32 = arith.constant 0 : i32
    %c0_i32_0 = arith.constant 0 : i32
    %c0_i32_1 = arith.constant 0 : i32
    return %c0_i32, %c0_i32_0 : i32, i32
  }
  func.func @transform_9(%arg0: i32) -> (i32, i32) {
    %c0_i32 = arith.constant 0 : i32
    %c0_i32_0 = arith.constant 0 : i32
    %c0_i32_1 = arith.constant 0 : i32
    return %c0_i32, %c0_i32_0 : i32, i32
  }
  func.func @transform_10(%arg0: i32) -> (i32, i32) {
    %c0_i32 = arith.constant 0 : i32
    %c0_i32_0 = arith.constant 0 : i32
    return %arg0, %c0_i32 : i32, i32
  }
}

</mosaic_0001>

<llo_original>
// kernel: _forward_impl.1
$region0: #{_forward_impl.1}
  #allocation0 [shape = 'u32[]', space=smem, size = 0x4, offset = 0x4, fixed_abs, tag = 'smem constant byte address 0x4 - core index']
  #allocation1 [shape = 'u32[144,128]{1,0:T(1,128)}', space=vmem, size = 0x12000, scoped, tag = 'internal scratch']
  %s0 = inlined_call_operand.vmem [shape: f32[2,768], index: 0, kind: input, shape index: {}]
  %s1 = inlined_call_operand.vmem [shape: f32[2,8], index: 1, kind: input, shape index: {}]
  %s2 = inlined_call_operand.vmem [shape: bf16[768,784], index: 2, kind: input, shape index: {}]
  %s3 = inlined_call_operand.vmem [shape: f32[1,784], index: 3, kind: input, shape index: {}]
  %s4 = inlined_call_operand.vmem [shape: bf16[784,800], index: 4, kind: input, shape index: {}]
  %s5 = inlined_call_operand.vmem [shape: f32[1,800], index: 5, kind: input, shape index: {}]
  %s6 = inlined_call_operand.vmem [shape: bf16[8,32], index: 6, kind: input, shape index: {}]
  %s7 = inlined_call_operand.vmem [shape: f32[1,32], index: 7, kind: input, shape index: {}]
  %s8 = inlined_call_operand.vmem [shape: bf16[32,32], index: 8, kind: input, shape index: {}]
  %s9 = inlined_call_operand.vmem [shape: f32[1,32], index: 9, kind: input, shape index: {}]
  %s10 = inlined_call_operand.hbm [shape: f32[2,832], index: 10, kind: output, shape index: {}]
  %s11 = sld [smem:[#allocation0]]
  $region50: #{_forward_impl.1} parent=0
    _
  %s13 = ssub.s32 1, %s11
  %s14 = scalar_select 0, %s13, %s11
  $region1: #{_forward_impl.1} parent=0
    #allocation2 [shape = 'u8[7168]{0}', space=vmem, size = 0x1c00, scoped, tag = 'output window, operand 0, single buffered']
    #allocation3 [shape = 's32[1]{0}', space=sflag, size = 0x4, scoped, tag = 'scoped memory for _forward_impl.1']
    %15 = vsyncpa [#allocation3], 0
    // Predicated region
    $region2: #{_forward_impl.1} parent=1 // pred_check
      _
    $region3: #{_forward_impl.1} parent=1 // pred_check_branch
      %17 = sbr.rel (0) target = $region5
    $region4: #{_forward_impl.1} parent=1 // pred_region
      _
    $region5: #{_forward_impl.1} parent=1 // pred_fallthru
      _
    // Predicated region
    $region6: #{_forward_impl.1} parent=1 // pred_check
      _
    $region7: #{_forward_impl.1} parent=1 // pred_check_branch
      %19 = sbr.rel (0) target = $region9
    $region8: #{_forward_impl.1} parent=1 // pred_region
      _
    $region9: #{_forward_impl.1} parent=1 // pred_fallthru
      _
    // Predicated region
    $region10: #{_forward_impl.1} parent=1 // pred_check
      _
    $region11: #{_forward_impl.1} parent=1 // pred_check_branch
      %21 = sbr.rel (0) target = $region13
    $region12: #{_forward_impl.1} parent=1 // pred_region
      _
    $region13: #{_forward_impl.1} parent=1 // pred_fallthru
      _
    // Predicated region
    $region14: #{_forward_impl.1} parent=1 // pred_check
      _
    $region15: #{_forward_impl.1} parent=1 // pred_check_branch
      %23 = sbr.rel (0) target = $region17
    $region16: #{_forward_impl.1} parent=1 // pred_region
      _
    $region17: #{_forward_impl.1} parent=1 // pred_fallthru
      _
    // Predicated region
    $region18: #{_forward_impl.1} parent=1 // pred_check
      _
    $region19: #{_forward_impl.1} parent=1 // pred_check_branch
      %25 = sbr.rel (0) target = $region21
    $region20: #{_forward_impl.1} parent=1 // pred_region
      _
    $region21: #{_forward_impl.1} parent=1 // pred_fallthru
      _
    // Predicated region
    $region22: #{_forward_impl.1} parent=1 // pred_check
      _
    $region23: #{_forward_impl.1} parent=1 // pred_check_branch
      %27 = sbr.rel (0) target = $region25
    $region24: #{_forward_impl.1} parent=1 // pred_region
      _
    $region25: #{_forward_impl.1} parent=1 // pred_fallthru
      _
    // Predicated region
    $region26: #{_forward_impl.1} parent=1 // pred_check
      _
    $region27: #{_forward_impl.1} parent=1 // pred_check_branch
      %29 = sbr.rel (0) target = $region29
    $region28: #{_forward_impl.1} parent=1 // pred_region
      _
    $region29: #{_forward_impl.1} parent=1 // pred_fallthru
      _
    // Predicated region
    $region30: #{_forward_impl.1} parent=1 // pred_check
      _
    $region31: #{_forward_impl.1} parent=1 // pred_check_branch
      %31 = sbr.rel (0) target = $region33
    $region32: #{_forward_impl.1} parent=1 // pred_region
      _
    $region33: #{_forward_impl.1} parent=1 // pred_fallthru
      _
    // Predicated region
    $region34: #{_forward_impl.1} parent=1 // pred_check
      _
    $region35: #{_forward_impl.1} parent=1 // pred_check_branch
      %33 = sbr.rel (0) target = $region37
    $region36: #{_forward_impl.1} parent=1 // pred_region
      _
    $region37: #{_forward_impl.1} parent=1 // pred_fallthru
      _
    // Predicated region
    $region38: #{_forward_impl.1} parent=1 // pred_check
      _
    $region39: #{_forward_impl.1} parent=1 // pred_check_branch
      %35 = sbr.rel (0) target = $region41
    $region40: #{_forward_impl.1} parent=1 // pred_region
      _
    $region41: #{_forward_impl.1} parent=1 // pred_fallthru
      _
    %v37 = vld [vmem:[%s0] sm:$0xff]
    %v38 = vld [vmem:[%s0 + $0x8] sm:$0xf]
    %v41 = vcombine.high %v37, %v37
    %v43 = vunpack.c.l.s4 1983009808
    %v44 = vunpack.c.0.s8 %v43
    %v45 = vlaneseq
    %v46 = vshrl.u32 %v45, 7
    %v47 = vsub.s32 %v44, %v46
    %v48 = vrot.slane %v37, %v47
    %v50 = vunpack.c.l.s4 1983009808
    %v51 = vunpack.c.0.s8 %v50
    %v52 = vlaneseq
    %v53 = vshrl.u32 %v52, 7
    %v54 = vsub.s32 %v51, %v53
    %v55 = vrot.slane %v41, %v54
    %v56 = vcombine.high %v48, %v48
    %v57 = vcombine.high %v55, %v55
    %v59 = vunpack.c.l.s4 1983009808
    %v60 = vunpack.c.0.s8 %v59
    %v61 = vlaneseq
    %v62 = vshrl.u32 %v61, 7
    %v63 = vsub.s32 %v60, %v62
    %v64 = vrot.slane %v38, %v63
    %v65 = vcombine.high %v64, %v64
    %v72 = vpack.c.bf16 %v48, %v48
    %v73 = vpack.c.bf16 %v56, %v56
    %v74 = vpack.c.bf16 %v55, %v55
    %v75 = vpack.c.bf16 %v57, %v57
    %v76 = vpack.c.bf16 %v64, %v64
    %v77 = vpack.c.bf16 %v65, %v65
    %v78 = vld [vmem:[%s2] sm:$0xff]
    %v79 = vld [vmem:[%s2 + $0x8] sm:$0xff]
    %v80 = vld [vmem:[%s2 + $0x10] sm:$0xff]
    %v81 = vld [vmem:[%s2 + $0x18] sm:$0xf]
    %v82 = vld [vmem:[%s2 + $0x1c] sm:$0xff]
    %v83 = vld [vmem:[%s2 + $0x24] sm:$0xff]
    %v84 = vld [vmem:[%s2 + $0x2c] sm:$0xff]
    %v85 = vld [vmem:[%s2 + $0x34] sm:$0xf]
    %v86 = vld [vmem:[%s2 + $0x38] sm:$0xff]
    %v87 = vld [vmem:[%s2 + $0x40] sm:$0xff]
    %v88 = vld [vmem:[%s2 + $0x48] sm:$0xff]
    %v89 = vld [vmem:[%s2 + $0x50] sm:$0xf]
    %v90 = vld [vmem:[%s2 + $0x54] sm:$0xff]
    %v91 = vld [vmem:[%s2 + $0x5c] sm:$0xff]
    %v92 = vld [vmem:[%s2 + $0x64] sm:$0xff]
    %v93 = vld [vmem:[%s2 + $0x6c] sm:$0xf]
    %v94 = vld [vmem:[%s2 + $0x70] sm:$0xff]
    %v95 = vld [vmem:[%s2 + $0x78] sm:$0xff]
    %v96 = vld [vmem:[%s2 + $0x80] sm:$0xff]
    %v97 = vld [vmem:[%s2 + $0x88] sm:$0xf]
    %v98 = vld [vmem:[%s2 + $0x8c] sm:$0xff]
    %v99 = vld [vmem:[%s2 + $0x94] sm:$0xff]
    %v100 = vld [vmem:[%s2 + $0x9c] sm:$0xff]
    %v101 = vld [vmem:[%s2 + $0xa4] sm:$0xf]
    %v102 = vld [vmem:[%s2 + $0xa8] sm:$0xff]
    %v103 = vld [vmem:[%s2 + $0xb0] sm:$0xff]
    %v104 = vld [vmem:[%s2 + $0xb8] sm:$0xff]
    %v105 = vld [vmem:[%s2 + $0xc0] sm:$0xf]
    %v106 = vld [vmem:[%s2 + $0xc4] sm:$0xff]
    %v107 = vld [vmem:[%s2 + $0xcc] sm:$0xff]
    %v108 = vld [vmem:[%s2 + $0xd4] sm:$0xff]
    %v109 = vld [vmem:[%s2 + $0xdc] sm:$0xf]
    %v110 = vld [vmem:[%s2 + $0xe0] sm:$0xff]
    %v111 = vld [vmem:[%s2 + $0xe8] sm:$0xff]
    %v112 = vld [vmem:[%s2 + $0xf0] sm:$0xff]
    %v113 = vld [vmem:[%s2 + $0xf8] sm:$0xf]
    %v114 = vld [vmem:[%s2 + $0xfc] sm:$0xff]
    %v115 = vld [vmem:[%s2 + $0x104] sm:$0xff]
    %v116 = vld [vmem:[%s2 + $0x10c] sm:$0xff]
    %v117 = vld [vmem:[%s2 + $0x114] sm:$0xf]
    %v118 = vld [vmem:[%s2 + $0x118] sm:$0xff]
    %v119 = vld [vmem:[%s2 + $0x120] sm:$0xff]
    %v120 = vld [vmem:[%s2 + $0x128] sm:$0xff]
    %v121 = vld [vmem:[%s2 + $0x130] sm:$0xf]
    %v122 = vld [vmem:[%s2 + $0x134] sm:$0xff]
    %v123 = vld [vmem:[%s2 + $0x13c] sm:$0xff]
    %v124 = vld [vmem:[%s2 + $0x144] sm:$0xff]
    %v125 = vld [vmem:[%s2 + $0x14c] sm:$0xf]
    %v126 = vld [vmem:[%s2 + $0x150] sm:$0xff]
    %v127 = vld [vmem:[%s2 + $0x158] sm:$0xff]
    %v128 = vld [vmem:[%s2 + $0x160] sm:$0xff]
    %v129 = vld [vmem:[%s2 + $0x168] sm:$0xf]
    %v130 = vld [vmem:[%s2 + $0x16c] sm:$0xff]
    %v131 = vld [vmem:[%s2 + $0x174] sm:$0xff]
    %v132 = vld [vmem:[%s2 + $0x17c] sm:$0xff]
    %v133 = vld [vmem:[%s2 + $0x184] sm:$0xf]
    %v134 = vld [vmem:[%s2 + $0x188] sm:$0xff]
    %v135 = vld [vmem:[%s2 + $0x190] sm:$0xff]
    %v136 = vld [vmem:[%s2 + $0x198] sm:$0xff]
    %v137 = vld [vmem:[%s2 + $0x1a0] sm:$0xf]
    %v138 = vld [vmem:[%s2 + $0x1a4] sm:$0xff]
    %v139 = vld [vmem:[%s2 + $0x1ac] sm:$0xff]
    %v140 = vld [vmem:[%s2 + $0x1b4] sm:$0xff]
    %v141 = vld [vmem:[%s2 + $0x1bc] sm:$0xf]
    %v142 = vld [vmem:[%s2 + $0x1c0] sm:$0xff]
    %v143 = vld [vmem:[%s2 + $0x1c8] sm:$0xff]
    %v144 = vld [vmem:[%s2 + $0x1d0] sm:$0xff]
    %v145 = vld [vmem:[%s2 + $0x1d8] sm:$0xf]
    %v146 = vld [vmem:[%s2 + $0x1dc] sm:$0xff]
    %v147 = vld [vmem:[%s2 + $0x1e4] sm:$0xff]
    %v148 = vld [vmem:[%s2 + $0x1ec] sm:$0xff]
    %v149 = vld [vmem:[%s2 + $0x1f4] sm:$0xf]
    %v150 = vld [vmem:[%s2 + $0x1f8] sm:$0xff]
    %v151 = vld [vmem:[%s2 + $0x200] sm:$0xff]
    %v152 = vld [vmem:[%s2 + $0x208] sm:$0xff]
    %v153 = vld [vmem:[%s2 + $0x210] sm:$0xf]
    %v154 = vld [vmem:[%s2 + $0x214] sm:$0xff]
    %v155 = vld [vmem:[%s2 + $0x21c] sm:$0xff]
    %v156 = vld [vmem:[%s2 + $0x224] sm:$0xff]
    %v157 = vld [vmem:[%s2 + $0x22c] sm:$0xf]
    %v158 = vld [vmem:[%s2 + $0x230] sm:$0xff]
    %v159 = vld [vmem:[%s2 + $0x238] sm:$0xff]
    %v160 = vld [vmem:[%s2 + $0x240] sm:$0xff]
    %v161 = vld [vmem:[%s2 + $0x248] sm:$0xf]
    %v162 = vld [vmem:[%s2 + $0x24c] sm:$0xff]
    %v163 = vld [vmem:[%s2 + $0x254] sm:$0xff]
    %v164 = vld [vmem:[%s2 + $0x25c] sm:$0xff]
    %v165 = vld [vmem:[%s2 + $0x264] sm:$0xf]
    %v166 = vld [vmem:[%s2 + $0x268] sm:$0xff]
    %v167 = vld [vmem:[%s2 + $0x270] sm:$0xff]
    %v168 = vld [vmem:[%s2 + $0x278] sm:$0xff]
    %v169 = vld [vmem:[%s2 + $0x280] sm:$0xf]
    %v170 = vld [vmem:[%s2 + $0x284] sm:$0xff]
    %v171 = vld [vmem:[%s2 + $0x28c] sm:$0xff]
    %v172 = vld [vmem:[%s2 + $0x294] sm:$0xff]
    %v173 = vld [vmem:[%s2 + $0x29c] sm:$0xf]
    %v174 = vld [vmem:[%s2 + $0x2a0] sm:$0xff]
    %v175 = vld [vmem:[%s2 + $0x2a8] sm:$0xff]
    %v176 = vld [vmem:[%s2 + $0x2b0] sm:$0xff]
    %v177 = vld [vmem:[%s2 + $0x2b8] sm:$0xf]
    %v178 = vld [vmem:[%s2 + $0x2bc] sm:$0xff]
    %v179 = vld [vmem:[%s2 + $0x2c4] sm:$0xff]
    %v180 = vld [vmem:[%s2 + $0x2cc] sm:$0xff]
    %v181 = vld [vmem:[%s2 + $0x2d4] sm:$0xf]
    %v182 = vld [vmem:[%s2 + $0x2d8] sm:$0xff]
    %v183 = vld [vmem:[%s2 + $0x2e0] sm:$0xff]
    %v184 = vld [vmem:[%s2 + $0x2e8] sm:$0xff]
    %v185 = vld [vmem:[%s2 + $0x2f0] sm:$0xf]
    %v186 = vld [vmem:[%s2 + $0x2f4] sm:$0xff]
    %v187 = vld [vmem:[%s2 + $0x2fc] sm:$0xff]
    %v188 = vld [vmem:[%s2 + $0x304] sm:$0xff]
    %v189 = vld [vmem:[%s2 + $0x30c] sm:$0xf]
    %v190 = vld [vmem:[%s2 + $0x310] sm:$0xff]
    %v191 = vld [vmem:[%s2 + $0x318] sm:$0xff]
    %v192 = vld [vmem:[%s2 + $0x320] sm:$0xff]
    %v193 = vld [vmem:[%s2 + $0x328] sm:$0xf]
    %v194 = vld [vmem:[%s2 + $0x32c] sm:$0xff]
    %v195 = vld [vmem:[%s2 + $0x334] sm:$0xff]
    %v196 = vld [vmem:[%s2 + $0x33c] sm:$0xff]
    %v197 = vld [vmem:[%s2 + $0x344] sm:$0xf]
    %v198 = vld [vmem:[%s2 + $0x348] sm:$0xff]
    %v199 = vld [vmem:[%s2 + $0x350] sm:$0xff]
    %v200 = vld [vmem:[%s2 + $0x358] sm:$0xff]
    %v201 = vld [vmem:[%s2 + $0x360] sm:$0xf]
    %v202 = vld [vmem:[%s2 + $0x364] sm:$0xff]
    %v203 = vld [vmem:[%s2 + $0x36c] sm:$0xff]
    %v204 = vld [vmem:[%s2 + $0x374] sm:$0xff]
    %v205 = vld [vmem:[%s2 + $0x37c] sm:$0xf]
    %v206 = vld [vmem:[%s2 + $0x380] sm:$0xff]
    %v207 = vld [vmem:[%s2 + $0x388] sm:$0xff]
    %v208 = vld [vmem:[%s2 + $0x390] sm:$0xff]
    %v209 = vld [vmem:[%s2 + $0x398] sm:$0xf]
    %v210 = vld [vmem:[%s2 + $0x39c] sm:$0xff]
    %v211 = vld [vmem:[%s2 + $0x3a4] sm:$0xff]
    %v212 = vld [vmem:[%s2 + $0x3ac] sm:$0xff]
    %v213 = vld [vmem:[%s2 + $0x3b4] sm:$0xf]
    %v214 = vld [vmem:[%s2 + $0x3b8] sm:$0xff]
    %v215 = vld [vmem:[%s2 + $0x3c0] sm:$0xff]
    %v216 = vld [vmem:[%s2 + $0x3c8] sm:$0xff]
    %v217 = vld [vmem:[%s2 + $0x3d0] sm:$0xf]
    %v218 = vld [vmem:[%s2 + $0x3d4] sm:$0xff]
    %v219 = vld [vmem:[%s2 + $0x3dc] sm:$0xff]
    %v220 = vld [vmem:[%s2 + $0x3e4] sm:$0xff]
    %v221 = vld [vmem:[%s2 + $0x3ec] sm:$0xf]
    %v222 = vld [vmem:[%s2 + $0x3f0] sm:$0xff]
    %v223 = vld [vmem:[%s2 + $0x3f8] sm:$0xff]
    %v224 = vld [vmem:[%s2 + $0x400] sm:$0xff]
    %v225 = vld [vmem:[%s2 + $0x408] sm:$0xf]
    %v226 = vld [vmem:[%s2 + $0x40c] sm:$0xff]
    %v227 = vld [vmem:[%s2 + $0x414] sm:$0xff]
    %v228 = vld [vmem:[%s2 + $0x41c] sm:$0xff]
    %v229 = vld [vmem:[%s2 + $0x424] sm:$0xf]
    %v230 = vld [vmem:[%s2 + $0x428] sm:$0xff]
    %v231 = vld [vmem:[%s2 + $0x430] sm:$0xff]
    %v232 = vld [vmem:[%s2 + $0x438] sm:$0xff]
    %v233 = vld [vmem:[%s2 + $0x440] sm:$0xf]
    %v234 = vld [vmem:[%s2 + $0x444] sm:$0xff]
    %v235 = vld [vmem:[%s2 + $0x44c] sm:$0xff]
    %v236 = vld [vmem:[%s2 + $0x454] sm:$0xff]
    %v237 = vld [vmem:[%s2 + $0x45c] sm:$0xf]
    %v238 = vld [vmem:[%s2 + $0x460] sm:$0xff]
    %v239 = vld [vmem:[%s2 + $0x468] sm:$0xff]
    %v240 = vld [vmem:[%s2 + $0x470] sm:$0xff]
    %v241 = vld [vmem:[%s2 + $0x478] sm:$0xf]
    %v242 = vld [vmem:[%s2 + $0x47c] sm:$0xff]
    %v243 = vld [vmem:[%s2 + $0x484] sm:$0xff]
    %v244 = vld [vmem:[%s2 + $0x48c] sm:$0xff]
    %v245 = vld [vmem:[%s2 + $0x494] sm:$0xf]
    %v246 = vld [vmem:[%s2 + $0x498] sm:$0xff]
    %v247 = vld [vmem:[%s2 + $0x4a0] sm:$0xff]
    %v248 = vld [vmem:[%s2 + $0x4a8] sm:$0xff]
    %v249 = vld [vmem:[%s2 + $0x4b0] sm:$0xf]
    %v250 = vld [vmem:[%s2 + $0x4b4] sm:$0xff]
    %v251 = vld [vmem:[%s2 + $0x4bc] sm:$0xff]
    %v252 = vld [vmem:[%s2 + $0x4c4] sm:$0xff]
    %v253 = vld [vmem:[%s2 + $0x4cc] sm:$0xf]
    %v254 = vld [vmem:[%s2 + $0x4d0] sm:$0xff]
    %v255 = vld [vmem:[%s2 + $0x4d8] sm:$0xff]
    %v256 = vld [vmem:[%s2 + $0x4e0] sm:$0xff]
    %v257 = vld [vmem:[%s2 + $0x4e8] sm:$0xf]
    %v258 = vld [vmem:[%s2 + $0x4ec] sm:$0xff]
    %v259 = vld [vmem:[%s2 + $0x4f4] sm:$0xff]
    %v260 = vld [vmem:[%s2 + $0x4fc] sm:$0xff]
    %v261 = vld [vmem:[%s2 + $0x504] sm:$0xf]
    %v262 = vld [vmem:[%s2 + $0x508] sm:$0xff]
    %v263 = vld [vmem:[%s2 + $0x510] sm:$0xff]
    %v264 = vld [vmem:[%s2 + $0x518] sm:$0xff]
    %v265 = vld [vmem:[%s2 + $0x520] sm:$0xf]
    %v266 = vld [vmem:[%s2 + $0x524] sm:$0xff]
    %v267 = vld [vmem:[%s2 + $0x52c] sm:$0xff]
    %v268 = vld [vmem:[%s2 + $0x534] sm:$0xff]
    %v269 = vld [vmem:[%s2 + $0x53c] sm:$0xf]
    %v270 = vld [vmem:[%s2 + $0x540] sm:$0xff]
    %v271 = vld [vmem:[%s2 + $0x548] sm:$0xff]
    %v272 = vld [vmem:[%s2 + $0x550] sm:$0xff]
    %v273 = vld [vmem:[%s2 + $0x558] sm:$0xf]
    %v274 = vld [vmem:[%s2 + $0x55c] sm:$0xff]
    %v275 = vld [vmem:[%s2 + $0x564] sm:$0xff]
    %v276 = vld [vmem:[%s2 + $0x56c] sm:$0xff]
    %v277 = vld [vmem:[%s2 + $0x574] sm:$0xf]
    %v278 = vld [vmem:[%s2 + $0x578] sm:$0xff]
    %v279 = vld [vmem:[%s2 + $0x580] sm:$0xff]
    %v280 = vld [vmem:[%s2 + $0x588] sm:$0xff]
    %v281 = vld [vmem:[%s2 + $0x590] sm:$0xf]
    %v282 = vld [vmem:[%s2 + $0x594] sm:$0xff]
    %v283 = vld [vmem:[%s2 + $0x59c] sm:$0xff]
    %v284 = vld [vmem:[%s2 + $0x5a4] sm:$0xff]
    %v285 = vld [vmem:[%s2 + $0x5ac] sm:$0xf]
    %v286 = vld [vmem:[%s2 + $0x5b0] sm:$0xff]
    %v287 = vld [vmem:[%s2 + $0x5b8] sm:$0xff]
    %v288 = vld [vmem:[%s2 + $0x5c0] sm:$0xff]
    %v289 = vld [vmem:[%s2 + $0x5c8] sm:$0xf]
    %v290 = vld [vmem:[%s2 + $0x5cc] sm:$0xff]
    %v291 = vld [vmem:[%s2 + $0x5d4] sm:$0xff]
    %v292 = vld [vmem:[%s2 + $0x5dc] sm:$0xff]
    %v293 = vld [vmem:[%s2 + $0x5e4] sm:$0xf]
    %v294 = vld [vmem:[%s2 + $0x5e8] sm:$0xff]
    %v295 = vld [vmem:[%s2 + $0x5f0] sm:$0xff]
    %v296 = vld [vmem:[%s2 + $0x5f8] sm:$0xff]
    %v297 = vld [vmem:[%s2 + $0x600] sm:$0xf]
    %v298 = vld [vmem:[%s2 + $0x604] sm:$0xff]
    %v299 = vld [vmem:[%s2 + $0x60c] sm:$0xff]
    %v300 = vld [vmem:[%s2 + $0x614] sm:$0xff]
    %v301 = vld [vmem:[%s2 + $0x61c] sm:$0xf]
    %v302 = vld [vmem:[%s2 + $0x620] sm:$0xff]
    %v303 = vld [vmem:[%s2 + $0x628] sm:$0xff]
    %v304 = vld [vmem:[%s2 + $0x630] sm:$0xff]
    %v305 = vld [vmem:[%s2 + $0x638] sm:$0xf]
    %v306 = vld [vmem:[%s2 + $0x63c] sm:$0xff]
    %v307 = vld [vmem:[%s2 + $0x644] sm:$0xff]
    %v308 = vld [vmem:[%s2 + $0x64c] sm:$0xff]
    %v309 = vld [vmem:[%s2 + $0x654] sm:$0xf]
    %v310 = vld [vmem:[%s2 + $0x658] sm:$0xff]
    %v311 = vld [vmem:[%s2 + $0x660] sm:$0xff]
    %v312 = vld [vmem:[%s2 + $0x668] sm:$0xff]
    %v313 = vld [vmem:[%s2 + $0x670] sm:$0xf]
    %v314 = vld [vmem:[%s2 + $0x674] sm:$0xff]
    %v315 = vld [vmem:[%s2 + $0x67c] sm:$0xff]
    %v316 = vld [vmem:[%s2 + $0x684] sm:$0xff]
    %v317 = vld [vmem:[%s2 + $0x68c] sm:$0xf]
    %v318 = vld [vmem:[%s2 + $0x690] sm:$0xff]
    %v319 = vld [vmem:[%s2 + $0x698] sm:$0xff]
    %v320 = vld [vmem:[%s2 + $0x6a0] sm:$0xff]
    %v321 = vld [vmem:[%s2 + $0x6a8] sm:$0xf]
    %v322 = vld [vmem:[%s2 + $0x6ac] sm:$0xff]
    %v323 = vld [vmem:[%s2 + $0x6b4] sm:$0xff]
    %v324 = vld [vmem:[%s2 + $0x6bc] sm:$0xff]
    %v325 = vld [vmem:[%s2 + $0x6c4] sm:$0xf]
    %v326 = vld [vmem:[%s2 + $0x6c8] sm:$0xff]
    %v327 = vld [vmem:[%s2 + $0x6d0] sm:$0xff]
    %v328 = vld [vmem:[%s2 + $0x6d8] sm:$0xff]
    %v329 = vld [vmem:[%s2 + $0x6e0] sm:$0xf]
    %v330 = vld [vmem:[%s2 + $0x6e4] sm:$0xff]
    %v331 = vld [vmem:[%s2 + $0x6ec] sm:$0xff]
    %v332 = vld [vmem:[%s2 + $0x6f4] sm:$0xff]
    %v333 = vld [vmem:[%s2 + $0x6fc] sm:$0xf]
    %v334 = vld [vmem:[%s2 + $0x700] sm:$0xff]
    %v335 = vld [vmem:[%s2 + $0x708] sm:$0xff]
    %v336 = vld [vmem:[%s2 + $0x710] sm:$0xff]
    %v337 = vld [vmem:[%s2 + $0x718] sm:$0xf]
    %v338 = vld [vmem:[%s2 + $0x71c] sm:$0xff]
    %v339 = vld [vmem:[%s2 + $0x724] sm:$0xff]
    %v340 = vld [vmem:[%s2 + $0x72c] sm:$0xff]
    %v341 = vld [vmem:[%s2 + $0x734] sm:$0xf]
    %v342 = vld [vmem:[%s2 + $0x738] sm:$0xff]
    %v343 = vld [vmem:[%s2 + $0x740] sm:$0xff]
    %v344 = vld [vmem:[%s2 + $0x748] sm:$0xff]
    %v345 = vld [vmem:[%s2 + $0x750] sm:$0xf]
    %v346 = vld [vmem:[%s2 + $0x754] sm:$0xff]
    %v347 = vld [vmem:[%s2 + $0x75c] sm:$0xff]
    %v348 = vld [vmem:[%s2 + $0x764] sm:$0xff]
    %v349 = vld [vmem:[%s2 + $0x76c] sm:$0xf]
    %v350 = vld [vmem:[%s2 + $0x770] sm:$0xff]
    %v351 = vld [vmem:[%s2 + $0x778] sm:$0xff]
    %v352 = vld [vmem:[%s2 + $0x780] sm:$0xff]
    %v353 = vld [vmem:[%s2 + $0x788] sm:$0xf]
    %v354 = vld [vmem:[%s2 + $0x78c] sm:$0xff]
    %v355 = vld [vmem:[%s2 + $0x794] sm:$0xff]
    %v356 = vld [vmem:[%s2 + $0x79c] sm:$0xff]
    %v357 = vld [vmem:[%s2 + $0x7a4] sm:$0xf]
    %v358 = vld [vmem:[%s2 + $0x7a8] sm:$0xff]
    %v359 = vld [vmem:[%s2 + $0x7b0] sm:$0xff]
    %v360 = vld [vmem:[%s2 + $0x7b8] sm:$0xff]
    %v361 = vld [vmem:[%s2 + $0x7c0] sm:$0xf]
    %v362 = vld [vmem:[%s2 + $0x7c4] sm:$0xff]
    %v363 = vld [vmem:[%s2 + $0x7cc] sm:$0xff]
    %v364 = vld [vmem:[%s2 + $0x7d4] sm:$0xff]
    %v365 = vld [vmem:[%s2 + $0x7dc] sm:$0xf]
    %v366 = vld [vmem:[%s2 + $0x7e0] sm:$0xff]
    %v367 = vld [vmem:[%s2 + $0x7e8] sm:$0xff]
    %v368 = vld [vmem:[%s2 + $0x7f0] sm:$0xff]
    %v369 = vld [vmem:[%s2 + $0x7f8] sm:$0xf]
    %v370 = vld [vmem:[%s2 + $0x7fc] sm:$0xff]
    %v371 = vld [vmem:[%s2 + $0x804] sm:$0xff]
    %v372 = vld [vmem:[%s2 + $0x80c] sm:$0xff]
    %v373 = vld [vmem:[%s2 + $0x814] sm:$0xf]
    %v374 = vld [vmem:[%s2 + $0x818] sm:$0xff]
    %v375 = vld [vmem:[%s2 + $0x820] sm:$0xff]
    %v376 = vld [vmem:[%s2 + $0x828] sm:$0xff]
    %v377 = vld [vmem:[%s2 + $0x830] sm:$0xf]
    %v378 = vld [vmem:[%s2 + $0x834] sm:$0xff]
    %v379 = vld [vmem:[%s2 + $0x83c] sm:$0xff]
    %v380 = vld [vmem:[%s2 + $0x844] sm:$0xff]
    %v381 = vld [vmem:[%s2 + $0x84c] sm:$0xf]
    %v382 = vld [vmem:[%s2 + $0x850] sm:$0xff]
    %v383 = vld [vmem:[%s2 + $0x858] sm:$0xff]
    %v384 = vld [vmem:[%s2 + $0x860] sm:$0xff]
    %v385 = vld [vmem:[%s2 + $0x868] sm:$0xf]
    %v386 = vld [vmem:[%s2 + $0x86c] sm:$0xff]
    %v387 = vld [vmem:[%s2 + $0x874] sm:$0xff]
    %v388 = vld [vmem:[%s2 + $0x87c] sm:$0xff]
    %v389 = vld [vmem:[%s2 + $0x884] sm:$0xf]
    %v390 = vld [vmem:[%s2 + $0x888] sm:$0xff]
    %v391 = vld [vmem:[%s2 + $0x890] sm:$0xff]
    %v392 = vld [vmem:[%s2 + $0x898] sm:$0xff]
    %v393 = vld [vmem:[%s2 + $0x8a0] sm:$0xf]
    %v394 = vld [vmem:[%s2 + $0x8a4] sm:$0xff]
    %v395 = vld [vmem:[%s2 + $0x8ac] sm:$0xff]
    %v396 = vld [vmem:[%s2 + $0x8b4] sm:$0xff]
    %v397 = vld [vmem:[%s2 + $0x8bc] sm:$0xf]
    %v398 = vld [vmem:[%s2 + $0x8c0] sm:$0xff]
    %v399 = vld [vmem:[%s2 + $0x8c8] sm:$0xff]
    %v400 = vld [vmem:[%s2 + $0x8d0] sm:$0xff]
    %v401 = vld [vmem:[%s2 + $0x8d8] sm:$0xf]
    %v402 = vld [vmem:[%s2 + $0x8dc] sm:$0xff]
    %v403 = vld [vmem:[%s2 + $0x8e4] sm:$0xff]
    %v404 = vld [vmem:[%s2 + $0x8ec] sm:$0xff]
    %v405 = vld [vmem:[%s2 + $0x8f4] sm:$0xf]
    %v406 = vld [vmem:[%s2 + $0x8f8] sm:$0xff]
    %v407 = vld [vmem:[%s2 + $0x900] sm:$0xff]
    %v408 = vld [vmem:[%s2 + $0x908] sm:$0xff]
    %v409 = vld [vmem:[%s2 + $0x910] sm:$0xf]
    %v410 = vld [vmem:[%s2 + $0x914] sm:$0xff]
    %v411 = vld [vmem:[%s2 + $0x91c] sm:$0xff]
    %v412 = vld [vmem:[%s2 + $0x924] sm:$0xff]
    %v413 = vld [vmem:[%s2 + $0x92c] sm:$0xf]
    %v414 = vld [vmem:[%s2 + $0x930] sm:$0xff]
    %v415 = vld [vmem:[%s2 + $0x938] sm:$0xff]
    %v416 = vld [vmem:[%s2 + $0x940] sm:$0xff]
    %v417 = vld [vmem:[%s2 + $0x948] sm:$0xf]
    %v418 = vld [vmem:[%s2 + $0x94c] sm:$0xff]
    %v419 = vld [vmem:[%s2 + $0x954] sm:$0xff]
    %v420 = vld [vmem:[%s2 + $0x95c] sm:$0xff]
    %v421 = vld [vmem:[%s2 + $0x964] sm:$0xf]
    %v422 = vld [vmem:[%s2 + $0x968] sm:$0xff]
    %v423 = vld [vmem:[%s2 + $0x970] sm:$0xff]
    %v424 = vld [vmem:[%s2 + $0x978] sm:$0xff]
    %v425 = vld [vmem:[%s2 + $0x980] sm:$0xf]
    %v426 = vld [vmem:[%s2 + $0x984] sm:$0xff]
    %v427 = vld [vmem:[%s2 + $0x98c] sm:$0xff]
    %v428 = vld [vmem:[%s2 + $0x994] sm:$0xff]
    %v429 = vld [vmem:[%s2 + $0x99c] sm:$0xf]
    %v430 = vld [vmem:[%s2 + $0x9a0] sm:$0xff]
    %v431 = vld [vmem:[%s2 + $0x9a8] sm:$0xff]
    %v432 = vld [vmem:[%s2 + $0x9b0] sm:$0xff]
    %v433 = vld [vmem:[%s2 + $0x9b8] sm:$0xf]
    %v434 = vld [vmem:[%s2 + $0x9bc] sm:$0xff]
    %v435 = vld [vmem:[%s2 + $0x9c4] sm:$0xff]
    %v436 = vld [vmem:[%s2 + $0x9cc] sm:$0xff]
    %v437 = vld [vmem:[%s2 + $0x9d4] sm:$0xf]
    %v438 = vld [vmem:[%s2 + $0x9d8] sm:$0xff]
    %v439 = vld [vmem:[%s2 + $0x9e0] sm:$0xff]
    %v440 = vld [vmem:[%s2 + $0x9e8] sm:$0xff]
    %v441 = vld [vmem:[%s2 + $0x9f0] sm:$0xf]
    %v442 = vld [vmem:[%s2 + $0x9f4] sm:$0xff]
    %v443 = vld [vmem:[%s2 + $0x9fc] sm:$0xff]
    %v444 = vld [vmem:[%s2 + $0xa04] sm:$0xff]
    %v445 = vld [vmem:[%s2 + $0xa0c] sm:$0xf]
    %v446 = vld [vmem:[%s2 + $0xa10] sm:$0xff]
    %v447 = vld [vmem:[%s2 + $0xa18] sm:$0xff]
    %v448 = vld [vmem:[%s2 + $0xa20] sm:$0xff]
    %v449 = vld [vmem:[%s2 + $0xa28] sm:$0xf]
    %v450 = vld [vmem:[%s2 + $0xa2c] sm:$0xff]
    %v451 = vld [vmem:[%s2 + $0xa34] sm:$0xff]
    %v452 = vld [vmem:[%s2 + $0xa3c] sm:$0xff]
    %v453 = vld [vmem:[%s2 + $0xa44] sm:$0xf]
    %v454 = vld [vmem:[%s2 + $0xa48] sm:$0xff]
    %v455 = vld [vmem:[%s2 + $0xa50] sm:$0xff]
    %v456 = vld [vmem:[%s2 + $0xa58] sm:$0xff]
    %v457 = vld [vmem:[%s2 + $0xa60] sm:$0xf]
    %v458 = vld [vmem:[%s2 + $0xa64] sm:$0xff]
    %v459 = vld [vmem:[%s2 + $0xa6c] sm:$0xff]
    %v460 = vld [vmem:[%s2 + $0xa74] sm:$0xff]
    %v461 = vld [vmem:[%s2 + $0xa7c] sm:$0xf]
    %v462 = vld [vmem:[%s3] sm:$0x7f]
    %v464 = vlaneseq
    %v465 = vshrl.u32 %v464, 7
    %v466 = vsub.s32 0, %v465
    %v467 = vrot.slane %v462, %v466
    %v468 = vlaneseq
    %v469 = vshrl.u32 %v468, 7
    %v470 = vsub.s32 1, %v469
    %v471 = vrot.slane %v462, %v470
    %v472 = vlaneseq
    %v473 = vshrl.u32 %v472, 7
    %v474 = vsub.s32 2, %v473
    %v475 = vrot.slane %v462, %v474
    %v476 = vlaneseq
    %v477 = vshrl.u32 %v476, 7
    %v478 = vsub.s32 3, %v477
    %v479 = vrot.slane %v462, %v478
    %v480 = vlaneseq
    %v481 = vshrl.u32 %v480, 7
    %v482 = vsub.s32 4, %v481
    %v483 = vrot.slane %v462, %v482
    %v484 = vlaneseq
    %v485 = vshrl.u32 %v484, 7
    %v486 = vsub.s32 5, %v485
    %v487 = vrot.slane %v462, %v486
    %v488 = vlaneseq
    %v489 = vshrl.u32 %v488, 7
    %v490 = vsub.s32 6, %v489
    %v491 = vrot.slane %v462, %v490
    %v883 = vunpack.c.l.b16 %v78
    %v884 = vunpack.c.h.b16 %v78
    %v885 = vunpack.c.l.b16 %v79
    %v886 = vunpack.c.h.b16 %v79
    %v887 = vunpack.c.l.b16 %v80
    %v888 = vunpack.c.h.b16 %v80
    %v889 = vunpack.c.l.b16 %v81
    %v890 = vunpack.c.l.b16 %v82
    %v891 = vunpack.c.h.b16 %v82
    %v892 = vunpack.c.l.b16 %v83
    %v893 = vunpack.c.h.b16 %v83
    %v894 = vunpack.c.l.b16 %v84
    %v895 = vunpack.c.h.b16 %v84
    %v896 = vunpack.c.l.b16 %v85
    %v897 = vunpack.c.l.b16 %v86
    %v898 = vunpack.c.h.b16 %v86
    %v899 = vunpack.c.l.b16 %v87
    %v900 = vunpack.c.h.b16 %v87
    %v901 = vunpack.c.l.b16 %v88
    %v902 = vunpack.c.h.b16 %v88
    %v903 = vunpack.c.l.b16 %v89
    %v904 = vunpack.c.l.b16 %v90
    %v905 = vunpack.c.h.b16 %v90
    %v906 = vunpack.c.l.b16 %v91
    %v907 = vunpack.c.h.b16 %v91
    %v908 = vunpack.c.l.b16 %v92
    %v909 = vunpack.c.h.b16 %v92
    %v910 = vunpack.c.l.b16 %v93
    %v911 = vunpack.c.l.b16 %v94
    %v912 = vunpack.c.h.b16 %v94
    %v913 = vunpack.c.l.b16 %v95
    %v914 = vunpack.c.h.b16 %v95
    %v915 = vunpack.c.l.b16 %v96
    %v916 = vunpack.c.h.b16 %v96
    %v917 = vunpack.c.l.b16 %v97
    %v918 = vunpack.c.l.b16 %v98
    %v919 = vunpack.c.h.b16 %v98
    %v920 = vunpack.c.l.b16 %v99
    %v921 = vunpack.c.h.b16 %v99
    %v922 = vunpack.c.l.b16 %v100
    %v923 = vunpack.c.h.b16 %v100
    %v924 = vunpack.c.l.b16 %v101
    %v925 = vunpack.c.l.b16 %v102
    %v926 = vunpack.c.h.b16 %v102
    %v927 = vunpack.c.l.b16 %v103
    %v928 = vunpack.c.h.b16 %v103
    %v929 = vunpack.c.l.b16 %v104
    %v930 = vunpack.c.h.b16 %v104
    %v931 = vunpack.c.l.b16 %v105
    %v932 = vunpack.c.l.b16 %v106
    %v933 = vunpack.c.h.b16 %v106
    %v934 = vunpack.c.l.b16 %v107
    %v935 = vunpack.c.h.b16 %v107
    %v936 = vunpack.c.l.b16 %v108
    %v937 = vunpack.c.h.b16 %v108
    %v938 = vunpack.c.l.b16 %v109
    %v939 = vunpack.c.l.b16 %v110
    %v940 = vunpack.c.h.b16 %v110
    %v941 = vunpack.c.l.b16 %v111
    %v942 = vunpack.c.h.b16 %v111
    %v943 = vunpack.c.l.b16 %v112
    %v944 = vunpack.c.h.b16 %v112
    %v945 = vunpack.c.l.b16 %v113
    %v946 = vunpack.c.l.b16 %v114
    %v947 = vunpack.c.h.b16 %v114
    %v948 = vunpack.c.l.b16 %v115
    %v949 = vunpack.c.h.b16 %v115
    %v950 = vunpack.c.l.b16 %v116
    %v951 = vunpack.c.h.b16 %v116
    %v952 = vunpack.c.l.b16 %v117
    %v953 = vunpack.c.l.b16 %v118
    %v954 = vunpack.c.h.b16 %v118
    %v955 = vunpack.c.l.b16 %v119
    %v956 = vunpack.c.h.b16 %v119
    %v957 = vunpack.c.l.b16 %v120
    %v958 = vunpack.c.h.b16 %v120
    %v959 = vunpack.c.l.b16 %v121
    %v960 = vunpack.c.l.b16 %v122
    %v961 = vunpack.c.h.b16 %v122
    %v962 = vunpack.c.l.b16 %v123
    %v963 = vunpack.c.h.b16 %v123
    %v964 = vunpack.c.l.b16 %v124
    %v965 = vunpack.c.h.b16 %v124
    %v966 = vunpack.c.l.b16 %v125
    %v967 = vunpack.c.l.b16 %v126
    %v968 = vunpack.c.h.b16 %v126
    %v969 = vunpack.c.l.b16 %v127
    %v970 = vunpack.c.h.b16 %v127
    %v971 = vunpack.c.l.b16 %v128
    %v972 = vunpack.c.h.b16 %v128
    %v973 = vunpack.c.l.b16 %v129
    %v974 = vunpack.c.l.b16 %v130
    %v975 = vunpack.c.h.b16 %v130
    %v976 = vunpack.c.l.b16 %v131
    %v977 = vunpack.c.h.b16 %v131
    %v978 = vunpack.c.l.b16 %v132
    %v979 = vunpack.c.h.b16 %v132
    %v980 = vunpack.c.l.b16 %v133
    %v981 = vunpack.c.l.b16 %v134
    %v982 = vunpack.c.h.b16 %v134
    %v983 = vunpack.c.l.b16 %v135
    %v984 = vunpack.c.h.b16 %v135
    %v985 = vunpack.c.l.b16 %v136
    %v986 = vunpack.c.h.b16 %v136
    %v987 = vunpack.c.l.b16 %v137
    %v988 = vunpack.c.l.b16 %v138
    %v989 = vunpack.c.h.b16 %v138
    %v990 = vunpack.c.l.b16 %v139
    %v991 = vunpack.c.h.b16 %v139
    %v992 = vunpack.c.l.b16 %v140
    %v993 = vunpack.c.h.b16 %v140
    %v994 = vunpack.c.l.b16 %v141
    %v995 = vunpack.c.l.b16 %v142
    %v996 = vunpack.c.h.b16 %v142
    %v997 = vunpack.c.l.b16 %v143
    %v998 = vunpack.c.h.b16 %v143
    %v999 = vunpack.c.l.b16 %v144
    %v1000 = vunpack.c.h.b16 %v144
    %v1001 = vunpack.c.l.b16 %v145
    %v1002 = vunpack.c.l.b16 %v146
    %v1003 = vunpack.c.h.b16 %v146
    %v1004 = vunpack.c.l.b16 %v147
    %v1005 = vunpack.c.h.b16 %v147
    %v1006 = vunpack.c.l.b16 %v148
    %v1007 = vunpack.c.h.b16 %v148
    %v1008 = vunpack.c.l.b16 %v149
    %v1009 = vunpack.c.l.b16 %v150
    %v1010 = vunpack.c.h.b16 %v150
    %v1011 = vunpack.c.l.b16 %v151
    %v1012 = vunpack.c.h.b16 %v151
    %v1013 = vunpack.c.l.b16 %v152
    %v1014 = vunpack.c.h.b16 %v152
    %v1015 = vunpack.c.l.b16 %v153
    %v1016 = vunpack.c.l.b16 %v154
    %v1017 = vunpack.c.h.b16 %v154
    %v1018 = vunpack.c.l.b16 %v155
    %v1019 = vunpack.c.h.b16 %v155
    %v1020 = vunpack.c.l.b16 %v156
    %v1021 = vunpack.c.h.b16 %v156
    %v1022 = vunpack.c.l.b16 %v157
    %v1023 = vunpack.c.l.b16 %v158
    %v1024 = vunpack.c.h.b16 %v158
    %v1025 = vunpack.c.l.b16 %v159
    %v1026 = vunpack.c.h.b16 %v159
    %v1027 = vunpack.c.l.b16 %v160
    %v1028 = vunpack.c.h.b16 %v160
    %v1029 = vunpack.c.l.b16 %v161
    %v1030 = vunpack.c.l.b16 %v162
    %v1031 = vunpack.c.h.b16 %v162
    %v1032 = vunpack.c.l.b16 %v163
    %v1033 = vunpack.c.h.b16 %v163
    %v1034 = vunpack.c.l.b16 %v164
    %v1035 = vunpack.c.h.b16 %v164
    %v1036 = vunpack.c.l.b16 %v165
    %v1037 = vunpack.c.l.b16 %v166
    %v1038 = vunpack.c.h.b16 %v166
    %v1039 = vunpack.c.l.b16 %v167
    %v1040 = vunpack.c.h.b16 %v167
    %v1041 = vunpack.c.l.b16 %v168
    %v1042 = vunpack.c.h.b16 %v168
    %v1043 = vunpack.c.l.b16 %v169
    %v1044 = vunpack.c.l.b16 %v170
    %v1045 = vunpack.c.h.b16 %v170
    %v1046 = vunpack.c.l.b16 %v171
    %v1047 = vunpack.c.h.b16 %v171
    %v1048 = vunpack.c.l.b16 %v172
    %v1049 = vunpack.c.h.b16 %v172
    %v1050 = vunpack.c.l.b16 %v173
    %v1051 = vunpack.c.l.b16 %v174
    %v1052 = vunpack.c.h.b16 %v174
    %v1053 = vunpack.c.l.b16 %v175
    %v1054 = vunpack.c.h.b16 %v175
    %v1055 = vunpack.c.l.b16 %v176
    %v1056 = vunpack.c.h.b16 %v176
    %v1057 = vunpack.c.l.b16 %v177
    %v1058 = vunpack.c.l.b16 %v178
    %v1059 = vunpack.c.h.b16 %v178
    %v1060 = vunpack.c.l.b16 %v179
    %v1061 = vunpack.c.h.b16 %v179
    %v1062 = vunpack.c.l.b16 %v180
    %v1063 = vunpack.c.h.b16 %v180
    %v1064 = vunpack.c.l.b16 %v181
    %v1065 = vunpack.c.l.b16 %v182
    %v1066 = vunpack.c.h.b16 %v182
    %v1067 = vunpack.c.l.b16 %v183
    %v1068 = vunpack.c.h.b16 %v183
    %v1069 = vunpack.c.l.b16 %v184
    %v1070 = vunpack.c.h.b16 %v184
    %v1071 = vunpack.c.l.b16 %v185
    %v1072 = vunpack.c.l.b16 %v186
    %v1073 = vunpack.c.h.b16 %v186
    %v1074 = vunpack.c.l.b16 %v187
    %v1075 = vunpack.c.h.b16 %v187
    %v1076 = vunpack.c.l.b16 %v188
    %v1077 = vunpack.c.h.b16 %v188
    %v1078 = vunpack.c.l.b16 %v189
    %v1079 = vunpack.c.l.b16 %v190
    %v1080 = vunpack.c.h.b16 %v190
    %v1081 = vunpack.c.l.b16 %v191
    %v1082 = vunpack.c.h.b16 %v191
    %v1083 = vunpack.c.l.b16 %v192
    %v1084 = vunpack.c.h.b16 %v192
    %v1085 = vunpack.c.l.b16 %v193
    %v1086 = vunpack.c.l.b16 %v194
    %v1087 = vunpack.c.h.b16 %v194
    %v1088 = vunpack.c.l.b16 %v195
    %v1089 = vunpack.c.h.b16 %v195
    %v1090 = vunpack.c.l.b16 %v196
    %v1091 = vunpack.c.h.b16 %v196
    %v1092 = vunpack.c.l.b16 %v197
    %v1093 = vunpack.c.l.b16 %v198
    %v1094 = vunpack.c.h.b16 %v198
    %v1095 = vunpack.c.l.b16 %v199
    %v1096 = vunpack.c.h.b16 %v199
    %v1097 = vunpack.c.l.b16 %v200
    %v1098 = vunpack.c.h.b16 %v200
    %v1099 = vunpack.c.l.b16 %v201
    %v1100 = vunpack.c.l.b16 %v202
    %v1101 = vunpack.c.h.b16 %v202
    %v1102 = vunpack.c.l.b16 %v203
    %v1103 = vunpack.c.h.b16 %v203
    %v1104 = vunpack.c.l.b16 %v204
    %v1105 = vunpack.c.h.b16 %v204
    %v1106 = vunpack.c.l.b16 %v205
    %v1107 = vunpack.c.l.b16 %v206
    %v1108 = vunpack.c.h.b16 %v206
    %v1109 = vunpack.c.l.b16 %v207
    %v1110 = vunpack.c.h.b16 %v207
    %v1111 = vunpack.c.l.b16 %v208
    %v1112 = vunpack.c.h.b16 %v208
    %v1113 = vunpack.c.l.b16 %v209
    %v1114 = vunpack.c.l.b16 %v210
    %v1115 = vunpack.c.h.b16 %v210
    %v1116 = vunpack.c.l.b16 %v211
    %v1117 = vunpack.c.h.b16 %v211
    %v1118 = vunpack.c.l.b16 %v212
    %v1119 = vunpack.c.h.b16 %v212
    %v1120 = vunpack.c.l.b16 %v213
    %v1121 = vunpack.c.l.b16 %v214
    %v1122 = vunpack.c.h.b16 %v214
    %v1123 = vunpack.c.l.b16 %v215
    %v1124 = vunpack.c.h.b16 %v215
    %v1125 = vunpack.c.l.b16 %v216
    %v1126 = vunpack.c.h.b16 %v216
    %v1127 = vunpack.c.l.b16 %v217
    %v1128 = vunpack.c.l.b16 %v218
    %v1129 = vunpack.c.h.b16 %v218
    %v1130 = vunpack.c.l.b16 %v219
    %v1131 = vunpack.c.h.b16 %v219
    %v1132 = vunpack.c.l.b16 %v220
    %v1133 = vunpack.c.h.b16 %v220
    %v1134 = vunpack.c.l.b16 %v221
    %v1135 = vunpack.c.l.b16 %v222
    %v1136 = vunpack.c.h.b16 %v222
    %v1137 = vunpack.c.l.b16 %v223
    %v1138 = vunpack.c.h.b16 %v223
    %v1139 = vunpack.c.l.b16 %v224
    %v1140 = vunpack.c.h.b16 %v224
    %v1141 = vunpack.c.l.b16 %v225
    %v1142 = vunpack.c.l.b16 %v226
    %v1143 = vunpack.c.h.b16 %v226
    %v1144 = vunpack.c.l.b16 %v227
    %v1145 = vunpack.c.h.b16 %v227
    %v1146 = vunpack.c.l.b16 %v228
    %v1147 = vunpack.c.h.b16 %v228
    %v1148 = vunpack.c.l.b16 %v229
    %v1149 = vunpack.c.l.b16 %v230
    %v1150 = vunpack.c.h.b16 %v230
    %v1151 = vunpack.c.l.b16 %v231
    %v1152 = vunpack.c.h.b16 %v231
    %v1153 = vunpack.c.l.b16 %v232
    %v1154 = vunpack.c.h.b16 %v232
    %v1155 = vunpack.c.l.b16 %v233
    %v1156 = vunpack.c.l.b16 %v234
    %v1157 = vunpack.c.h.b16 %v234
    %v1158 = vunpack.c.l.b16 %v235
    %v1159 = vunpack.c.h.b16 %v235
    %v1160 = vunpack.c.l.b16 %v236
    %v1161 = vunpack.c.h.b16 %v236
    %v1162 = vunpack.c.l.b16 %v237
    %v1163 = vunpack.c.l.b16 %v238
    %v1164 = vunpack.c.h.b16 %v238
    %v1165 = vunpack.c.l.b16 %v239
    %v1166 = vunpack.c.h.b16 %v239
    %v1167 = vunpack.c.l.b16 %v240
    %v1168 = vunpack.c.h.b16 %v240
    %v1169 = vunpack.c.l.b16 %v241
    %v1170 = vunpack.c.l.b16 %v242
    %v1171 = vunpack.c.h.b16 %v242
    %v1172 = vunpack.c.l.b16 %v243
    %v1173 = vunpack.c.h.b16 %v243
    %v1174 = vunpack.c.l.b16 %v244
    %v1175 = vunpack.c.h.b16 %v244
    %v1176 = vunpack.c.l.b16 %v245
    %v1177 = vunpack.c.l.b16 %v246
    %v1178 = vunpack.c.h.b16 %v246
    %v1179 = vunpack.c.l.b16 %v247
    %v1180 = vunpack.c.h.b16 %v247
    %v1181 = vunpack.c.l.b16 %v248
    %v1182 = vunpack.c.h.b16 %v248
    %v1183 = vunpack.c.l.b16 %v249
    %v1184 = vunpack.c.l.b16 %v250
    %v1185 = vunpack.c.h.b16 %v250
    %v1186 = vunpack.c.l.b16 %v251
    %v1187 = vunpack.c.h.b16 %v251
    %v1188 = vunpack.c.l.b16 %v252
    %v1189 = vunpack.c.h.b16 %v252
    %v1190 = vunpack.c.l.b16 %v253
    %v1191 = vunpack.c.l.b16 %v254
    %v1192 = vunpack.c.h.b16 %v254
    %v1193 = vunpack.c.l.b16 %v255
    %v1194 = vunpack.c.h.b16 %v255
    %v1195 = vunpack.c.l.b16 %v256
    %v1196 = vunpack.c.h.b16 %v256
    %v1197 = vunpack.c.l.b16 %v257
    %v1198 = vunpack.c.l.b16 %v258
    %v1199 = vunpack.c.h.b16 %v258
    %v1200 = vunpack.c.l.b16 %v259
    %v1201 = vunpack.c.h.b16 %v259
    %v1202 = vunpack.c.l.b16 %v260
    %v1203 = vunpack.c.h.b16 %v260
    %v1204 = vunpack.c.l.b16 %v261
    %v1205 = vunpack.c.l.b16 %v262
    %v1206 = vunpack.c.h.b16 %v262
    %v1207 = vunpack.c.l.b16 %v263
    %v1208 = vunpack.c.h.b16 %v263
    %v1209 = vunpack.c.l.b16 %v264
    %v1210 = vunpack.c.h.b16 %v264
    %v1211 = vunpack.c.l.b16 %v265
    %v1212 = vunpack.c.l.b16 %v266
    %v1213 = vunpack.c.h.b16 %v266
    %v1214 = vunpack.c.l.b16 %v267
    %v1215 = vunpack.c.h.b16 %v267
    %v1216 = vunpack.c.l.b16 %v268
    %v1217 = vunpack.c.h.b16 %v268
    %v1218 = vunpack.c.l.b16 %v269
    %v1219 = vunpack.c.l.b16 %v270
    %v1220 = vunpack.c.h.b16 %v270
    %v1221 = vunpack.c.l.b16 %v271
    %v1222 = vunpack.c.h.b16 %v271
    %v1223 = vunpack.c.l.b16 %v272
    %v1224 = vunpack.c.h.b16 %v272
    %v1225 = vunpack.c.l.b16 %v273
    %v1226 = vunpack.c.l.b16 %v274
    %v1227 = vunpack.c.h.b16 %v274
    %v1228 = vunpack.c.l.b16 %v275
    %v1229 = vunpack.c.h.b16 %v275
    %v1230 = vunpack.c.l.b16 %v276
    %v1231 = vunpack.c.h.b16 %v276
    %v1232 = vunpack.c.l.b16 %v277
    %v1233 = vunpack.c.l.b16 %v278
    %v1234 = vunpack.c.h.b16 %v278
    %v1235 = vunpack.c.l.b16 %v279
    %v1236 = vunpack.c.h.b16 %v279
    %v1237 = vunpack.c.l.b16 %v280
    %v1238 = vunpack.c.h.b16 %v280
    %v1239 = vunpack.c.l.b16 %v281
    %v1240 = vunpack.c.l.b16 %v282
    %v1241 = vunpack.c.h.b16 %v282
    %v1242 = vunpack.c.l.b16 %v283
    %v1243 = vunpack.c.h.b16 %v283
    %v1244 = vunpack.c.l.b16 %v284
    %v1245 = vunpack.c.h.b16 %v284
    %v1246 = vunpack.c.l.b16 %v285
    %v1247 = vunpack.c.l.b16 %v286
    %v1248 = vunpack.c.h.b16 %v286
    %v1249 = vunpack.c.l.b16 %v287
    %v1250 = vunpack.c.h.b16 %v287
    %v1251 = vunpack.c.l.b16 %v288
    %v1252 = vunpack.c.h.b16 %v288
    %v1253 = vunpack.c.l.b16 %v289
    %v1254 = vunpack.c.l.b16 %v290
    %v1255 = vunpack.c.h.b16 %v290
    %v1256 = vunpack.c.l.b16 %v291
    %v1257 = vunpack.c.h.b16 %v291
    %v1258 = vunpack.c.l.b16 %v292
    %v1259 = vunpack.c.h.b16 %v292
    %v1260 = vunpack.c.l.b16 %v293
    %v1261 = vunpack.c.l.b16 %v294
    %v1262 = vunpack.c.h.b16 %v294
    %v1263 = vunpack.c.l.b16 %v295
    %v1264 = vunpack.c.h.b16 %v295
    %v1265 = vunpack.c.l.b16 %v296
    %v1266 = vunpack.c.h.b16 %v296
    %v1267 = vunpack.c.l.b16 %v297
    %v1268 = vunpack.c.l.b16 %v298
    %v1269 = vunpack.c.h.b16 %v298
    %v1270 = vunpack.c.l.b16 %v299
    %v1271 = vunpack.c.h.b16 %v299
    %v1272 = vunpack.c.l.b16 %v300
    %v1273 = vunpack.c.h.b16 %v300
    %v1274 = vunpack.c.l.b16 %v301
    %v1275 = vunpack.c.l.b16 %v302
    %v1276 = vunpack.c.h.b16 %v302
    %v1277 = vunpack.c.l.b16 %v303
    %v1278 = vunpack.c.h.b16 %v303
    %v1279 = vunpack.c.l.b16 %v304
    %v1280 = vunpack.c.h.b16 %v304
    %v1281 = vunpack.c.l.b16 %v305
    %v1282 = vunpack.c.l.b16 %v306
    %v1283 = vunpack.c.h.b16 %v306
    %v1284 = vunpack.c.l.b16 %v307
    %v1285 = vunpack.c.h.b16 %v307
    %v1286 = vunpack.c.l.b16 %v308
    %v1287 = vunpack.c.h.b16 %v308
    %v1288 = vunpack.c.l.b16 %v309
    %v1289 = vunpack.c.l.b16 %v310
    %v1290 = vunpack.c.h.b16 %v310
    %v1291 = vunpack.c.l.b16 %v311
    %v1292 = vunpack.c.h.b16 %v311
    %v1293 = vunpack.c.l.b16 %v312
    %v1294 = vunpack.c.h.b16 %v312
    %v1295 = vunpack.c.l.b16 %v313
    %v1296 = vunpack.c.l.b16 %v314
    %v1297 = vunpack.c.h.b16 %v314
    %v1298 = vunpack.c.l.b16 %v315
    %v1299 = vunpack.c.h.b16 %v315
    %v1300 = vunpack.c.l.b16 %v316
    %v1301 = vunpack.c.h.b16 %v316
    %v1302 = vunpack.c.l.b16 %v317
    %v1303 = vunpack.c.l.b16 %v318
    %v1304 = vunpack.c.h.b16 %v318
    %v1305 = vunpack.c.l.b16 %v319
    %v1306 = vunpack.c.h.b16 %v319
    %v1307 = vunpack.c.l.b16 %v320
    %v1308 = vunpack.c.h.b16 %v320
    %v1309 = vunpack.c.l.b16 %v321
    %v1310 = vunpack.c.l.b16 %v322
    %v1311 = vunpack.c.h.b16 %v322
    %v1312 = vunpack.c.l.b16 %v323
    %v1313 = vunpack.c.h.b16 %v323
    %v1314 = vunpack.c.l.b16 %v324
    %v1315 = vunpack.c.h.b16 %v324
    %v1316 = vunpack.c.l.b16 %v325
    %v1317 = vunpack.c.l.b16 %v326
    %v1318 = vunpack.c.h.b16 %v326
    %v1319 = vunpack.c.l.b16 %v327
    %v1320 = vunpack.c.h.b16 %v327
    %v1321 = vunpack.c.l.b16 %v328
    %v1322 = vunpack.c.h.b16 %v328
    %v1323 = vunpack.c.l.b16 %v329
    %v1324 = vunpack.c.l.b16 %v330
    %v1325 = vunpack.c.h.b16 %v330
    %v1326 = vunpack.c.l.b16 %v331
    %v1327 = vunpack.c.h.b16 %v331
    %v1328 = vunpack.c.l.b16 %v332
    %v1329 = vunpack.c.h.b16 %v332
    %v1330 = vunpack.c.l.b16 %v333
    %v1331 = vunpack.c.l.b16 %v334
    %v1332 = vunpack.c.h.b16 %v334
    %v1333 = vunpack.c.l.b16 %v335
    %v1334 = vunpack.c.h.b16 %v335
    %v1335 = vunpack.c.l.b16 %v336
    %v1336 = vunpack.c.h.b16 %v336
    %v1337 = vunpack.c.l.b16 %v337
    %v1338 = vunpack.c.l.b16 %v338
    %v1339 = vunpack.c.h.b16 %v338
    %v1340 = vunpack.c.l.b16 %v339
    %v1341 = vunpack.c.h.b16 %v339
    %v1342 = vunpack.c.l.b16 %v340
    %v1343 = vunpack.c.h.b16 %v340
    %v1344 = vunpack.c.l.b16 %v341
    %v1345 = vunpack.c.l.b16 %v342
    %v1346 = vunpack.c.h.b16 %v342
    %v1347 = vunpack.c.l.b16 %v343
    %v1348 = vunpack.c.h.b16 %v343
    %v1349 = vunpack.c.l.b16 %v344
    %v1350 = vunpack.c.h.b16 %v344
    %v1351 = vunpack.c.l.b16 %v345
    %v1352 = vunpack.c.l.b16 %v346
    %v1353 = vunpack.c.h.b16 %v346
    %v1354 = vunpack.c.l.b16 %v347
    %v1355 = vunpack.c.h.b16 %v347
    %v1356 = vunpack.c.l.b16 %v348
    %v1357 = vunpack.c.h.b16 %v348
    %v1358 = vunpack.c.l.b16 %v349
    %v1359 = vunpack.c.l.b16 %v350
    %v1360 = vunpack.c.h.b16 %v350
    %v1361 = vunpack.c.l.b16 %v351
    %v1362 = vunpack.c.h.b16 %v351
    %v1363 = vunpack.c.l.b16 %v352
    %v1364 = vunpack.c.h.b16 %v352
    %v1365 = vunpack.c.l.b16 %v353
    %v1366 = vunpack.c.l.b16 %v354
    %v1367 = vunpack.c.h.b16 %v354
    %v1368 = vunpack.c.l.b16 %v355
    %v1369 = vunpack.c.h.b16 %v355
    %v1370 = vunpack.c.l.b16 %v356
    %v1371 = vunpack.c.h.b16 %v356
    %v1372 = vunpack.c.l.b16 %v357
    %v1373 = vunpack.c.l.b16 %v358
    %v1374 = vunpack.c.h.b16 %v358
    %v1375 = vunpack.c.l.b16 %v359
    %v1376 = vunpack.c.h.b16 %v359
    %v1377 = vunpack.c.l.b16 %v360
    %v1378 = vunpack.c.h.b16 %v360
    %v1379 = vunpack.c.l.b16 %v361
    %v1380 = vunpack.c.l.b16 %v362
    %v1381 = vunpack.c.h.b16 %v362
    %v1382 = vunpack.c.l.b16 %v363
    %v1383 = vunpack.c.h.b16 %v363
    %v1384 = vunpack.c.l.b16 %v364
    %v1385 = vunpack.c.h.b16 %v364
    %v1386 = vunpack.c.l.b16 %v365
    %v1387 = vunpack.c.l.b16 %v366
    %v1388 = vunpack.c.h.b16 %v366
    %v1389 = vunpack.c.l.b16 %v367
    %v1390 = vunpack.c.h.b16 %v367
    %v1391 = vunpack.c.l.b16 %v368
    %v1392 = vunpack.c.h.b16 %v368
    %v1393 = vunpack.c.l.b16 %v369
    %v1394 = vunpack.c.l.b16 %v370
    %v1395 = vunpack.c.h.b16 %v370
    %v1396 = vunpack.c.l.b16 %v371
    %v1397 = vunpack.c.h.b16 %v371
    %v1398 = vunpack.c.l.b16 %v372
    %v1399 = vunpack.c.h.b16 %v372
    %v1400 = vunpack.c.l.b16 %v373
    %v1401 = vunpack.c.l.b16 %v374
    %v1402 = vunpack.c.h.b16 %v374
    %v1403 = vunpack.c.l.b16 %v375
    %v1404 = vunpack.c.h.b16 %v375
    %v1405 = vunpack.c.l.b16 %v376
    %v1406 = vunpack.c.h.b16 %v376
    %v1407 = vunpack.c.l.b16 %v377
    %v1408 = vunpack.c.l.b16 %v378
    %v1409 = vunpack.c.h.b16 %v378
    %v1410 = vunpack.c.l.b16 %v379
    %v1411 = vunpack.c.h.b16 %v379
    %v1412 = vunpack.c.l.b16 %v380
    %v1413 = vunpack.c.h.b16 %v380
    %v1414 = vunpack.c.l.b16 %v381
    %v1415 = vunpack.c.l.b16 %v382
    %v1416 = vunpack.c.h.b16 %v382
    %v1417 = vunpack.c.l.b16 %v383
    %v1418 = vunpack.c.h.b16 %v383
    %v1419 = vunpack.c.l.b16 %v384
    %v1420 = vunpack.c.h.b16 %v384
    %v1421 = vunpack.c.l.b16 %v385
    %v1422 = vunpack.c.l.b16 %v386
    %v1423 = vunpack.c.h.b16 %v386
    %v1424 = vunpack.c.l.b16 %v387
    %v1425 = vunpack.c.h.b16 %v387
    %v1426 = vunpack.c.l.b16 %v388
    %v1427 = vunpack.c.h.b16 %v388
    %v1428 = vunpack.c.l.b16 %v389
    %v1429 = vunpack.c.l.b16 %v390
    %v1430 = vunpack.c.h.b16 %v390
    %v1431 = vunpack.c.l.b16 %v391
    %v1432 = vunpack.c.h.b16 %v391
    %v1433 = vunpack.c.l.b16 %v392
    %v1434 = vunpack.c.h.b16 %v392
    %v1435 = vunpack.c.l.b16 %v393
    %v1436 = vunpack.c.l.b16 %v394
    %v1437 = vunpack.c.h.b16 %v394
    %v1438 = vunpack.c.l.b16 %v395
    %v1439 = vunpack.c.h.b16 %v395
    %v1440 = vunpack.c.l.b16 %v396
    %v1441 = vunpack.c.h.b16 %v396
    %v1442 = vunpack.c.l.b16 %v397
    %v1443 = vunpack.c.l.b16 %v398
    %v1444 = vunpack.c.h.b16 %v398
    %v1445 = vunpack.c.l.b16 %v399
    %v1446 = vunpack.c.h.b16 %v399
    %v1447 = vunpack.c.l.b16 %v400
    %v1448 = vunpack.c.h.b16 %v400
    %v1449 = vunpack.c.l.b16 %v401
    %v1450 = vunpack.c.l.b16 %v402
    %v1451 = vunpack.c.h.b16 %v402
    %v1452 = vunpack.c.l.b16 %v403
    %v1453 = vunpack.c.h.b16 %v403
    %v1454 = vunpack.c.l.b16 %v404
    %v1455 = vunpack.c.h.b16 %v404
    %v1456 = vunpack.c.l.b16 %v405
    %v1457 = vunpack.c.l.b16 %v406
    %v1458 = vunpack.c.h.b16 %v406
    %v1459 = vunpack.c.l.b16 %v407
    %v1460 = vunpack.c.h.b16 %v407
    %v1461 = vunpack.c.l.b16 %v408
    %v1462 = vunpack.c.h.b16 %v408
    %v1463 = vunpack.c.l.b16 %v409
    %v1464 = vunpack.c.l.b16 %v410
    %v1465 = vunpack.c.h.b16 %v410
    %v1466 = vunpack.c.l.b16 %v411
    %v1467 = vunpack.c.h.b16 %v411
    %v1468 = vunpack.c.l.b16 %v412
    %v1469 = vunpack.c.h.b16 %v412
    %v1470 = vunpack.c.l.b16 %v413
    %v1471 = vunpack.c.l.b16 %v414
    %v1472 = vunpack.c.h.b16 %v414
    %v1473 = vunpack.c.l.b16 %v415
    %v1474 = vunpack.c.h.b16 %v415
    %v1475 = vunpack.c.l.b16 %v416
    %v1476 = vunpack.c.h.b16 %v416
    %v1477 = vunpack.c.l.b16 %v417
    %v1478 = vunpack.c.l.b16 %v418
    %v1479 = vunpack.c.h.b16 %v418
    %v1480 = vunpack.c.l.b16 %v419
    %v1481 = vunpack.c.h.b16 %v419
    %v1482 = vunpack.c.l.b16 %v420
    %v1483 = vunpack.c.h.b16 %v420
    %v1484 = vunpack.c.l.b16 %v421
    %v1485 = vunpack.c.l.b16 %v422
    %v1486 = vunpack.c.h.b16 %v422
    %v1487 = vunpack.c.l.b16 %v423
    %v1488 = vunpack.c.h.b16 %v423
    %v1489 = vunpack.c.l.b16 %v424
    %v1490 = vunpack.c.h.b16 %v424
    %v1491 = vunpack.c.l.b16 %v425
    %v1492 = vunpack.c.l.b16 %v426
    %v1493 = vunpack.c.h.b16 %v426
    %v1494 = vunpack.c.l.b16 %v427
    %v1495 = vunpack.c.h.b16 %v427
    %v1496 = vunpack.c.l.b16 %v428
    %v1497 = vunpack.c.h.b16 %v428
    %v1498 = vunpack.c.l.b16 %v429
    %v1499 = vunpack.c.l.b16 %v430
    %v1500 = vunpack.c.h.b16 %v430
    %v1501 = vunpack.c.l.b16 %v431
    %v1502 = vunpack.c.h.b16 %v431
    %v1503 = vunpack.c.l.b16 %v432
    %v1504 = vunpack.c.h.b16 %v432
    %v1505 = vunpack.c.l.b16 %v433
    %v1506 = vunpack.c.l.b16 %v434
    %v1507 = vunpack.c.h.b16 %v434
    %v1508 = vunpack.c.l.b16 %v435
    %v1509 = vunpack.c.h.b16 %v435
    %v1510 = vunpack.c.l.b16 %v436
    %v1511 = vunpack.c.h.b16 %v436
    %v1512 = vunpack.c.l.b16 %v437
    %v1513 = vunpack.c.l.b16 %v438
    %v1514 = vunpack.c.h.b16 %v438
    %v1515 = vunpack.c.l.b16 %v439
    %v1516 = vunpack.c.h.b16 %v439
    %v1517 = vunpack.c.l.b16 %v440
    %v1518 = vunpack.c.h.b16 %v440
    %v1519 = vunpack.c.l.b16 %v441
    %v1520 = vunpack.c.l.b16 %v442
    %v1521 = vunpack.c.h.b16 %v442
    %v1522 = vunpack.c.l.b16 %v443
    %v1523 = vunpack.c.h.b16 %v443
    %v1524 = vunpack.c.l.b16 %v444
    %v1525 = vunpack.c.h.b16 %v444
    %v1526 = vunpack.c.l.b16 %v445
    %v1527 = vunpack.c.l.b16 %v446
    %v1528 = vunpack.c.h.b16 %v446
    %v1529 = vunpack.c.l.b16 %v447
    %v1530 = vunpack.c.h.b16 %v447
    %v1531 = vunpack.c.l.b16 %v448
    %v1532 = vunpack.c.h.b16 %v448
    %v1533 = vunpack.c.l.b16 %v449
    %v1534 = vunpack.c.l.b16 %v450
    %v1535 = vunpack.c.h.b16 %v450
    %v1536 = vunpack.c.l.b16 %v451
    %v1537 = vunpack.c.h.b16 %v451
    %v1538 = vunpack.c.l.b16 %v452
    %v1539 = vunpack.c.h.b16 %v452
    %v1540 = vunpack.c.l.b16 %v453
    %v1541 = vunpack.c.l.b16 %v454
    %v1542 = vunpack.c.h.b16 %v454
    %v1543 = vunpack.c.l.b16 %v455
    %v1544 = vunpack.c.h.b16 %v455
    %v1545 = vunpack.c.l.b16 %v456
    %v1546 = vunpack.c.h.b16 %v456
    %v1547 = vunpack.c.l.b16 %v457
    %v1548 = vunpack.c.l.b16 %v458
    %v1549 = vunpack.c.h.b16 %v458
    %v1550 = vunpack.c.l.b16 %v459
    %v1551 = vunpack.c.h.b16 %v459
    %v1552 = vunpack.c.l.b16 %v460
    %v1553 = vunpack.c.h.b16 %v460
    %v1554 = vunpack.c.l.b16 %v461
    %v1555 = vpack.c.b16 %v890, %v883
    %v1556 = vpack.c.b16 %v891, %v884
    %v1557 = vpack.c.b16 %v892, %v885
    %v1558 = vpack.c.b16 %v893, %v886
    %v1559 = vpack.c.b16 %v894, %v887
    %v1560 = vpack.c.b16 %v895, %v888
    %v1561 = vpack.c.b16 %v896, %v889
    %v1562 = vpack.c.b16 %v904, %v897
    %v1563 = vpack.c.b16 %v905, %v898
    %v1564 = vpack.c.b16 %v906, %v899
    %v1565 = vpack.c.b16 %v907, %v900
    %v1566 = vpack.c.b16 %v908, %v901
    %v1567 = vpack.c.b16 %v909, %v902
    %v1568 = vpack.c.b16 %v910, %v903
    %v1569 = vpack.c.b16 %v918, %v911
    %v1570 = vpack.c.b16 %v919, %v912
    %v1571 = vpack.c.b16 %v920, %v913
    %v1572 = vpack.c.b16 %v921, %v914
    %v1573 = vpack.c.b16 %v922, %v915
    %v1574 = vpack.c.b16 %v923, %v916
    %v1575 = vpack.c.b16 %v924, %v917
    %v1576 = vpack.c.b16 %v932, %v925
    %v1577 = vpack.c.b16 %v933, %v926
    %v1578 = vpack.c.b16 %v934, %v927
    %v1579 = vpack.c.b16 %v935, %v928
    %v1580 = vpack.c.b16 %v936, %v929
    %v1581 = vpack.c.b16 %v937, %v930
    %v1582 = vpack.c.b16 %v938, %v931
    %v1583 = vpack.c.b16 %v946, %v939
    %v1584 = vpack.c.b16 %v947, %v940
    %v1585 = vpack.c.b16 %v948, %v941
    %v1586 = vpack.c.b16 %v949, %v942
    %v1587 = vpack.c.b16 %v950, %v943
    %v1588 = vpack.c.b16 %v951, %v944
    %v1589 = vpack.c.b16 %v952, %v945
    %v1590 = vpack.c.b16 %v960, %v953
    %v1591 = vpack.c.b16 %v961, %v954
    %v1592 = vpack.c.b16 %v962, %v955
    %v1593 = vpack.c.b16 %v963, %v956
    %v1594 = vpack.c.b16 %v964, %v957
    %v1595 = vpack.c.b16 %v965, %v958
    %v1596 = vpack.c.b16 %v966, %v959
    %v1597 = vpack.c.b16 %v974, %v967
    %v1598 = vpack.c.b16 %v975, %v968
    %v1599 = vpack.c.b16 %v976, %v969
    %v1600 = vpack.c.b16 %v977, %v970
    %v1601 = vpack.c.b16 %v978, %v971
    %v1602 = vpack.c.b16 %v979, %v972
    %v1603 = vpack.c.b16 %v980, %v973
    %v1604 = vpack.c.b16 %v988, %v981
    %v1605 = vpack.c.b16 %v989, %v982
    %v1606 = vpack.c.b16 %v990, %v983
    %v1607 = vpack.c.b16 %v991, %v984
    %v1608 = vpack.c.b16 %v992, %v985
    %v1609 = vpack.c.b16 %v993, %v986
    %v1610 = vpack.c.b16 %v994, %v987
    %v1611 = vpack.c.b16 %v1002, %v995
    %v1612 = vpack.c.b16 %v1003, %v996
    %v1613 = vpack.c.b16 %v1004, %v997
    %v1614 = vpack.c.b16 %v1005, %v998
    %v1615 = vpack.c.b16 %v1006, %v999
    %v1616 = vpack.c.b16 %v1007, %v1000
    %v1617 = vpack.c.b16 %v1008, %v1001
    %v1618 = vpack.c.b16 %v1016, %v1009
    %v1619 = vpack.c.b16 %v1017, %v1010
    %v1620 = vpack.c.b16 %v1018, %v1011
    %v1621 = vpack.c.b16 %v1019, %v1012
    %v1622 = vpack.c.b16 %v1020, %v1013
    %v1623 = vpack.c.b16 %v1021, %v1014
    %v1624 = vpack.c.b16 %v1022, %v1015
    %v1625 = vpack.c.b16 %v1030, %v1023
    %v1626 = vpack.c.b16 %v1031, %v1024
    %v1627 = vpack.c.b16 %v1032, %v1025
    %v1628 = vpack.c.b16 %v1033, %v1026
    %v1629 = vpack.c.b16 %v1034, %v1027
    %v1630 = vpack.c.b16 %v1035, %v1028
    %v1631 = vpack.c.b16 %v1036, %v1029
    %v1632 = vpack.c.b16 %v1044, %v1037
    %v1633 = vpack.c.b16 %v1045, %v1038
    %v1634 = vpack.c.b16 %v1046, %v1039
    %v1635 = vpack.c.b16 %v1047, %v1040
    %v1636 = vpack.c.b16 %v1048, %v1041
    %v1637 = vpack.c.b16 %v1049, %v1042
    %v1638 = vpack.c.b16 %v1050, %v1043
    %v1639 = vpack.c.b16 %v1058, %v1051
    %v1640 = vpack.c.b16 %v1059, %v1052
    %v1641 = vpack.c.b16 %v1060, %v1053
    %v1642 = vpack.c.b16 %v1061, %v1054
    %v1643 = vpack.c.b16 %v1062, %v1055
    %v1644 = vpack.c.b16 %v1063, %v1056
    %v1645 = vpack.c.b16 %v1064, %v1057
    %v1646 = vpack.c.b16 %v1072, %v1065
    %v1647 = vpack.c.b16 %v1073, %v1066
    %v1648 = vpack.c.b16 %v1074, %v1067
    %v1649 = vpack.c.b16 %v1075, %v1068
    %v1650 = vpack.c.b16 %v1076, %v1069
    %v1651 = vpack.c.b16 %v1077, %v1070
    %v1652 = vpack.c.b16 %v1078, %v1071
    %v1653 = vpack.c.b16 %v1086, %v1079
    %v1654 = vpack.c.b16 %v1087, %v1080
    %v1655 = vpack.c.b16 %v1088, %v1081
    %v1656 = vpack.c.b16 %v1089, %v1082
    %v1657 = vpack.c.b16 %v1090, %v1083
    %v1658 = vpack.c.b16 %v1091, %v1084
    %v1659 = vpack.c.b16 %v1092, %v1085
    %v1660 = vpack.c.b16 %v1100, %v1093
    %v1661 = vpack.c.b16 %v1101, %v1094
    %v1662 = vpack.c.b16 %v1102, %v1095
    %v1663 = vpack.c.b16 %v1103, %v1096
    %v1664 = vpack.c.b16 %v1104, %v1097
    %v1665 = vpack.c.b16 %v1105, %v1098
    %v1666 = vpack.c.b16 %v1106, %v1099
    %v1667 = vpack.c.b16 %v1114, %v1107
    %v1668 = vpack.c.b16 %v1115, %v1108
    %v1669 = vpack.c.b16 %v1116, %v1109
    %v1670 = vpack.c.b16 %v1117, %v1110
    %v1671 = vpack.c.b16 %v1118, %v1111
    %v1672 = vpack.c.b16 %v1119, %v1112
    %v1673 = vpack.c.b16 %v1120, %v1113
    %v1674 = vpack.c.b16 %v1128, %v1121
    %v1675 = vpack.c.b16 %v1129, %v1122
    %v1676 = vpack.c.b16 %v1130, %v1123
    %v1677 = vpack.c.b16 %v1131, %v1124
    %v1678 = vpack.c.b16 %v1132, %v1125
    %v1679 = vpack.c.b16 %v1133, %v1126
    %v1680 = vpack.c.b16 %v1134, %v1127
    %v1681 = vpack.c.b16 %v1142, %v1135
    %v1682 = vpack.c.b16 %v1143, %v1136
    %v1683 = vpack.c.b16 %v1144, %v1137
    %v1684 = vpack.c.b16 %v1145, %v1138
    %v1685 = vpack.c.b16 %v1146, %v1139
    %v1686 = vpack.c.b16 %v1147, %v1140
    %v1687 = vpack.c.b16 %v1148, %v1141
    %v1688 = vpack.c.b16 %v1156, %v1149
    %v1689 = vpack.c.b16 %v1157, %v1150
    %v1690 = vpack.c.b16 %v1158, %v1151
    %v1691 = vpack.c.b16 %v1159, %v1152
    %v1692 = vpack.c.b16 %v1160, %v1153
    %v1693 = vpack.c.b16 %v1161, %v1154
    %v1694 = vpack.c.b16 %v1162, %v1155
    %v1695 = vpack.c.b16 %v1170, %v1163
    %v1696 = vpack.c.b16 %v1171, %v1164
    %v1697 = vpack.c.b16 %v1172, %v1165
    %v1698 = vpack.c.b16 %v1173, %v1166
    %v1699 = vpack.c.b16 %v1174, %v1167
    %v1700 = vpack.c.b16 %v1175, %v1168
    %v1701 = vpack.c.b16 %v1176, %v1169
    %v1702 = vpack.c.b16 %v1184, %v1177
    %v1703 = vpack.c.b16 %v1185, %v1178
    %v1704 = vpack.c.b16 %v1186, %v1179
    %v1705 = vpack.c.b16 %v1187, %v1180
    %v1706 = vpack.c.b16 %v1188, %v1181
    %v1707 = vpack.c.b16 %v1189, %v1182
    %v1708 = vpack.c.b16 %v1190, %v1183
    %v1709 = vpack.c.b16 %v1198, %v1191
    %v1710 = vpack.c.b16 %v1199, %v1192
    %v1711 = vpack.c.b16 %v1200, %v1193
    %v1712 = vpack.c.b16 %v1201, %v1194
    %v1713 = vpack.c.b16 %v1202, %v1195
    %v1714 = vpack.c.b16 %v1203, %v1196
    %v1715 = vpack.c.b16 %v1204, %v1197
    %v1716 = vpack.c.b16 %v1212, %v1205
    %v1717 = vpack.c.b16 %v1213, %v1206
    %v1718 = vpack.c.b16 %v1214, %v1207
    %v1719 = vpack.c.b16 %v1215, %v1208
    %v1720 = vpack.c.b16 %v1216, %v1209
    %v1721 = vpack.c.b16 %v1217, %v1210
    %v1722 = vpack.c.b16 %v1218, %v1211
    %v1723 = vpack.c.b16 %v1226, %v1219
    %v1724 = vpack.c.b16 %v1227, %v1220
    %v1725 = vpack.c.b16 %v1228, %v1221
    %v1726 = vpack.c.b16 %v1229, %v1222
    %v1727 = vpack.c.b16 %v1230, %v1223
    %v1728 = vpack.c.b16 %v1231, %v1224
    %v1729 = vpack.c.b16 %v1232, %v1225
    %v1730 = vpack.c.b16 %v1240, %v1233
    %v1731 = vpack.c.b16 %v1241, %v1234
    %v1732 = vpack.c.b16 %v1242, %v1235
    %v1733 = vpack.c.b16 %v1243, %v1236
    %v1734 = vpack.c.b16 %v1244, %v1237
    %v1735 = vpack.c.b16 %v1245, %v1238
    %v1736 = vpack.c.b16 %v1246, %v1239
    %v1737 = vpack.c.b16 %v1254, %v1247
    %v1738 = vpack.c.b16 %v1255, %v1248
    %v1739 = vpack.c.b16 %v1256, %v1249
    %v1740 = vpack.c.b16 %v1257, %v1250
    %v1741 = vpack.c.b16 %v1258, %v1251
    %v1742 = vpack.c.b16 %v1259, %v1252
    %v1743 = vpack.c.b16 %v1260, %v1253
    %v1744 = vpack.c.b16 %v1268, %v1261
    %v1745 = vpack.c.b16 %v1269, %v1262
    %v1746 = vpack.c.b16 %v1270, %v1263
    %v1747 = vpack.c.b16 %v1271, %v1264
    %v1748 = vpack.c.b16 %v1272, %v1265
    %v1749 = vpack.c.b16 %v1273, %v1266
    %v1750 = vpack.c.b16 %v1274, %v1267
    %v1751 = vpack.c.b16 %v1282, %v1275
    %v1752 = vpack.c.b16 %v1283, %v1276
    %v1753 = vpack.c.b16 %v1284, %v1277
    %v1754 = vpack.c.b16 %v1285, %v1278
    %v1755 = vpack.c.b16 %v1286, %v1279
    %v1756 = vpack.c.b16 %v1287, %v1280
    %v1757 = vpack.c.b16 %v1288, %v1281
    %v1758 = vpack.c.b16 %v1296, %v1289
    %v1759 = vpack.c.b16 %v1297, %v1290
    %v1760 = vpack.c.b16 %v1298, %v1291
    %v1761 = vpack.c.b16 %v1299, %v1292
    %v1762 = vpack.c.b16 %v1300, %v1293
    %v1763 = vpack.c.b16 %v1301, %v1294
    %v1764 = vpack.c.b16 %v1302, %v1295
    %v1765 = vpack.c.b16 %v1310, %v1303
    %v1766 = vpack.c.b16 %v1311, %v1304
    %v1767 = vpack.c.b16 %v1312, %v1305
    %v1768 = vpack.c.b16 %v1313, %v1306
    %v1769 = vpack.c.b16 %v1314, %v1307
    %v1770 = vpack.c.b16 %v1315, %v1308
    %v1771 = vpack.c.b16 %v1316, %v1309
    %v1772 = vpack.c.b16 %v1324, %v1317
    %v1773 = vpack.c.b16 %v1325, %v1318
    %v1774 = vpack.c.b16 %v1326, %v1319
    %v1775 = vpack.c.b16 %v1327, %v1320
    %v1776 = vpack.c.b16 %v1328, %v1321
    %v1777 = vpack.c.b16 %v1329, %v1322
    %v1778 = vpack.c.b16 %v1330, %v1323
    %v1779 = vpack.c.b16 %v1338, %v1331
    %v1780 = vpack.c.b16 %v1339, %v1332
    %v1781 = vpack.c.b16 %v1340, %v1333
    %v1782 = vpack.c.b16 %v1341, %v1334
    %v1783 = vpack.c.b16 %v1342, %v1335
    %v1784 = vpack.c.b16 %v1343, %v1336
    %v1785 = vpack.c.b16 %v1344, %v1337
    %v1786 = vpack.c.b16 %v1352, %v1345
    %v1787 = vpack.c.b16 %v1353, %v1346
    %v1788 = vpack.c.b16 %v1354, %v1347
    %v1789 = vpack.c.b16 %v1355, %v1348
    %v1790 = vpack.c.b16 %v1356, %v1349
    %v1791 = vpack.c.b16 %v1357, %v1350
    %v1792 = vpack.c.b16 %v1358, %v1351
    %v1793 = vpack.c.b16 %v1366, %v1359
    %v1794 = vpack.c.b16 %v1367, %v1360
    %v1795 = vpack.c.b16 %v1368, %v1361
    %v1796 = vpack.c.b16 %v1369, %v1362
    %v1797 = vpack.c.b16 %v1370, %v1363
    %v1798 = vpack.c.b16 %v1371, %v1364
    %v1799 = vpack.c.b16 %v1372, %v1365
    %v1800 = vpack.c.b16 %v1380, %v1373
    %v1801 = vpack.c.b16 %v1381, %v1374
    %v1802 = vpack.c.b16 %v1382, %v1375
    %v1803 = vpack.c.b16 %v1383, %v1376
    %v1804 = vpack.c.b16 %v1384, %v1377
    %v1805 = vpack.c.b16 %v1385, %v1378
    %v1806 = vpack.c.b16 %v1386, %v1379
    %v1807 = vpack.c.b16 %v1394, %v1387
    %v1808 = vpack.c.b16 %v1395, %v1388
    %v1809 = vpack.c.b16 %v1396, %v1389
    %v1810 = vpack.c.b16 %v1397, %v1390
    %v1811 = vpack.c.b16 %v1398, %v1391
    %v1812 = vpack.c.b16 %v1399, %v1392
    %v1813 = vpack.c.b16 %v1400, %v1393
    %v1814 = vpack.c.b16 %v1408, %v1401
    %v1815 = vpack.c.b16 %v1409, %v1402
    %v1816 = vpack.c.b16 %v1410, %v1403
    %v1817 = vpack.c.b16 %v1411, %v1404
    %v1818 = vpack.c.b16 %v1412, %v1405
    %v1819 = vpack.c.b16 %v1413, %v1406
    %v1820 = vpack.c.b16 %v1414, %v1407
    %v1821 = vpack.c.b16 %v1422, %v1415
    %v1822 = vpack.c.b16 %v1423, %v1416
    %v1823 = vpack.c.b16 %v1424, %v1417
    %v1824 = vpack.c.b16 %v1425, %v1418
    %v1825 = vpack.c.b16 %v1426, %v1419
    %v1826 = vpack.c.b16 %v1427, %v1420
    %v1827 = vpack.c.b16 %v1428, %v1421
    %v1828 = vpack.c.b16 %v1436, %v1429
    %v1829 = vpack.c.b16 %v1437, %v1430
    %v1830 = vpack.c.b16 %v1438, %v1431
    %v1831 = vpack.c.b16 %v1439, %v1432
    %v1832 = vpack.c.b16 %v1440, %v1433
    %v1833 = vpack.c.b16 %v1441, %v1434
    %v1834 = vpack.c.b16 %v1442, %v1435
    %v1835 = vpack.c.b16 %v1450, %v1443
    %v1836 = vpack.c.b16 %v1451, %v1444
    %v1837 = vpack.c.b16 %v1452, %v1445
    %v1838 = vpack.c.b16 %v1453, %v1446
    %v1839 = vpack.c.b16 %v1454, %v1447
    %v1840 = vpack.c.b16 %v1455, %v1448
    %v1841 = vpack.c.b16 %v1456, %v1449
    %v1842 = vpack.c.b16 %v1464, %v1457
    %v1843 = vpack.c.b16 %v1465, %v1458
    %v1844 = vpack.c.b16 %v1466, %v1459
    %v1845 = vpack.c.b16 %v1467, %v1460
    %v1846 = vpack.c.b16 %v1468, %v1461
    %v1847 = vpack.c.b16 %v1469, %v1462
    %v1848 = vpack.c.b16 %v1470, %v1463
    %v1849 = vpack.c.b16 %v1478, %v1471
    %v1850 = vpack.c.b16 %v1479, %v1472
    %v1851 = vpack.c.b16 %v1480, %v1473
    %v1852 = vpack.c.b16 %v1481, %v1474
    %v1853 = vpack.c.b16 %v1482, %v1475
    %v1854 = vpack.c.b16 %v1483, %v1476
    %v1855 = vpack.c.b16 %v1484, %v1477
    %v1856 = vpack.c.b16 %v1492, %v1485
    %v1857 = vpack.c.b16 %v1493, %v1486
    %v1858 = vpack.c.b16 %v1494, %v1487
    %v1859 = vpack.c.b16 %v1495, %v1488
    %v1860 = vpack.c.b16 %v1496, %v1489
    %v1861 = vpack.c.b16 %v1497, %v1490
    %v1862 = vpack.c.b16 %v1498, %v1491
    %v1863 = vpack.c.b16 %v1506, %v1499
    %v1864 = vpack.c.b16 %v1507, %v1500
    %v1865 = vpack.c.b16 %v1508, %v1501
    %v1866 = vpack.c.b16 %v1509, %v1502
    %v1867 = vpack.c.b16 %v1510, %v1503
    %v1868 = vpack.c.b16 %v1511, %v1504
    %v1869 = vpack.c.b16 %v1512, %v1505
    %v1870 = vpack.c.b16 %v1520, %v1513
    %v1871 = vpack.c.b16 %v1521, %v1514
    %v1872 = vpack.c.b16 %v1522, %v1515
    %v1873 = vpack.c.b16 %v1523, %v1516
    %v1874 = vpack.c.b16 %v1524, %v1517
    %v1875 = vpack.c.b16 %v1525, %v1518
    %v1876 = vpack.c.b16 %v1526, %v1519
    %v1877 = vpack.c.b16 %v1534, %v1527
    %v1878 = vpack.c.b16 %v1535, %v1528
    %v1879 = vpack.c.b16 %v1536, %v1529
    %v1880 = vpack.c.b16 %v1537, %v1530
    %v1881 = vpack.c.b16 %v1538, %v1531
    %v1882 = vpack.c.b16 %v1539, %v1532
    %v1883 = vpack.c.b16 %v1540, %v1533
    %v1884 = vpack.c.b16 %v1548, %v1541
    %v1885 = vpack.c.b16 %v1549, %v1542
    %v1886 = vpack.c.b16 %v1550, %v1543
    %v1887 = vpack.c.b16 %v1551, %v1544
    %v1888 = vpack.c.b16 %v1552, %v1545
    %v1889 = vpack.c.b16 %v1553, %v1546
    %v1890 = vpack.c.b16 %v1554, %v1547
    %2227 = vmatprep.subr.bf16.mxu0 %v1556
    %2228 = vmatpush1.bf16.msra.mxu0 %v1555
    %2229 = vmatprep.subr.bf16.mxu0 %v1563
    %2230 = vmatpush1.bf16.msra.mxu0 %v1562
    %2231 = vmatprep.subr.bf16.mxu0 %v1570
    %2232 = vmatpush1.bf16.msra.mxu0 %v1569
    %2233 = vmatprep.subr.bf16.mxu0 %v1577
    %2234 = vmatpush1.bf16.msra.mxu0 %v1576
    %2235 = vmatprep.subr.bf16.mxu0 %v1584
    %2236 = vmatpush1.bf16.msra.mxu0 %v1583
    %2237 = vmatprep.subr.bf16.mxu0 %v1591
    %2238 = vmatpush1.bf16.msra.mxu0 %v1590
    %2239 = vmatprep.subr.bf16.mxu0 %v1598
    %2240 = vmatpush1.bf16.msra.mxu0 %v1597
    %2241 = vmatprep.subr.bf16.mxu0 %v1605
    %2242 = vmatpush1.bf16.msra.mxu0 %v1604
    %2243 = vmatprep.subr.bf16.mxu0 %v1612
    %2244 = vmatpush1.bf16.msra.mxu0 %v1611
    %2245 = vmatprep.subr.bf16.mxu0 %v1619
    %2246 = vmatpush1.bf16.msra.mxu0 %v1618
    %2247 = vmatprep.subr.bf16.mxu0 %v1626
    %2248 = vmatpush1.bf16.msra.mxu0 %v1625
    %2249 = vmatprep.subr.bf16.mxu0 %v1633
    %2250 = vmatpush1.bf16.msra.mxu0 %v1632
    %2251 = vmatprep.subr.bf16.mxu0 %v1640
    %2252 = vmatpush1.bf16.msra.mxu0 %v1639
    %2253 = vmatprep.subr.bf16.mxu0 %v1647
    %2254 = vmatpush1.bf16.msra.mxu0 %v1646
    %2255 = vmatprep.subr.bf16.mxu0 %v1654
    %2256 = vmatpush1.bf16.msra.mxu0 %v1653
    %2257 = vmatprep.subr.bf16.mxu0 %v1661
    %2258 = vmatpush1.bf16.msra.mxu0 %v1660
    %2259 = vmatprep.mubr.bf16.mxu0 %v73
    %2260 = vmatmul.mubr.bf16.gmra.mrb[0].mxu0 %v72
    %v2261 = vpop.f32.mrb[0].mxu0
    %v2262 = vadd.f32 %v467, %v2261
    %v2263 = vpop.f32.mrb[0].mxu0
    %v2264 = vadd.f32 %v471, %v2263
    %v2265 = vpop.f32.mrb[0].mxu0
    %v2266 = vpop.f32.mrb[0].mxu0
    %2267 = vdwg.mxu0
    %2268 = vmatprep.subr.bf16.mxu0 %v1668
    %2269 = vmatpush1.bf16.msra.mxu0 %v1667
    %2270 = vmatprep.subr.bf16.mxu0 %v1675
    %2271 = vmatpush1.bf16.msra.mxu0 %v1674
    %2272 = vmatprep.subr.bf16.mxu0 %v1682
    %2273 = vmatpush1.bf16.msra.mxu0 %v1681
    %2274 = vmatprep.subr.bf16.mxu0 %v1689
    %2275 = vmatpush1.bf16.msra.mxu0 %v1688
    %2276 = vmatprep.subr.bf16.mxu0 %v1696
    %2277 = vmatpush1.bf16.msra.mxu0 %v1695
    %2278 = vmatprep.subr.bf16.mxu0 %v1703
    %2279 = vmatpush1.bf16.msra.mxu0 %v1702
    %2280 = vmatprep.subr.bf16.mxu0 %v1710
    %2281 = vmatpush1.bf16.msra.mxu0 %v1709
    %2282 = vmatprep.subr.bf16.mxu0 %v1717
    %2283 = vmatpush1.bf16.msra.mxu0 %v1716
    %2284 = vmatprep.subr.bf16.mxu0 %v1724
    %2285 = vmatpush1.bf16.msra.mxu0 %v1723
    %2286 = vmatprep.subr.bf16.mxu0 %v1731
    %2287 = vmatpush1.bf16.msra.mxu0 %v1730
    %2288 = vmatprep.subr.bf16.mxu0 %v1738
    %2289 = vmatpush1.bf16.msra.mxu0 %v1737
    %2290 = vmatprep.subr.bf16.mxu0 %v1745
    %2291 = vmatpush1.bf16.msra.mxu0 %v1744
    %2292 = vmatprep.subr.bf16.mxu0 %v1752
    %2293 = vmatpush1.bf16.msra.mxu0 %v1751
    %2294 = vmatprep.subr.bf16.mxu0 %v1759
    %2295 = vmatpush1.bf16.msra.mxu0 %v1758
    %2296 = vmatprep.subr.bf16.mxu0 %v1766
    %2297 = vmatpush1.bf16.msra.mxu0 %v1765
    %2298 = vmatprep.subr.bf16.mxu0 %v1773
    %2299 = vmatpush1.bf16.msra.mxu0 %v1772
    %2300 = vmatprep.mubr.bf16.mxu0 %v75
    %2301 = vmatmul.mubr.bf16.gmra.mrb[0].mxu0 %v74
    %v2302 = vpop.f32.mrb[0].mxu0
    %v2303 = vadd.f32 %v2262, %v2302
    %v2304 = vpop.f32.mrb[0].mxu0
    %v2305 = vadd.f32 %v2264, %v2304
    %v2306 = vpop.f32.mrb[0].mxu0
    %v2307 = vpop.f32.mrb[0].mxu0
    %2308 = vdwg.mxu0
    %2309 = vmatprep.subr.bf16.mxu0 %v1780
    %2310 = vmatpush1.bf16.msra.mxu0 %v1779
    %2311 = vmatprep.subr.bf16.mxu0 %v1787
    %2312 = vmatpush1.bf16.msra.mxu0 %v1786
    %2313 = vmatprep.subr.bf16.mxu0 %v1794
    %2314 = vmatpush1.bf16.msra.mxu0 %v1793
    %2315 = vmatprep.subr.bf16.mxu0 %v1801
    %2316 = vmatpush1.bf16.msra.mxu0 %v1800
    %2317 = vmatprep.subr.bf16.mxu0 %v1808
    %2318 = vmatpush1.bf16.msra.mxu0 %v1807
    %2319 = vmatprep.subr.bf16.mxu0 %v1815
    %2320 = vmatpush1.bf16.msra.mxu0 %v1814
    %2321 = vmatprep.subr.bf16.mxu0 %v1822
    %2322 = vmatpush1.bf16.msra.mxu0 %v1821
    %2323 = vmatprep.subr.bf16.mxu0 %v1829
    %2324 = vmatpush1.bf16.msra.mxu0 %v1828
    %2325 = vmatprep.subr.bf16.mxu0 %v1836
    %2326 = vmatpush1.bf16.msra.mxu0 %v1835
    %2327 = vmatprep.subr.bf16.mxu0 %v1843
    %2328 = vmatpush1.bf16.msra.mxu0 %v1842
    %2329 = vmatprep.subr.bf16.mxu0 %v1850
    %2330 = vmatpush1.bf16.msra.mxu0 %v1849
    %2331 = vmatprep.subr.bf16.mxu0 %v1857
    %2332 = vmatpush1.bf16.msra.mxu0 %v1856
    %2333 = vmatprep.subr.bf16.mxu0 %v1864
    %2334 = vmatpush1.bf16.msra.mxu0 %v1863
    %2335 = vmatprep.subr.bf16.mxu0 %v1871
    %2336 = vmatpush1.bf16.msra.mxu0 %v1870
    %2337 = vmatprep.subr.bf16.mxu0 %v1878
    %2338 = vmatpush1.bf16.msra.mxu0 %v1877
    %2339 = vmatprep.subr.bf16.mxu0 %v1885
    %2340 = vmatpush1.bf16.msra.mxu0 %v1884
    %2341 = vmatprep.mubr.bf16.mxu0 %v77
    %2342 = vmatmul.mubr.bf16.gmra.mrb[0].mxu0 %v76
    %v2343 = vpop.f32.mrb[0].mxu0
    %v2344 = vadd.f32 %v2303, %v2343
    %v2345 = vpop.f32.mrb[0].mxu0
    %v2346 = vadd.f32 %v2305, %v2345
    %v2347 = vpop.f32.mrb[0].mxu0
    %v2348 = vpop.f32.mrb[0].mxu0
    %2349 = vdwg.mxu0
    %2350 = vmatprep.subr.bf16.mxu0 %v1558
    %2351 = vmatpush1.bf16.msra.mxu0 %v1557
    %2352 = vmatprep.subr.bf16.mxu0 %v1565
    %2353 = vmatpush1.bf16.msra.mxu0 %v1564
    %2354 = vmatprep.subr.bf16.mxu0 %v1572
    %2355 = vmatpush1.bf16.msra.mxu0 %v1571
    %2356 = vmatprep.subr.bf16.mxu0 %v1579
    %2357 = vmatpush1.bf16.msra.mxu0 %v1578
    %2358 = vmatprep.subr.bf16.mxu0 %v1586
    %2359 = vmatpush1.bf16.msra.mxu0 %v1585
    %2360 = vmatprep.subr.bf16.mxu0 %v1593
    %2361 = vmatpush1.bf16.msra.mxu0 %v1592
    %2362 = vmatprep.subr.bf16.mxu0 %v1600
    %2363 = vmatpush1.bf16.msra.mxu0 %v1599
    %2364 = vmatprep.subr.bf16.mxu0 %v1607
    %2365 = vmatpush1.bf16.msra.mxu0 %v1606
    %2366 = vmatprep.subr.bf16.mxu0 %v1614
    %2367 = vmatpush1.bf16.msra.mxu0 %v1613
    %2368 = vmatprep.subr.bf16.mxu0 %v1621
    %2369 = vmatpush1.bf16.msra.mxu0 %v1620
    %2370 = vmatprep.subr.bf16.mxu0 %v1628
    %2371 = vmatpush1.bf16.msra.mxu0 %v1627
    %2372 = vmatprep.subr.bf16.mxu0 %v1635
    %2373 = vmatpush1.bf16.msra.mxu0 %v1634
    %2374 = vmatprep.subr.bf16.mxu0 %v1642
    %2375 = vmatpush1.bf16.msra.mxu0 %v1641
    %2376 = vmatprep.subr.bf16.mxu0 %v1649
    %2377 = vmatpush1.bf16.msra.mxu0 %v1648
    %2378 = vmatprep.subr.bf16.mxu0 %v1656
    %2379 = vmatpush1.bf16.msra.mxu0 %v1655
    %2380 = vmatprep.subr.bf16.mxu0 %v1663
    %2381 = vmatpush1.bf16.msra.mxu0 %v1662
    %2382 = vmatprep.mubr.bf16.mxu0 %v73
    %2383 = vmatmul.mubr.bf16.gmra.mrb[0].mxu0 %v72
    %v2384 = vpop.f32.mrb[0].mxu0
    %v2385 = vadd.f32 %v475, %v2384
    %v2386 = vpop.f32.mrb[0].mxu0
    %v2387 = vadd.f32 %v479, %v2386
    %v2388 = vpop.f32.mrb[0].mxu0
    %v2389 = vpop.f32.mrb[0].mxu0
    %2390 = vdwg.mxu0
    %2391 = vmatprep.subr.bf16.mxu0 %v1670
    %2392 = vmatpush1.bf16.msra.mxu0 %v1669
    %2393 = vmatprep.subr.bf16.mxu0 %v1677
    %2394 = vmatpush1.bf16.msra.mxu0 %v1676
    %2395 = vmatprep.subr.bf16.mxu0 %v1684
    %2396 = vmatpush1.bf16.msra.mxu0 %v1683
    %2397 = vmatprep.subr.bf16.mxu0 %v1691
    %2398 = vmatpush1.bf16.msra.mxu0 %v1690
    %2399 = vmatprep.subr.bf16.mxu0 %v1698
    %2400 = vmatpush1.bf16.msra.mxu0 %v1697
    %2401 = vmatprep.subr.bf16.mxu0 %v1705
    %2402 = vmatpush1.bf16.msra.mxu0 %v1704
    %2403 = vmatprep.subr.bf16.mxu0 %v1712
    %2404 = vmatpush1.bf16.msra.mxu0 %v1711
    %2405 = vmatprep.subr.bf16.mxu0 %v1719
    %2406 = vmatpush1.bf16.msra.mxu0 %v1718
    %2407 = vmatprep.subr.bf16.mxu0 %v1726
    %2408 = vmatpush1.bf16.msra.mxu0 %v1725
    %2409 = vmatprep.subr.bf16.mxu0 %v1733
    %2410 = vmatpush1.bf16.msra.mxu0 %v1732
    %2411 = vmatprep.subr.bf16.mxu0 %v1740
    %2412 = vmatpush1.bf16.msra.mxu0 %v1739
    %2413 = vmatprep.subr.bf16.mxu0 %v1747
    %2414 = vmatpush1.bf16.msra.mxu0 %v1746
    %2415 = vmatprep.subr.bf16.mxu0 %v1754
    %2416 = vmatpush1.bf16.msra.mxu0 %v1753
    %2417 = vmatprep.subr.bf16.mxu0 %v1761
    %2418 = vmatpush1.bf16.msra.mxu0 %v1760
    %2419 = vmatprep.subr.bf16.mxu0 %v1768
    %2420 = vmatpush1.bf16.msra.mxu0 %v1767
    %2421 = vmatprep.subr.bf16.mxu0 %v1775
    %2422 = vmatpush1.bf16.msra.mxu0 %v1774
    %2423 = vmatprep.mubr.bf16.mxu0 %v75
    %2424 = vmatmul.mubr.bf16.gmra.mrb[0].mxu0 %v74
    %v2425 = vpop.f32.mrb[0].mxu0
    %v2426 = vadd.f32 %v2385, %v2425
    %v2427 = vpop.f32.mrb[0].mxu0
    %v2428 = vadd.f32 %v2387, %v2427
    %v2429 = vpop.f32.mrb[0].mxu0
    %v2430 = vpop.f32.mrb[0].mxu0
    %2431 = vdwg.mxu0
    %2432 = vmatprep.subr.bf16.mxu0 %v1782
    %2433 = vmatpush1.bf16.msra.mxu0 %v1781
    %2434 = vmatprep.subr.bf16.mxu0 %v1789
    %2435 = vmatpush1.bf16.msra.mxu0 %v1788
    %2436 = vmatprep.subr.bf16.mxu0 %v1796
    %2437 = vmatpush1.bf16.msra.mxu0 %v1795
    %2438 = vmatprep.subr.bf16.mxu0 %v1803
    %2439 = vmatpush1.bf16.msra.mxu0 %v1802
    %2440 = vmatprep.subr.bf16.mxu0 %v1810
    %2441 = vmatpush1.bf16.msra.mxu0 %v1809
    %2442 = vmatprep.subr.bf16.mxu0 %v1817
    %2443 = vmatpush1.bf16.msra.mxu0 %v1816
    %2444 = vmatprep.subr.bf16.mxu0 %v1824
    %2445 = vmatpush1.bf16.msra.mxu0 %v1823
    %2446 = vmatprep.subr.bf16.mxu0 %v1831
    %2447 = vmatpush1.bf16.msra.mxu0 %v1830
    %2448 = vmatprep.subr.bf16.mxu0 %v1838
    %2449 = vmatpush1.bf16.msra.mxu0 %v1837
    %2450 = vmatprep.subr.bf16.mxu0 %v1845
    %2451 = vmatpush1.bf16.msra.mxu0 %v1844
    %2452 = vmatprep.subr.bf16.mxu0 %v1852
    %2453 = vmatpush1.bf16.msra.mxu0 %v1851
    %2454 = vmatprep.subr.bf16.mxu0 %v1859
    %2455 = vmatpush1.bf16.msra.mxu0 %v1858
    %2456 = vmatprep.subr.bf16.mxu0 %v1866
    %2457 = vmatpush1.bf16.msra.mxu0 %v1865
    %2458 = vmatprep.subr.bf16.mxu0 %v1873
    %2459 = vmatpush1.bf16.msra.mxu0 %v1872
    %2460 = vmatprep.subr.bf16.mxu0 %v1880
    %2461 = vmatpush1.bf16.msra.mxu0 %v1879
    %2462 = vmatprep.subr.bf16.mxu0 %v1887
    %2463 = vmatpush1.bf16.msra.mxu0 %v1886
    %2464 = vmatprep.mubr.bf16.mxu0 %v77
    %2465 = vmatmul.mubr.bf16.gmra.mrb[0].mxu0 %v76
    %v2466 = vpop.f32.mrb[0].mxu0
    %v2467 = vadd.f32 %v2426, %v2466
    %v2468 = vpop.f32.mrb[0].mxu0
    %v2469 = vadd.f32 %v2428, %v2468
    %v2470 = vpop.f32.mrb[0].mxu0
    %v2471 = vpop.f32.mrb[0].mxu0
    %2472 = vdwg.mxu0
    %2473 = vmatprep.subr.bf16.mxu0 %v1560
    %2474 = vmatpush1.bf16.msra.mxu0 %v1559
    %2475 = vmatprep.subr.bf16.mxu0 %v1567
    %2476 = vmatpush1.bf16.msra.mxu0 %v1566
    %2477 = vmatprep.subr.bf16.mxu0 %v1574
    %2478 = vmatpush1.bf16.msra.mxu0 %v1573
    %2479 = vmatprep.subr.bf16.mxu0 %v1581
    %2480 = vmatpush1.bf16.msra.mxu0 %v1580
    %2481 = vmatprep.subr.bf16.mxu0 %v1588
    %2482 = vmatpush1.bf16.msra.mxu0 %v1587
    %2483 = vmatprep.subr.bf16.mxu0 %v1595
    %2484 = vmatpush1.bf16.msra.mxu0 %v1594
    %2485 = vmatprep.subr.bf16.mxu0 %v1602
    %2486 = vmatpush1.bf16.msra.mxu0 %v1601
    %2487 = vmatprep.subr.bf16.mxu0 %v1609
    %2488 = vmatpush1.bf16.msra.mxu0 %v1608
    %2489 = vmatprep.subr.bf16.mxu0 %v1616
    %2490 = vmatpush1.bf16.msra.mxu0 %v1615
    %2491 = vmatprep.subr.bf16.mxu0 %v1623
    %2492 = vmatpush1.bf16.msra.mxu0 %v1622
    %2493 = vmatprep.subr.bf16.mxu0 %v1630
    %2494 = vmatpush1.bf16.msra.mxu0 %v1629
    %2495 = vmatprep.subr.bf16.mxu0 %v1637
    %2496 = vmatpush1.bf16.msra.mxu0 %v1636
    %2497 = vmatprep.subr.bf16.mxu0 %v1644
    %2498 = vmatpush1.bf16.msra.mxu0 %v1643
    %2499 = vmatprep.subr.bf16.mxu0 %v1651
    %2500 = vmatpush1.bf16.msra.mxu0 %v1650
    %2501 = vmatprep.subr.bf16.mxu0 %v1658
    %2502 = vmatpush1.bf16.msra.mxu0 %v1657
    %2503 = vmatprep.subr.bf16.mxu0 %v1665
    %2504 = vmatpush1.bf16.msra.mxu0 %v1664
    %2505 = vmatprep.mubr.bf16.mxu0 %v73
    %2506 = vmatmul.mubr.bf16.gmra.mrb[0].mxu0 %v72
    %v2507 = vpop.f32.mrb[0].mxu0
    %v2508 = vadd.f32 %v483, %v2507
    %v2509 = vpop.f32.mrb[0].mxu0
    %v2510 = vadd.f32 %v487, %v2509
    %v2511 = vpop.f32.mrb[0].mxu0
    %v2512 = vpop.f32.mrb[0].mxu0
    %2513 = vdwg.mxu0
    %2514 = vmatprep.subr.bf16.mxu0 %v1672
    %2515 = vmatpush1.bf16.msra.mxu0 %v1671
    %2516 = vmatprep.subr.bf16.mxu0 %v1679
    %2517 = vmatpush1.bf16.msra.mxu0 %v1678
    %2518 = vmatprep.subr.bf16.mxu0 %v1686
    %2519 = vmatpush1.bf16.msra.mxu0 %v1685
    %2520 = vmatprep.subr.bf16.mxu0 %v1693
    %2521 = vmatpush1.bf16.msra.mxu0 %v1692
    %2522 = vmatprep.subr.bf16.mxu0 %v1700
    %2523 = vmatpush1.bf16.msra.mxu0 %v1699
    %2524 = vmatprep.subr.bf16.mxu0 %v1707
    %2525 = vmatpush1.bf16.msra.mxu0 %v1706
    %2526 = vmatprep.subr.bf16.mxu0 %v1714
    %2527 = vmatpush1.bf16.msra.mxu0 %v1713
    %2528 = vmatprep.subr.bf16.mxu0 %v1721
    %2529 = vmatpush1.bf16.msra.mxu0 %v1720
    %2530 = vmatprep.subr.bf16.mxu0 %v1728
    %2531 = vmatpush1.bf16.msra.mxu0 %v1727
    %2532 = vmatprep.subr.bf16.mxu0 %v1735
    %2533 = vmatpush1.bf16.msra.mxu0 %v1734
    %2534 = vmatprep.subr.bf16.mxu0 %v1742
    %2535 = vmatpush1.bf16.msra.mxu0 %v1741
    %2536 = vmatprep.subr.bf16.mxu0 %v1749
    %2537 = vmatpush1.bf16.msra.mxu0 %v1748
    %2538 = vmatprep.subr.bf16.mxu0 %v1756
    %2539 = vmatpush1.bf16.msra.mxu0 %v1755
    %2540 = vmatprep.subr.bf16.mxu0 %v1763
    %2541 = vmatpush1.bf16.msra.mxu0 %v1762
    %2542 = vmatprep.subr.bf16.mxu0 %v1770
    %2543 = vmatpush1.bf16.msra.mxu0 %v1769
    %2544 = vmatprep.subr.bf16.mxu0 %v1777
    %2545 = vmatpush1.bf16.msra.mxu0 %v1776
    %2546 = vmatprep.mubr.bf16.mxu0 %v75
    %2547 = vmatmul.mubr.bf16.gmra.mrb[0].mxu0 %v74
    %v2548 = vpop.f32.mrb[0].mxu0
    %v2549 = vadd.f32 %v2508, %v2548
    %v2550 = vpop.f32.mrb[0].mxu0
    %v2551 = vadd.f32 %v2510, %v2550
    %v2552 = vpop.f32.mrb[0].mxu0
    %v2553 = vpop.f32.mrb[0].mxu0
    %2554 = vdwg.mxu0
    %2555 = vmatprep.subr.bf16.mxu0 %v1784
    %2556 = vmatpush1.bf16.msra.mxu0 %v1783
    %2557 = vmatprep.subr.bf16.mxu0 %v1791
    %2558 = vmatpush1.bf16.msra.mxu0 %v1790
    %2559 = vmatprep.subr.bf16.mxu0 %v1798
    %2560 = vmatpush1.bf16.msra.mxu0 %v1797
    %2561 = vmatprep.subr.bf16.mxu0 %v1805
    %2562 = vmatpush1.bf16.msra.mxu0 %v1804
    %2563 = vmatprep.subr.bf16.mxu0 %v1812
    %2564 = vmatpush1.bf16.msra.mxu0 %v1811
    %2565 = vmatprep.subr.bf16.mxu0 %v1819
    %2566 = vmatpush1.bf16.msra.mxu0 %v1818
    %2567 = vmatprep.subr.bf16.mxu0 %v1826
    %2568 = vmatpush1.bf16.msra.mxu0 %v1825
    %2569 = vmatprep.subr.bf16.mxu0 %v1833
    %2570 = vmatpush1.bf16.msra.mxu0 %v1832
    %2571 = vmatprep.subr.bf16.mxu0 %v1840
    %2572 = vmatpush1.bf16.msra.mxu0 %v1839
    %2573 = vmatprep.subr.bf16.mxu0 %v1847
    %2574 = vmatpush1.bf16.msra.mxu0 %v1846
    %2575 = vmatprep.subr.bf16.mxu0 %v1854
    %2576 = vmatpush1.bf16.msra.mxu0 %v1853
    %2577 = vmatprep.subr.bf16.mxu0 %v1861
    %2578 = vmatpush1.bf16.msra.mxu0 %v1860
    %2579 = vmatprep.subr.bf16.mxu0 %v1868
    %2580 = vmatpush1.bf16.msra.mxu0 %v1867
    %2581 = vmatprep.subr.bf16.mxu0 %v1875
    %2582 = vmatpush1.bf16.msra.mxu0 %v1874
    %2583 = vmatprep.subr.bf16.mxu0 %v1882
    %2584 = vmatpush1.bf16.msra.mxu0 %v1881
    %2585 = vmatprep.subr.bf16.mxu0 %v1889
    %2586 = vmatpush1.bf16.msra.mxu0 %v1888
    %2587 = vmatprep.mubr.bf16.mxu0 %v77
    %2588 = vmatmul.mubr.bf16.gmra.mrb[0].mxu0 %v76
    %v2589 = vpop.f32.mrb[0].mxu0
    %v2590 = vadd.f32 %v2549, %v2589
    %v2591 = vpop.f32.mrb[0].mxu0
    %v2592 = vadd.f32 %v2551, %v2591
    %v2593 = vpop.f32.mrb[0].mxu0
    %v2594 = vpop.f32.mrb[0].mxu0
    %2595 = vdwg.mxu0
    %2596 = vmatprep.subr.bf16.mxu0 0
    %2597 = vmatpush1.bf16.msra.mxu0 %v1561
    %2598 = vmatprep.subr.bf16.mxu0 0
    %2599 = vmatpush1.bf16.msra.mxu0 %v1568
    %2600 = vmatprep.subr.bf16.mxu0 0
    %2601 = vmatpush1.bf16.msra.mxu0 %v1575
    %2602 = vmatprep.subr.bf16.mxu0 0
    %2603 = vmatpush1.bf16.msra.mxu0 %v1582
    %2604 = vmatprep.subr.bf16.mxu0 0
    %2605 = vmatpush1.bf16.msra.mxu0 %v1589
    %2606 = vmatprep.subr.bf16.mxu0 0
    %2607 = vmatpush1.bf16.msra.mxu0 %v1596
    %2608 = vmatprep.subr.bf16.mxu0 0
    %2609 = vmatpush1.bf16.msra.mxu0 %v1603
    %2610 = vmatprep.subr.bf16.mxu0 0
    %2611 = vmatpush1.bf16.msra.mxu0 %v1610
    %2612 = vmatprep.subr.bf16.mxu0 0
    %2613 = vmatpush1.bf16.msra.mxu0 %v1617
    %2614 = vmatprep.subr.bf16.mxu0 0
    %2615 = vmatpush1.bf16.msra.mxu0 %v1624
    %2616 = vmatprep.subr.bf16.mxu0 0
    %2617 = vmatpush1.bf16.msra.mxu0 %v1631
    %2618 = vmatprep.subr.bf16.mxu0 0
    %2619 = vmatpush1.bf16.msra.mxu0 %v1638
    %2620 = vmatprep.subr.bf16.mxu0 0
    %2621 = vmatpush1.bf16.msra.mxu0 %v1645
    %2622 = vmatprep.subr.bf16.mxu0 0
    %2623 = vmatpush1.bf16.msra.mxu0 %v1652
    %2624 = vmatprep.subr.bf16.mxu0 0
    %2625 = vmatpush1.bf16.msra.mxu0 %v1659
    %2626 = vmatprep.subr.bf16.mxu0 0
    %2627 = vmatpush1.bf16.msra.mxu0 %v1666
    %2628 = vmatprep.mubr.bf16.mxu0 %v73
    %2629 = vmatmul.mubr.bf16.gmra.mrb[0].mxu0 %v72
    %v2630 = vpop.f32.mrb[0].mxu0
    %v2631 = vadd.f32 %v491, %v2630
    %v2632 = vpop.f32.mrb[0].mxu0
    %v2633 = vpop.f32.mrb[0].mxu0
    %v2634 = vpop.f32.mrb[0].mxu0
    %2635 = vdwg.mxu0
    %2636 = vmatprep.subr.bf16.mxu0 0
    %2637 = vmatpush1.bf16.msra.mxu0 %v1673
    %2638 = vmatprep.subr.bf16.mxu0 0
    %2639 = vmatpush1.bf16.msra.mxu0 %v1680
    %2640 = vmatprep.subr.bf16.mxu0 0
    %2641 = vmatpush1.bf16.msra.mxu0 %v1687
    %2642 = vmatprep.subr.bf16.mxu0 0
    %2643 = vmatpush1.bf16.msra.mxu0 %v1694
    %2644 = vmatprep.subr.bf16.mxu0 0
    %2645 = vmatpush1.bf16.msra.mxu0 %v1701
    %2646 = vmatprep.subr.bf16.mxu0 0
    %2647 = vmatpush1.bf16.msra.mxu0 %v1708
    %2648 = vmatprep.subr.bf16.mxu0 0
    %2649 = vmatpush1.bf16.msra.mxu0 %v1715
    %2650 = vmatprep.subr.bf16.mxu0 0
    %2651 = vmatpush1.bf16.msra.mxu0 %v1722
    %2652 = vmatprep.subr.bf16.mxu0 0
    %2653 = vmatpush1.bf16.msra.mxu0 %v1729
    %2654 = vmatprep.subr.bf16.mxu0 0
    %2655 = vmatpush1.bf16.msra.mxu0 %v1736
    %2656 = vmatprep.subr.bf16.mxu0 0
    %2657 = vmatpush1.bf16.msra.mxu0 %v1743
    %2658 = vmatprep.subr.bf16.mxu0 0
    %2659 = vmatpush1.bf16.msra.mxu0 %v1750
    %2660 = vmatprep.subr.bf16.mxu0 0
    %2661 = vmatpush1.bf16.msra.mxu0 %v1757
    %2662 = vmatprep.subr.bf16.mxu0 0
    %2663 = vmatpush1.bf16.msra.mxu0 %v1764
    %2664 = vmatprep.subr.bf16.mxu0 0
    %2665 = vmatpush1.bf16.msra.mxu0 %v1771
    %2666 = vmatprep.subr.bf16.mxu0 0
    %2667 = vmatpush1.bf16.msra.mxu0 %v1778
    %2668 = vmatprep.mubr.bf16.mxu0 %v75
    %2669 = vmatmul.mubr.bf16.gmra.mrb[0].mxu0 %v74
    %v2670 = vpop.f32.mrb[0].mxu0
    %v2671 = vadd.f32 %v2631, %v2670
    %v2672 = vpop.f32.mrb[0].mxu0
    %v2673 = vpop.f32.mrb[0].mxu0
    %v2674 = vpop.f32.mrb[0].mxu0
    %2675 = vdwg.mxu0
    %2676 = vmatprep.subr.bf16.mxu0 0
    %2677 = vmatpush1.bf16.msra.mxu0 %v1785
    %2678 = vmatprep.subr.bf16.mxu0 0
    %2679 = vmatpush1.bf16.msra.mxu0 %v1792
    %2680 = vmatprep.subr.bf16.mxu0 0
    %2681 = vmatpush1.bf16.msra.mxu0 %v1799
    %2682 = vmatprep.subr.bf16.mxu0 0
    %2683 = vmatpush1.bf16.msra.mxu0 %v1806
    %2684 = vmatprep.subr.bf16.mxu0 0
    %2685 = vmatpush1.bf16.msra.mxu0 %v1813
    %2686 = vmatprep.subr.bf16.mxu0 0
    %2687 = vmatpush1.bf16.msra.mxu0 %v1820
    %2688 = vmatprep.subr.bf16.mxu0 0
    %2689 = vmatpush1.bf16.msra.mxu0 %v1827
    %2690 = vmatprep.subr.bf16.mxu0 0
    %2691 = vmatpush1.bf16.msra.mxu0 %v1834
    %2692 = vmatprep.subr.bf16.mxu0 0
    %2693 = vmatpush1.bf16.msra.mxu0 %v1841
    %2694 = vmatprep.subr.bf16.mxu0 0
    %2695 = vmatpush1.bf16.msra.mxu0 %v1848
    %2696 = vmatprep.subr.bf16.mxu0 0
    %2697 = vmatpush1.bf16.msra.mxu0 %v1855
    %2698 = vmatprep.subr.bf16.mxu0 0
    %2699 = vmatpush1.bf16.msra.mxu0 %v1862
    %2700 = vmatprep.subr.bf16.mxu0 0
    %2701 = vmatpush1.bf16.msra.mxu0 %v1869
    %2702 = vmatprep.subr.bf16.mxu0 0
    %2703 = vmatpush1.bf16.msra.mxu0 %v1876
    %2704 = vmatprep.subr.bf16.mxu0 0
    %2705 = vmatpush1.bf16.msra.mxu0 %v1883
    %2706 = vmatprep.subr.bf16.mxu0 0
    %2707 = vmatpush1.bf16.msra.mxu0 %v1890
    %2708 = vmatprep.mubr.bf16.mxu0 %v77
    %2709 = vmatmul.mubr.bf16.gmra.mrb[0].mxu0 %v76
    %v2710 = vpop.f32.mrb[0].mxu0
    %v2711 = vadd.f32 %v2671, %v2710
    %v2712 = vpop.f32.mrb[0].mxu0
    %v2713 = vpop.f32.mrb[0].mxu0
    %v2714 = vpop.f32.mrb[0].mxu0
    %2715 = vdwg.mxu0
    %v2716 = vmax.f32 %v2344, 0.0
    %v2717 = vmax.f32 %v2346, 0.0
    %v2718 = vmax.f32 %v2467, 0.0
    %v2719 = vmax.f32 %v2469, 0.0
    %v2720 = vmax.f32 %v2590, 0.0
    %v2721 = vmax.f32 %v2592, 0.0
    %v2722 = vmax.f32 %v2711, 0.0
    %v2723 = vpack.c.bf16 %v2716, %v2716
    %v2724 = vpack.c.bf16 %v2717, %v2717
    %v2725 = vpack.c.bf16 %v2718, %v2718
    %v2726 = vpack.c.bf16 %v2719, %v2719
    %v2727 = vpack.c.bf16 %v2720, %v2720
    %v2728 = vpack.c.bf16 %v2721, %v2721
    %v2729 = vpack.c.bf16 %v2722, %v2722
    %v2730 = vld [vmem:[%s4] sm:$0xff]
    %v2731 = vld [vmem:[%s4 + $0x8] sm:$0xff]
    %v2732 = vld [vmem:[%s4 + $0x10] sm:$0xff]
    %v2733 = vld [vmem:[%s4 + $0x18] sm:$0xf]
    %v2734 = vld [vmem:[%s4 + $0x1c] sm:$0xff]
    %v2735 = vld [vmem:[%s4 + $0x24] sm:$0xff]
    %v2736 = vld [vmem:[%s4 + $0x2c] sm:$0xff]
    %v2737 = vld [vmem:[%s4 + $0x34] sm:$0xf]
    %v2738 = vld [vmem:[%s4 + $0x38] sm:$0xff]
    %v2739 = vld [vmem:[%s4 + $0x40] sm:$0xff]
    %v2740 = vld [vmem:[%s4 + $0x48] sm:$0xff]
    %v2741 = vld [vmem:[%s4 + $0x50] sm:$0xf]
    %v2742 = vld [vmem:[%s4 + $0x54] sm:$0xff]
    %v2743 = vld [vmem:[%s4 + $0x5c] sm:$0xff]
    %v2744 = vld [vmem:[%s4 + $0x64] sm:$0xff]
    %v2745 = vld [vmem:[%s4 + $0x6c] sm:$0xf]
    %v2746 = vld [vmem:[%s4 + $0x70] sm:$0xff]
    %v2747 = vld [vmem:[%s4 + $0x78] sm:$0xff]
    %v2748 = vld [vmem:[%s4 + $0x80] sm:$0xff]
    %v2749 = vld [vmem:[%s4 + $0x88] sm:$0xf]
    %v2750 = vld [vmem:[%s4 + $0x8c] sm:$0xff]
    %v2751 = vld [vmem:[%s4 + $0x94] sm:$0xff]
    %v2752 = vld [vmem:[%s4 + $0x9c] sm:$0xff]
    %v2753 = vld [vmem:[%s4 + $0xa4] sm:$0xf]
    %v2754 = vld [vmem:[%s4 + $0xa8] sm:$0xff]
    %v2755 = vld [vmem:[%s4 + $0xb0] sm:$0xff]
    %v2756 = vld [vmem:[%s4 + $0xb8] sm:$0xff]
    %v2757 = vld [vmem:[%s4 + $0xc0] sm:$0xf]
    %v2758 = vld [vmem:[%s4 + $0xc4] sm:$0xff]
    %v2759 = vld [vmem:[%s4 + $0xcc] sm:$0xff]
    %v2760 = vld [vmem:[%s4 + $0xd4] sm:$0xff]
    %v2761 = vld [vmem:[%s4 + $0xdc] sm:$0xf]
    %v2762 = vld [vmem:[%s4 + $0xe0] sm:$0xff]
    %v2763 = vld [vmem:[%s4 + $0xe8] sm:$0xff]
    %v2764 = vld [vmem:[%s4 + $0xf0] sm:$0xff]
    %v2765 = vld [vmem:[%s4 + $0xf8] sm:$0xf]
    %v2766 = vld [vmem:[%s4 + $0xfc] sm:$0xff]
    %v2767 = vld [vmem:[%s4 + $0x104] sm:$0xff]
    %v2768 = vld [vmem:[%s4 + $0x10c] sm:$0xff]
    %v2769 = vld [vmem:[%s4 + $0x114] sm:$0xf]
    %v2770 = vld [vmem:[%s4 + $0x118] sm:$0xff]
    %v2771 = vld [vmem:[%s4 + $0x120] sm:$0xff]
    %v2772 = vld [vmem:[%s4 + $0x128] sm:$0xff]
    %v2773 = vld [vmem:[%s4 + $0x130] sm:$0xf]
    %v2774 = vld [vmem:[%s4 + $0x134] sm:$0xff]
    %v2775 = vld [vmem:[%s4 + $0x13c] sm:$0xff]
    %v2776 = vld [vmem:[%s4 + $0x144] sm:$0xff]
    %v2777 = vld [vmem:[%s4 + $0x14c] sm:$0xf]
    %v2778 = vld [vmem:[%s4 + $0x150] sm:$0xff]
    %v2779 = vld [vmem:[%s4 + $0x158] sm:$0xff]
    %v2780 = vld [vmem:[%s4 + $0x160] sm:$0xff]
    %v2781 = vld [vmem:[%s4 + $0x168] sm:$0xf]
    %v2782 = vld [vmem:[%s4 + $0x16c] sm:$0xff]
    %v2783 = vld [vmem:[%s4 + $0x174] sm:$0xff]
    %v2784 = vld [vmem:[%s4 + $0x17c] sm:$0xff]
    %v2785 = vld [vmem:[%s4 + $0x184] sm:$0xf]
    %v2786 = vld [vmem:[%s4 + $0x188] sm:$0xff]
    %v2787 = vld [vmem:[%s4 + $0x190] sm:$0xff]
    %v2788 = vld [vmem:[%s4 + $0x198] sm:$0xff]
    %v2789 = vld [vmem:[%s4 + $0x1a0] sm:$0xf]
    %v2790 = vld [vmem:[%s4 + $0x1a4] sm:$0xff]
    %v2791 = vld [vmem:[%s4 + $0x1ac] sm:$0xff]
    %v2792 = vld [vmem:[%s4 + $0x1b4] sm:$0xff]
    %v2793 = vld [vmem:[%s4 + $0x1bc] sm:$0xf]
    %v2794 = vld [vmem:[%s4 + $0x1c0] sm:$0xff]
    %v2795 = vld [vmem:[%s4 + $0x1c8] sm:$0xff]
    %v2796 = vld [vmem:[%s4 + $0x1d0] sm:$0xff]
    %v2797 = vld [vmem:[%s4 + $0x1d8] sm:$0xf]
    %v2798 = vld [vmem:[%s4 + $0x1dc] sm:$0xff]
    %v2799 = vld [vmem:[%s4 + $0x1e4] sm:$0xff]
    %v2800 = vld [vmem:[%s4 + $0x1ec] sm:$0xff]
    %v2801 = vld [vmem:[%s4 + $0x1f4] sm:$0xf]
    %v2802 = vld [vmem:[%s4 + $0x1f8] sm:$0xff]
    %v2803 = vld [vmem:[%s4 + $0x200] sm:$0xff]
    %v2804 = vld [vmem:[%s4 + $0x208] sm:$0xff]
    %v2805 = vld [vmem:[%s4 + $0x210] sm:$0xf]
    %v2806 = vld [vmem:[%s4 + $0x214] sm:$0xff]
    %v2807 = vld [vmem:[%s4 + $0x21c] sm:$0xff]
    %v2808 = vld [vmem:[%s4 + $0x224] sm:$0xff]
    %v2809 = vld [vmem:[%s4 + $0x22c] sm:$0xf]
    %v2810 = vld [vmem:[%s4 + $0x230] sm:$0xff]
    %v2811 = vld [vmem:[%s4 + $0x238] sm:$0xff]
    %v2812 = vld [vmem:[%s4 + $0x240] sm:$0xff]
    %v2813 = vld [vmem:[%s4 + $0x248] sm:$0xf]
    %v2814 = vld [vmem:[%s4 + $0x24c] sm:$0xff]
    %v2815 = vld [vmem:[%s4 + $0x254] sm:$0xff]
    %v2816 = vld [vmem:[%s4 + $0x25c] sm:$0xff]
    %v2817 = vld [vmem:[%s4 + $0x264] sm:$0xf]
    %v2818 = vld [vmem:[%s4 + $0x268] sm:$0xff]
    %v2819 = vld [vmem:[%s4 + $0x270] sm:$0xff]
    %v2820 = vld [vmem:[%s4 + $0x278] sm:$0xff]
    %v2821 = vld [vmem:[%s4 + $0x280] sm:$0xf]
    %v2822 = vld [vmem:[%s4 + $0x284] sm:$0xff]
    %v2823 = vld [vmem:[%s4 + $0x28c] sm:$0xff]
    %v2824 = vld [vmem:[%s4 + $0x294] sm:$0xff]
    %v2825 = vld [vmem:[%s4 + $0x29c] sm:$0xf]
    %v2826 = vld [vmem:[%s4 + $0x2a0] sm:$0xff]
    %v2827 = vld [vmem:[%s4 + $0x2a8] sm:$0xff]
    %v2828 = vld [vmem:[%s4 + $0x2b0] sm:$0xff]
    %v2829 = vld [vmem:[%s4 + $0x2b8] sm:$0xf]
    %v2830 = vld [vmem:[%s4 + $0x2bc] sm:$0xff]
    %v2831 = vld [vmem:[%s4 + $0x2c4] sm:$0xff]
    %v2832 = vld [vmem:[%s4 + $0x2cc] sm:$0xff]
    %v2833 = vld [vmem:[%s4 + $0x2d4] sm:$0xf]
    %v2834 = vld [vmem:[%s4 + $0x2d8] sm:$0xff]
    %v2835 = vld [vmem:[%s4 + $0x2e0] sm:$0xff]
    %v2836 = vld [vmem:[%s4 + $0x2e8] sm:$0xff]
    %v2837 = vld [vmem:[%s4 + $0x2f0] sm:$0xf]
    %v2838 = vld [vmem:[%s4 + $0x2f4] sm:$0xff]
    %v2839 = vld [vmem:[%s4 + $0x2fc] sm:$0xff]
    %v2840 = vld [vmem:[%s4 + $0x304] sm:$0xff]
    %v2841 = vld [vmem:[%s4 + $0x30c] sm:$0xf]
    %v2842 = vld [vmem:[%s4 + $0x310] sm:$0xff]
    %v2843 = vld [vmem:[%s4 + $0x318] sm:$0xff]
    %v2844 = vld [vmem:[%s4 + $0x320] sm:$0xff]
    %v2845 = vld [vmem:[%s4 + $0x328] sm:$0xf]
    %v2846 = vld [vmem:[%s4 + $0x32c] sm:$0xff]
    %v2847 = vld [vmem:[%s4 + $0x334] sm:$0xff]
    %v2848 = vld [vmem:[%s4 + $0x33c] sm:$0xff]
    %v2849 = vld [vmem:[%s4 + $0x344] sm:$0xf]
    %v2850 = vld [vmem:[%s4 + $0x348] sm:$0xff]
    %v2851 = vld [vmem:[%s4 + $0x350] sm:$0xff]
    %v2852 = vld [vmem:[%s4 + $0x358] sm:$0xff]
    %v2853 = vld [vmem:[%s4 + $0x360] sm:$0xf]
    %v2854 = vld [vmem:[%s4 + $0x364] sm:$0xff]
    %v2855 = vld [vmem:[%s4 + $0x36c] sm:$0xff]
    %v2856 = vld [vmem:[%s4 + $0x374] sm:$0xff]
    %v2857 = vld [vmem:[%s4 + $0x37c] sm:$0xf]
    %v2858 = vld [vmem:[%s4 + $0x380] sm:$0xff]
    %v2859 = vld [vmem:[%s4 + $0x388] sm:$0xff]
    %v2860 = vld [vmem:[%s4 + $0x390] sm:$0xff]
    %v2861 = vld [vmem:[%s4 + $0x398] sm:$0xf]
    %v2862 = vld [vmem:[%s4 + $0x39c] sm:$0xff]
    %v2863 = vld [vmem:[%s4 + $0x3a4] sm:$0xff]
    %v2864 = vld [vmem:[%s4 + $0x3ac] sm:$0xff]
    %v2865 = vld [vmem:[%s4 + $0x3b4] sm:$0xf]
    %v2866 = vld [vmem:[%s4 + $0x3b8] sm:$0xff]
    %v2867 = vld [vmem:[%s4 + $0x3c0] sm:$0xff]
    %v2868 = vld [vmem:[%s4 + $0x3c8] sm:$0xff]
    %v2869 = vld [vmem:[%s4 + $0x3d0] sm:$0xf]
    %v2870 = vld [vmem:[%s4 + $0x3d4] sm:$0xff]
    %v2871 = vld [vmem:[%s4 + $0x3dc] sm:$0xff]
    %v2872 = vld [vmem:[%s4 + $0x3e4] sm:$0xff]
    %v2873 = vld [vmem:[%s4 + $0x3ec] sm:$0xf]
    %v2874 = vld [vmem:[%s4 + $0x3f0] sm:$0xff]
    %v2875 = vld [vmem:[%s4 + $0x3f8] sm:$0xff]
    %v2876 = vld [vmem:[%s4 + $0x400] sm:$0xff]
    %v2877 = vld [vmem:[%s4 + $0x408] sm:$0xf]
    %v2878 = vld [vmem:[%s4 + $0x40c] sm:$0xff]
    %v2879 = vld [vmem:[%s4 + $0x414] sm:$0xff]
    %v2880 = vld [vmem:[%s4 + $0x41c] sm:$0xff]
    %v2881 = vld [vmem:[%s4 + $0x424] sm:$0xf]
    %v2882 = vld [vmem:[%s4 + $0x428] sm:$0xff]
    %v2883 = vld [vmem:[%s4 + $0x430] sm:$0xff]
    %v2884 = vld [vmem:[%s4 + $0x438] sm:$0xff]
    %v2885 = vld [vmem:[%s4 + $0x440] sm:$0xf]
    %v2886 = vld [vmem:[%s4 + $0x444] sm:$0xff]
    %v2887 = vld [vmem:[%s4 + $0x44c] sm:$0xff]
    %v2888 = vld [vmem:[%s4 + $0x454] sm:$0xff]
    %v2889 = vld [vmem:[%s4 + $0x45c] sm:$0xf]
    %v2890 = vld [vmem:[%s4 + $0x460] sm:$0xff]
    %v2891 = vld [vmem:[%s4 + $0x468] sm:$0xff]
    %v2892 = vld [vmem:[%s4 + $0x470] sm:$0xff]
    %v2893 = vld [vmem:[%s4 + $0x478] sm:$0xf]
    %v2894 = vld [vmem:[%s4 + $0x47c] sm:$0xff]
    %v2895 = vld [vmem:[%s4 + $0x484] sm:$0xff]
    %v2896 = vld [vmem:[%s4 + $0x48c] sm:$0xff]
    %v2897 = vld [vmem:[%s4 + $0x494] sm:$0xf]
    %v2898 = vld [vmem:[%s4 + $0x498] sm:$0xff]
    %v2899 = vld [vmem:[%s4 + $0x4a0] sm:$0xff]
    %v2900 = vld [vmem:[%s4 + $0x4a8] sm:$0xff]
    %v2901 = vld [vmem:[%s4 + $0x4b0] sm:$0xf]
    %v2902 = vld [vmem:[%s4 + $0x4b4] sm:$0xff]
    %v2903 = vld [vmem:[%s4 + $0x4bc] sm:$0xff]
    %v2904 = vld [vmem:[%s4 + $0x4c4] sm:$0xff]
    %v2905 = vld [vmem:[%s4 + $0x4cc] sm:$0xf]
    %v2906 = vld [vmem:[%s4 + $0x4d0] sm:$0xff]
    %v2907 = vld [vmem:[%s4 + $0x4d8] sm:$0xff]
    %v2908 = vld [vmem:[%s4 + $0x4e0] sm:$0xff]
    %v2909 = vld [vmem:[%s4 + $0x4e8] sm:$0xf]
    %v2910 = vld [vmem:[%s4 + $0x4ec] sm:$0xff]
    %v2911 = vld [vmem:[%s4 + $0x4f4] sm:$0xff]
    %v2912 = vld [vmem:[%s4 + $0x4fc] sm:$0xff]
    %v2913 = vld [vmem:[%s4 + $0x504] sm:$0xf]
    %v2914 = vld [vmem:[%s4 + $0x508] sm:$0xff]
    %v2915 = vld [vmem:[%s4 + $0x510] sm:$0xff]
    %v2916 = vld [vmem:[%s4 + $0x518] sm:$0xff]
    %v2917 = vld [vmem:[%s4 + $0x520] sm:$0xf]
    %v2918 = vld [vmem:[%s4 + $0x524] sm:$0xff]
    %v2919 = vld [vmem:[%s4 + $0x52c] sm:$0xff]
    %v2920 = vld [vmem:[%s4 + $0x534] sm:$0xff]
    %v2921 = vld [vmem:[%s4 + $0x53c] sm:$0xf]
    %v2922 = vld [vmem:[%s4 + $0x540] sm:$0xff]
    %v2923 = vld [vmem:[%s4 + $0x548] sm:$0xff]
    %v2924 = vld [vmem:[%s4 + $0x550] sm:$0xff]
    %v2925 = vld [vmem:[%s4 + $0x558] sm:$0xf]
    %v2926 = vld [vmem:[%s4 + $0x55c] sm:$0xff]
    %v2927 = vld [vmem:[%s4 + $0x564] sm:$0xff]
    %v2928 = vld [vmem:[%s4 + $0x56c] sm:$0xff]
    %v2929 = vld [vmem:[%s4 + $0x574] sm:$0xf]
    %v2930 = vld [vmem:[%s4 + $0x578] sm:$0xff]
    %v2931 = vld [vmem:[%s4 + $0x580] sm:$0xff]
    %v2932 = vld [vmem:[%s4 + $0x588] sm:$0xff]
    %v2933 = vld [vmem:[%s4 + $0x590] sm:$0xf]
    %v2934 = vld [vmem:[%s4 + $0x594] sm:$0xff]
    %v2935 = vld [vmem:[%s4 + $0x59c] sm:$0xff]
    %v2936 = vld [vmem:[%s4 + $0x5a4] sm:$0xff]
    %v2937 = vld [vmem:[%s4 + $0x5ac] sm:$0xf]
    %v2938 = vld [vmem:[%s4 + $0x5b0] sm:$0xff]
    %v2939 = vld [vmem:[%s4 + $0x5b8] sm:$0xff]
    %v2940 = vld [vmem:[%s4 + $0x5c0] sm:$0xff]
    %v2941 = vld [vmem:[%s4 + $0x5c8] sm:$0xf]
    %v2942 = vld [vmem:[%s4 + $0x5cc] sm:$0xff]
    %v2943 = vld [vmem:[%s4 + $0x5d4] sm:$0xff]
    %v2944 = vld [vmem:[%s4 + $0x5dc] sm:$0xff]
    %v2945 = vld [vmem:[%s4 + $0x5e4] sm:$0xf]
    %v2946 = vld [vmem:[%s4 + $0x5e8] sm:$0xff]
    %v2947 = vld [vmem:[%s4 + $0x5f0] sm:$0xff]
    %v2948 = vld [vmem:[%s4 + $0x5f8] sm:$0xff]
    %v2949 = vld [vmem:[%s4 + $0x600] sm:$0xf]
    %v2950 = vld [vmem:[%s4 + $0x604] sm:$0xff]
    %v2951 = vld [vmem:[%s4 + $0x60c] sm:$0xff]
    %v2952 = vld [vmem:[%s4 + $0x614] sm:$0xff]
    %v2953 = vld [vmem:[%s4 + $0x61c] sm:$0xf]
    %v2954 = vld [vmem:[%s4 + $0x620] sm:$0xff]
    %v2955 = vld [vmem:[%s4 + $0x628] sm:$0xff]
    %v2956 = vld [vmem:[%s4 + $0x630] sm:$0xff]
    %v2957 = vld [vmem:[%s4 + $0x638] sm:$0xf]
    %v2958 = vld [vmem:[%s4 + $0x63c] sm:$0xff]
    %v2959 = vld [vmem:[%s4 + $0x644] sm:$0xff]
    %v2960 = vld [vmem:[%s4 + $0x64c] sm:$0xff]
    %v2961 = vld [vmem:[%s4 + $0x654] sm:$0xf]
    %v2962 = vld [vmem:[%s4 + $0x658] sm:$0xff]
    %v2963 = vld [vmem:[%s4 + $0x660] sm:$0xff]
    %v2964 = vld [vmem:[%s4 + $0x668] sm:$0xff]
    %v2965 = vld [vmem:[%s4 + $0x670] sm:$0xf]
    %v2966 = vld [vmem:[%s4 + $0x674] sm:$0xff]
    %v2967 = vld [vmem:[%s4 + $0x67c] sm:$0xff]
    %v2968 = vld [vmem:[%s4 + $0x684] sm:$0xff]
    %v2969 = vld [vmem:[%s4 + $0x68c] sm:$0xf]
    %v2970 = vld [vmem:[%s4 + $0x690] sm:$0xff]
    %v2971 = vld [vmem:[%s4 + $0x698] sm:$0xff]
    %v2972 = vld [vmem:[%s4 + $0x6a0] sm:$0xff]
    %v2973 = vld [vmem:[%s4 + $0x6a8] sm:$0xf]
    %v2974 = vld [vmem:[%s4 + $0x6ac] sm:$0xff]
    %v2975 = vld [vmem:[%s4 + $0x6b4] sm:$0xff]
    %v2976 = vld [vmem:[%s4 + $0x6bc] sm:$0xff]
    %v2977 = vld [vmem:[%s4 + $0x6c4] sm:$0xf]
    %v2978 = vld [vmem:[%s4 + $0x6c8] sm:$0xff]
    %v2979 = vld [vmem:[%s4 + $0x6d0] sm:$0xff]
    %v2980 = vld [vmem:[%s4 + $0x6d8] sm:$0xff]
    %v2981 = vld [vmem:[%s4 + $0x6e0] sm:$0xf]
    %v2982 = vld [vmem:[%s4 + $0x6e4] sm:$0xff]
    %v2983 = vld [vmem:[%s4 + $0x6ec] sm:$0xff]
    %v2984 = vld [vmem:[%s4 + $0x6f4] sm:$0xff]
    %v2985 = vld [vmem:[%s4 + $0x6fc] sm:$0xf]
    %v2986 = vld [vmem:[%s4 + $0x700] sm:$0xff]
    %v2987 = vld [vmem:[%s4 + $0x708] sm:$0xff]
    %v2988 = vld [vmem:[%s4 + $0x710] sm:$0xff]
    %v2989 = vld [vmem:[%s4 + $0x718] sm:$0xf]
    %v2990 = vld [vmem:[%s4 + $0x71c] sm:$0xff]
    %v2991 = vld [vmem:[%s4 + $0x724] sm:$0xff]
    %v2992 = vld [vmem:[%s4 + $0x72c] sm:$0xff]
    %v2993 = vld [vmem:[%s4 + $0x734] sm:$0xf]
    %v2994 = vld [vmem:[%s4 + $0x738] sm:$0xff]
    %v2995 = vld [vmem:[%s4 + $0x740] sm:$0xff]
    %v2996 = vld [vmem:[%s4 + $0x748] sm:$0xff]
    %v2997 = vld [vmem:[%s4 + $0x750] sm:$0xf]
    %v2998 = vld [vmem:[%s4 + $0x754] sm:$0xff]
    %v2999 = vld [vmem:[%s4 + $0x75c] sm:$0xff]
    %v3000 = vld [vmem:[%s4 + $0x764] sm:$0xff]
    %v3001 = vld [vmem:[%s4 + $0x76c] sm:$0xf]
    %v3002 = vld [vmem:[%s4 + $0x770] sm:$0xff]
    %v3003 = vld [vmem:[%s4 + $0x778] sm:$0xff]
    %v3004 = vld [vmem:[%s4 + $0x780] sm:$0xff]
    %v3005 = vld [vmem:[%s4 + $0x788] sm:$0xf]
    %v3006 = vld [vmem:[%s4 + $0x78c] sm:$0xff]
    %v3007 = vld [vmem:[%s4 + $0x794] sm:$0xff]
    %v3008 = vld [vmem:[%s4 + $0x79c] sm:$0xff]
    %v3009 = vld [vmem:[%s4 + $0x7a4] sm:$0xf]
    %v3010 = vld [vmem:[%s4 + $0x7a8] sm:$0xff]
    %v3011 = vld [vmem:[%s4 + $0x7b0] sm:$0xff]
    %v3012 = vld [vmem:[%s4 + $0x7b8] sm:$0xff]
    %v3013 = vld [vmem:[%s4 + $0x7c0] sm:$0xf]
    %v3014 = vld [vmem:[%s4 + $0x7c4] sm:$0xff]
    %v3015 = vld [vmem:[%s4 + $0x7cc] sm:$0xff]
    %v3016 = vld [vmem:[%s4 + $0x7d4] sm:$0xff]
    %v3017 = vld [vmem:[%s4 + $0x7dc] sm:$0xf]
    %v3018 = vld [vmem:[%s4 + $0x7e0] sm:$0xff]
    %v3019 = vld [vmem:[%s4 + $0x7e8] sm:$0xff]
    %v3020 = vld [vmem:[%s4 + $0x7f0] sm:$0xff]
    %v3021 = vld [vmem:[%s4 + $0x7f8] sm:$0xf]
    %v3022 = vld [vmem:[%s4 + $0x7fc] sm:$0xff]
    %v3023 = vld [vmem:[%s4 + $0x804] sm:$0xff]
    %v3024 = vld [vmem:[%s4 + $0x80c] sm:$0xff]
    %v3025 = vld [vmem:[%s4 + $0x814] sm:$0xf]
    %v3026 = vld [vmem:[%s4 + $0x818] sm:$0xff]
    %v3027 = vld [vmem:[%s4 + $0x820] sm:$0xff]
    %v3028 = vld [vmem:[%s4 + $0x828] sm:$0xff]
    %v3029 = vld [vmem:[%s4 + $0x830] sm:$0xf]
    %v3030 = vld [vmem:[%s4 + $0x834] sm:$0xff]
    %v3031 = vld [vmem:[%s4 + $0x83c] sm:$0xff]
    %v3032 = vld [vmem:[%s4 + $0x844] sm:$0xff]
    %v3033 = vld [vmem:[%s4 + $0x84c] sm:$0xf]
    %v3034 = vld [vmem:[%s4 + $0x850] sm:$0xff]
    %v3035 = vld [vmem:[%s4 + $0x858] sm:$0xff]
    %v3036 = vld [vmem:[%s4 + $0x860] sm:$0xff]
    %v3037 = vld [vmem:[%s4 + $0x868] sm:$0xf]
    %v3038 = vld [vmem:[%s4 + $0x86c] sm:$0xff]
    %v3039 = vld [vmem:[%s4 + $0x874] sm:$0xff]
    %v3040 = vld [vmem:[%s4 + $0x87c] sm:$0xff]
    %v3041 = vld [vmem:[%s4 + $0x884] sm:$0xf]
    %v3042 = vld [vmem:[%s4 + $0x888] sm:$0xff]
    %v3043 = vld [vmem:[%s4 + $0x890] sm:$0xff]
    %v3044 = vld [vmem:[%s4 + $0x898] sm:$0xff]
    %v3045 = vld [vmem:[%s4 + $0x8a0] sm:$0xf]
    %v3046 = vld [vmem:[%s4 + $0x8a4] sm:$0xff]
    %v3047 = vld [vmem:[%s4 + $0x8ac] sm:$0xff]
    %v3048 = vld [vmem:[%s4 + $0x8b4] sm:$0xff]
    %v3049 = vld [vmem:[%s4 + $0x8bc] sm:$0xf]
    %v3050 = vld [vmem:[%s4 + $0x8c0] sm:$0xff]
    %v3051 = vld [vmem:[%s4 + $0x8c8] sm:$0xff]
    %v3052 = vld [vmem:[%s4 + $0x8d0] sm:$0xff]
    %v3053 = vld [vmem:[%s4 + $0x8d8] sm:$0xf]
    %v3054 = vld [vmem:[%s4 + $0x8dc] sm:$0xff]
    %v3055 = vld [vmem:[%s4 + $0x8e4] sm:$0xff]
    %v3056 = vld [vmem:[%s4 + $0x8ec] sm:$0xff]
    %v3057 = vld [vmem:[%s4 + $0x8f4] sm:$0xf]
    %v3058 = vld [vmem:[%s4 + $0x8f8] sm:$0xff]
    %v3059 = vld [vmem:[%s4 + $0x900] sm:$0xff]
    %v3060 = vld [vmem:[%s4 + $0x908] sm:$0xff]
    %v3061 = vld [vmem:[%s4 + $0x910] sm:$0xf]
    %v3062 = vld [vmem:[%s4 + $0x914] sm:$0xff]
    %v3063 = vld [vmem:[%s4 + $0x91c] sm:$0xff]
    %v3064 = vld [vmem:[%s4 + $0x924] sm:$0xff]
    %v3065 = vld [vmem:[%s4 + $0x92c] sm:$0xf]
    %v3066 = vld [vmem:[%s4 + $0x930] sm:$0xff]
    %v3067 = vld [vmem:[%s4 + $0x938] sm:$0xff]
    %v3068 = vld [vmem:[%s4 + $0x940] sm:$0xff]
    %v3069 = vld [vmem:[%s4 + $0x948] sm:$0xf]
    %v3070 = vld [vmem:[%s4 + $0x94c] sm:$0xff]
    %v3071 = vld [vmem:[%s4 + $0x954] sm:$0xff]
    %v3072 = vld [vmem:[%s4 + $0x95c] sm:$0xff]
    %v3073 = vld [vmem:[%s4 + $0x964] sm:$0xf]
    %v3074 = vld [vmem:[%s4 + $0x968] sm:$0xff]
    %v3075 = vld [vmem:[%s4 + $0x970] sm:$0xff]
    %v3076 = vld [vmem:[%s4 + $0x978] sm:$0xff]
    %v3077 = vld [vmem:[%s4 + $0x980] sm:$0xf]
    %v3078 = vld [vmem:[%s4 + $0x984] sm:$0xff]
    %v3079 = vld [vmem:[%s4 + $0x98c] sm:$0xff]
    %v3080 = vld [vmem:[%s4 + $0x994] sm:$0xff]
    %v3081 = vld [vmem:[%s4 + $0x99c] sm:$0xf]
    %v3082 = vld [vmem:[%s4 + $0x9a0] sm:$0xff]
    %v3083 = vld [vmem:[%s4 + $0x9a8] sm:$0xff]
    %v3084 = vld [vmem:[%s4 + $0x9b0] sm:$0xff]
    %v3085 = vld [vmem:[%s4 + $0x9b8] sm:$0xf]
    %v3086 = vld [vmem:[%s4 + $0x9bc] sm:$0xff]
    %v3087 = vld [vmem:[%s4 + $0x9c4] sm:$0xff]
    %v3088 = vld [vmem:[%s4 + $0x9cc] sm:$0xff]
    %v3089 = vld [vmem:[%s4 + $0x9d4] sm:$0xf]
    %v3090 = vld [vmem:[%s4 + $0x9d8] sm:$0xff]
    %v3091 = vld [vmem:[%s4 + $0x9e0] sm:$0xff]
    %v3092 = vld [vmem:[%s4 + $0x9e8] sm:$0xff]
    %v3093 = vld [vmem:[%s4 + $0x9f0] sm:$0xf]
    %v3094 = vld [vmem:[%s4 + $0x9f4] sm:$0xff]
    %v3095 = vld [vmem:[%s4 + $0x9fc] sm:$0xff]
    %v3096 = vld [vmem:[%s4 + $0xa04] sm:$0xff]
    %v3097 = vld [vmem:[%s4 + $0xa0c] sm:$0xf]
    %v3098 = vld [vmem:[%s4 + $0xa10] sm:$0xff]
    %v3099 = vld [vmem:[%s4 + $0xa18] sm:$0xff]
    %v3100 = vld [vmem:[%s4 + $0xa20] sm:$0xff]
    %v3101 = vld [vmem:[%s4 + $0xa28] sm:$0xf]
    %v3102 = vld [vmem:[%s4 + $0xa2c] sm:$0xff]
    %v3103 = vld [vmem:[%s4 + $0xa34] sm:$0xff]
    %v3104 = vld [vmem:[%s4 + $0xa3c] sm:$0xff]
    %v3105 = vld [vmem:[%s4 + $0xa44] sm:$0xf]
    %v3106 = vld [vmem:[%s4 + $0xa48] sm:$0xff]
    %v3107 = vld [vmem:[%s4 + $0xa50] sm:$0xff]
    %v3108 = vld [vmem:[%s4 + $0xa58] sm:$0xff]
    %v3109 = vld [vmem:[%s4 + $0xa60] sm:$0xf]
    %v3110 = vld [vmem:[%s4 + $0xa64] sm:$0xff]
    %v3111 = vld [vmem:[%s4 + $0xa6c] sm:$0xff]
    %v3112 = vld [vmem:[%s4 + $0xa74] sm:$0xff]
    %v3113 = vld [vmem:[%s4 + $0xa7c] sm:$0xf]
    %v3114 = vld [vmem:[%s4 + $0xa80] sm:$0xff]
    %v3115 = vld [vmem:[%s4 + $0xa88] sm:$0xff]
    %v3116 = vld [vmem:[%s4 + $0xa90] sm:$0xff]
    %v3117 = vld [vmem:[%s4 + $0xa98] sm:$0xf]
    %v3118 = vld [vmem:[%s4 + $0xa9c] sm:$0xff]
    %v3119 = vld [vmem:[%s4 + $0xaa4] sm:$0xff]
    %v3120 = vld [vmem:[%s4 + $0xaac] sm:$0xff]
    %v3121 = vld [vmem:[%s4 + $0xab4] sm:$0xf]
    %v3122 = vld [vmem:[%s5] sm:$0x7f]
    %v3124 = vlaneseq
    %v3125 = vshrl.u32 %v3124, 7
    %v3126 = vsub.s32 0, %v3125
    %v3127 = vrot.slane %v3122, %v3126
    %v3128 = vlaneseq
    %v3129 = vshrl.u32 %v3128, 7
    %v3130 = vsub.s32 1, %v3129
    %v3131 = vrot.slane %v3122, %v3130
    %v3132 = vlaneseq
    %v3133 = vshrl.u32 %v3132, 7
    %v3134 = vsub.s32 2, %v3133
    %v3135 = vrot.slane %v3122, %v3134
    %v3136 = vlaneseq
    %v3137 = vshrl.u32 %v3136, 7
    %v3138 = vsub.s32 3, %v3137
    %v3139 = vrot.slane %v3122, %v3138
    %v3140 = vlaneseq
    %v3141 = vshrl.u32 %v3140, 7
    %v3142 = vsub.s32 4, %v3141
    %v3143 = vrot.slane %v3122, %v3142
    %v3144 = vlaneseq
    %v3145 = vshrl.u32 %v3144, 7
    %v3146 = vsub.s32 5, %v3145
    %v3147 = vrot.slane %v3122, %v3146
    %v3148 = vlaneseq
    %v3149 = vshrl.u32 %v3148, 7
    %v3150 = vsub.s32 6, %v3149
    %v3151 = vrot.slane %v3122, %v3150
    %v3551 = vunpack.c.l.b16 %v2730
    %v3552 = vunpack.c.h.b16 %v2730
    %v3553 = vunpack.c.l.b16 %v2731
    %v3554 = vunpack.c.h.b16 %v2731
    %v3555 = vunpack.c.l.b16 %v2732
    %v3556 = vunpack.c.h.b16 %v2732
    %v3557 = vunpack.c.l.b16 %v2733
    %v3558 = vunpack.c.l.b16 %v2734
    %v3559 = vunpack.c.h.b16 %v2734
    %v3560 = vunpack.c.l.b16 %v2735
    %v3561 = vunpack.c.h.b16 %v2735
    %v3562 = vunpack.c.l.b16 %v2736
    %v3563 = vunpack.c.h.b16 %v2736
    %v3564 = vunpack.c.l.b16 %v2737
    %v3565 = vunpack.c.l.b16 %v2738
    %v3566 = vunpack.c.h.b16 %v2738
    %v3567 = vunpack.c.l.b16 %v2739
    %v3568 = vunpack.c.h.b16 %v2739
    %v3569 = vunpack.c.l.b16 %v2740
    %v3570 = vunpack.c.h.b16 %v2740
    %v3571 = vunpack.c.l.b16 %v2741
    %v3572 = vunpack.c.l.b16 %v2742
    %v3573 = vunpack.c.h.b16 %v2742
    %v3574 = vunpack.c.l.b16 %v2743
    %v3575 = vunpack.c.h.b16 %v2743
    %v3576 = vunpack.c.l.b16 %v2744
    %v3577 = vunpack.c.h.b16 %v2744
    %v3578 = vunpack.c.l.b16 %v2745
    %v3579 = vunpack.c.l.b16 %v2746
    %v3580 = vunpack.c.h.b16 %v2746
    %v3581 = vunpack.c.l.b16 %v2747
    %v3582 = vunpack.c.h.b16 %v2747
    %v3583 = vunpack.c.l.b16 %v2748
    %v3584 = vunpack.c.h.b16 %v2748
    %v3585 = vunpack.c.l.b16 %v2749
    %v3586 = vunpack.c.l.b16 %v2750
    %v3587 = vunpack.c.h.b16 %v2750
    %v3588 = vunpack.c.l.b16 %v2751
    %v3589 = vunpack.c.h.b16 %v2751
    %v3590 = vunpack.c.l.b16 %v2752
    %v3591 = vunpack.c.h.b16 %v2752
    %v3592 = vunpack.c.l.b16 %v2753
    %v3593 = vunpack.c.l.b16 %v2754
    %v3594 = vunpack.c.h.b16 %v2754
    %v3595 = vunpack.c.l.b16 %v2755
    %v3596 = vunpack.c.h.b16 %v2755
    %v3597 = vunpack.c.l.b16 %v2756
    %v3598 = vunpack.c.h.b16 %v2756
    %v3599 = vunpack.c.l.b16 %v2757
    %v3600 = vunpack.c.l.b16 %v2758
    %v3601 = vunpack.c.h.b16 %v2758
    %v3602 = vunpack.c.l.b16 %v2759
    %v3603 = vunpack.c.h.b16 %v2759
    %v3604 = vunpack.c.l.b16 %v2760
    %v3605 = vunpack.c.h.b16 %v2760
    %v3606 = vunpack.c.l.b16 %v2761
    %v3607 = vunpack.c.l.b16 %v2762
    %v3608 = vunpack.c.h.b16 %v2762
    %v3609 = vunpack.c.l.b16 %v2763
    %v3610 = vunpack.c.h.b16 %v2763
    %v3611 = vunpack.c.l.b16 %v2764
    %v3612 = vunpack.c.h.b16 %v2764
    %v3613 = vunpack.c.l.b16 %v2765
    %v3614 = vunpack.c.l.b16 %v2766
    %v3615 = vunpack.c.h.b16 %v2766
    %v3616 = vunpack.c.l.b16 %v2767
    %v3617 = vunpack.c.h.b16 %v2767
    %v3618 = vunpack.c.l.b16 %v2768
    %v3619 = vunpack.c.h.b16 %v2768
    %v3620 = vunpack.c.l.b16 %v2769
    %v3621 = vunpack.c.l.b16 %v2770
    %v3622 = vunpack.c.h.b16 %v2770
    %v3623 = vunpack.c.l.b16 %v2771
    %v3624 = vunpack.c.h.b16 %v2771
    %v3625 = vunpack.c.l.b16 %v2772
    %v3626 = vunpack.c.h.b16 %v2772
    %v3627 = vunpack.c.l.b16 %v2773
    %v3628 = vunpack.c.l.b16 %v2774
    %v3629 = vunpack.c.h.b16 %v2774
    %v3630 = vunpack.c.l.b16 %v2775
    %v3631 = vunpack.c.h.b16 %v2775
    %v3632 = vunpack.c.l.b16 %v2776
    %v3633 = vunpack.c.h.b16 %v2776
    %v3634 = vunpack.c.l.b16 %v2777
    %v3635 = vunpack.c.l.b16 %v2778
    %v3636 = vunpack.c.h.b16 %v2778
    %v3637 = vunpack.c.l.b16 %v2779
    %v3638 = vunpack.c.h.b16 %v2779
    %v3639 = vunpack.c.l.b16 %v2780
    %v3640 = vunpack.c.h.b16 %v2780
    %v3641 = vunpack.c.l.b16 %v2781
    %v3642 = vunpack.c.l.b16 %v2782
    %v3643 = vunpack.c.h.b16 %v2782
    %v3644 = vunpack.c.l.b16 %v2783
    %v3645 = vunpack.c.h.b16 %v2783
    %v3646 = vunpack.c.l.b16 %v2784
    %v3647 = vunpack.c.h.b16 %v2784
    %v3648 = vunpack.c.l.b16 %v2785
    %v3649 = vunpack.c.l.b16 %v2786
    %v3650 = vunpack.c.h.b16 %v2786
    %v3651 = vunpack.c.l.b16 %v2787
    %v3652 = vunpack.c.h.b16 %v2787
    %v3653 = vunpack.c.l.b16 %v2788
    %v3654 = vunpack.c.h.b16 %v2788
    %v3655 = vunpack.c.l.b16 %v2789
    %v3656 = vunpack.c.l.b16 %v2790
    %v3657 = vunpack.c.h.b16 %v2790
    %v3658 = vunpack.c.l.b16 %v2791
    %v3659 = vunpack.c.h.b16 %v2791
    %v3660 = vunpack.c.l.b16 %v2792
    %v3661 = vunpack.c.h.b16 %v2792
    %v3662 = vunpack.c.l.b16 %v2793
    %v3663 = vunpack.c.l.b16 %v2794
    %v3664 = vunpack.c.h.b16 %v2794
    %v3665 = vunpack.c.l.b16 %v2795
    %v3666 = vunpack.c.h.b16 %v2795
    %v3667 = vunpack.c.l.b16 %v2796
    %v3668 = vunpack.c.h.b16 %v2796
    %v3669 = vunpack.c.l.b16 %v2797
    %v3670 = vunpack.c.l.b16 %v2798
    %v3671 = vunpack.c.h.b16 %v2798
    %v3672 = vunpack.c.l.b16 %v2799
    %v3673 = vunpack.c.h.b16 %v2799
    %v3674 = vunpack.c.l.b16 %v2800
    %v3675 = vunpack.c.h.b16 %v2800
    %v3676 = vunpack.c.l.b16 %v2801
    %v3677 = vunpack.c.l.b16 %v2802
    %v3678 = vunpack.c.h.b16 %v2802
    %v3679 = vunpack.c.l.b16 %v2803
    %v3680 = vunpack.c.h.b16 %v2803
    %v3681 = vunpack.c.l.b16 %v2804
    %v3682 = vunpack.c.h.b16 %v2804
    %v3683 = vunpack.c.l.b16 %v2805
    %v3684 = vunpack.c.l.b16 %v2806
    %v3685 = vunpack.c.h.b16 %v2806
    %v3686 = vunpack.c.l.b16 %v2807
    %v3687 = vunpack.c.h.b16 %v2807
    %v3688 = vunpack.c.l.b16 %v2808
    %v3689 = vunpack.c.h.b16 %v2808
    %v3690 = vunpack.c.l.b16 %v2809
    %v3691 = vunpack.c.l.b16 %v2810
    %v3692 = vunpack.c.h.b16 %v2810
    %v3693 = vunpack.c.l.b16 %v2811
    %v3694 = vunpack.c.h.b16 %v2811
    %v3695 = vunpack.c.l.b16 %v2812
    %v3696 = vunpack.c.h.b16 %v2812
    %v3697 = vunpack.c.l.b16 %v2813
    %v3698 = vunpack.c.l.b16 %v2814
    %v3699 = vunpack.c.h.b16 %v2814
    %v3700 = vunpack.c.l.b16 %v2815
    %v3701 = vunpack.c.h.b16 %v2815
    %v3702 = vunpack.c.l.b16 %v2816
    %v3703 = vunpack.c.h.b16 %v2816
    %v3704 = vunpack.c.l.b16 %v2817
    %v3705 = vunpack.c.l.b16 %v2818
    %v3706 = vunpack.c.h.b16 %v2818
    %v3707 = vunpack.c.l.b16 %v2819
    %v3708 = vunpack.c.h.b16 %v2819
    %v3709 = vunpack.c.l.b16 %v2820
    %v3710 = vunpack.c.h.b16 %v2820
    %v3711 = vunpack.c.l.b16 %v2821
    %v3712 = vunpack.c.l.b16 %v2822
    %v3713 = vunpack.c.h.b16 %v2822
    %v3714 = vunpack.c.l.b16 %v2823
    %v3715 = vunpack.c.h.b16 %v2823
    %v3716 = vunpack.c.l.b16 %v2824
    %v3717 = vunpack.c.h.b16 %v2824
    %v3718 = vunpack.c.l.b16 %v2825
    %v3719 = vunpack.c.l.b16 %v2826
    %v3720 = vunpack.c.h.b16 %v2826
    %v3721 = vunpack.c.l.b16 %v2827
    %v3722 = vunpack.c.h.b16 %v2827
    %v3723 = vunpack.c.l.b16 %v2828
    %v3724 = vunpack.c.h.b16 %v2828
    %v3725 = vunpack.c.l.b16 %v2829
    %v3726 = vunpack.c.l.b16 %v2830
    %v3727 = vunpack.c.h.b16 %v2830
    %v3728 = vunpack.c.l.b16 %v2831
    %v3729 = vunpack.c.h.b16 %v2831
    %v3730 = vunpack.c.l.b16 %v2832
    %v3731 = vunpack.c.h.b16 %v2832
    %v3732 = vunpack.c.l.b16 %v2833
    %v3733 = vunpack.c.l.b16 %v2834
    %v3734 = vunpack.c.h.b16 %v2834
    %v3735 = vunpack.c.l.b16 %v2835
    %v3736 = vunpack.c.h.b16 %v2835
    %v3737 = vunpack.c.l.b16 %v2836
    %v3738 = vunpack.c.h.b16 %v2836
    %v3739 = vunpack.c.l.b16 %v2837
    %v3740 = vunpack.c.l.b16 %v2838
    %v3741 = vunpack.c.h.b16 %v2838
    %v3742 = vunpack.c.l.b16 %v2839
    %v3743 = vunpack.c.h.b16 %v2839
    %v3744 = vunpack.c.l.b16 %v2840
    %v3745 = vunpack.c.h.b16 %v2840
    %v3746 = vunpack.c.l.b16 %v2841
    %v3747 = vunpack.c.l.b16 %v2842
    %v3748 = vunpack.c.h.b16 %v2842
    %v3749 = vunpack.c.l.b16 %v2843
    %v3750 = vunpack.c.h.b16 %v2843
    %v3751 = vunpack.c.l.b16 %v2844
    %v3752 = vunpack.c.h.b16 %v2844
    %v3753 = vunpack.c.l.b16 %v2845
    %v3754 = vunpack.c.l.b16 %v2846
    %v3755 = vunpack.c.h.b16 %v2846
    %v3756 = vunpack.c.l.b16 %v2847
    %v3757 = vunpack.c.h.b16 %v2847
    %v3758 = vunpack.c.l.b16 %v2848
    %v3759 = vunpack.c.h.b16 %v2848
    %v3760 = vunpack.c.l.b16 %v2849
    %v3761 = vunpack.c.l.b16 %v2850
    %v3762 = vunpack.c.h.b16 %v2850
    %v3763 = vunpack.c.l.b16 %v2851
    %v3764 = vunpack.c.h.b16 %v2851
    %v3765 = vunpack.c.l.b16 %v2852
    %v3766 = vunpack.c.h.b16 %v2852
    %v3767 = vunpack.c.l.b16 %v2853
    %v3768 = vunpack.c.l.b16 %v2854
    %v3769 = vunpack.c.h.b16 %v2854
    %v3770 = vunpack.c.l.b16 %v2855
    %v3771 = vunpack.c.h.b16 %v2855
    %v3772 = vunpack.c.l.b16 %v2856
    %v3773 = vunpack.c.h.b16 %v2856
    %v3774 = vunpack.c.l.b16 %v2857
    %v3775 = vunpack.c.l.b16 %v2858
    %v3776 = vunpack.c.h.b16 %v2858
    %v3777 = vunpack.c.l.b16 %v2859
    %v3778 = vunpack.c.h.b16 %v2859
    %v3779 = vunpack.c.l.b16 %v2860
    %v3780 = vunpack.c.h.b16 %v2860
    %v3781 = vunpack.c.l.b16 %v2861
    %v3782 = vunpack.c.l.b16 %v2862
    %v3783 = vunpack.c.h.b16 %v2862
    %v3784 = vunpack.c.l.b16 %v2863
    %v3785 = vunpack.c.h.b16 %v2863
    %v3786 = vunpack.c.l.b16 %v2864
    %v3787 = vunpack.c.h.b16 %v2864
    %v3788 = vunpack.c.l.b16 %v2865
    %v3789 = vunpack.c.l.b16 %v2866
    %v3790 = vunpack.c.h.b16 %v2866
    %v3791 = vunpack.c.l.b16 %v2867
    %v3792 = vunpack.c.h.b16 %v2867
    %v3793 = vunpack.c.l.b16 %v2868
    %v3794 = vunpack.c.h.b16 %v2868
    %v3795 = vunpack.c.l.b16 %v2869
    %v3796 = vunpack.c.l.b16 %v2870
    %v3797 = vunpack.c.h.b16 %v2870
    %v3798 = vunpack.c.l.b16 %v2871
    %v3799 = vunpack.c.h.b16 %v2871
    %v3800 = vunpack.c.l.b16 %v2872
    %v3801 = vunpack.c.h.b16 %v2872
    %v3802 = vunpack.c.l.b16 %v2873
    %v3803 = vunpack.c.l.b16 %v2874
    %v3804 = vunpack.c.h.b16 %v2874
    %v3805 = vunpack.c.l.b16 %v2875
    %v3806 = vunpack.c.h.b16 %v2875
    %v3807 = vunpack.c.l.b16 %v2876
    %v3808 = vunpack.c.h.b16 %v2876
    %v3809 = vunpack.c.l.b16 %v2877
    %v3810 = vunpack.c.l.b16 %v2878
    %v3811 = vunpack.c.h.b16 %v2878
    %v3812 = vunpack.c.l.b16 %v2879
    %v3813 = vunpack.c.h.b16 %v2879
    %v3814 = vunpack.c.l.b16 %v2880
    %v3815 = vunpack.c.h.b16 %v2880
    %v3816 = vunpack.c.l.b16 %v2881
    %v3817 = vunpack.c.l.b16 %v2882
    %v3818 = vunpack.c.h.b16 %v2882
    %v3819 = vunpack.c.l.b16 %v2883
    %v3820 = vunpack.c.h.b16 %v2883
    %v3821 = vunpack.c.l.b16 %v2884
    %v3822 = vunpack.c.h.b16 %v2884
    %v3823 = vunpack.c.l.b16 %v2885
    %v3824 = vunpack.c.l.b16 %v2886
    %v3825 = vunpack.c.h.b16 %v2886
    %v3826 = vunpack.c.l.b16 %v2887
    %v3827 = vunpack.c.h.b16 %v2887
    %v3828 = vunpack.c.l.b16 %v2888
    %v3829 = vunpack.c.h.b16 %v2888
    %v3830 = vunpack.c.l.b16 %v2889
    %v3831 = vunpack.c.l.b16 %v2890
    %v3832 = vunpack.c.h.b16 %v2890
    %v3833 = vunpack.c.l.b16 %v2891
    %v3834 = vunpack.c.h.b16 %v2891
    %v3835 = vunpack.c.l.b16 %v2892
    %v3836 = vunpack.c.h.b16 %v2892
    %v3837 = vunpack.c.l.b16 %v2893
    %v3838 = vunpack.c.l.b16 %v2894
    %v3839 = vunpack.c.h.b16 %v2894
    %v3840 = vunpack.c.l.b16 %v2895
    %v3841 = vunpack.c.h.b16 %v2895
    %v3842 = vunpack.c.l.b16 %v2896
    %v3843 = vunpack.c.h.b16 %v2896
    %v3844 = vunpack.c.l.b16 %v2897
    %v3845 = vunpack.c.l.b16 %v2898
    %v3846 = vunpack.c.h.b16 %v2898
    %v3847 = vunpack.c.l.b16 %v2899
    %v3848 = vunpack.c.h.b16 %v2899
    %v3849 = vunpack.c.l.b16 %v2900
    %v3850 = vunpack.c.h.b16 %v2900
    %v3851 = vunpack.c.l.b16 %v2901
    %v3852 = vunpack.c.l.b16 %v2902
    %v3853 = vunpack.c.h.b16 %v2902
    %v3854 = vunpack.c.l.b16 %v2903
    %v3855 = vunpack.c.h.b16 %v2903
    %v3856 = vunpack.c.l.b16 %v2904
    %v3857 = vunpack.c.h.b16 %v2904
    %v3858 = vunpack.c.l.b16 %v2905
    %v3859 = vunpack.c.l.b16 %v2906
    %v3860 = vunpack.c.h.b16 %v2906
    %v3861 = vunpack.c.l.b16 %v2907
    %v3862 = vunpack.c.h.b16 %v2907
    %v3863 = vunpack.c.l.b16 %v2908
    %v3864 = vunpack.c.h.b16 %v2908
    %v3865 = vunpack.c.l.b16 %v2909
    %v3866 = vunpack.c.l.b16 %v2910
    %v3867 = vunpack.c.h.b16 %v2910
    %v3868 = vunpack.c.l.b16 %v2911
    %v3869 = vunpack.c.h.b16 %v2911
    %v3870 = vunpack.c.l.b16 %v2912
    %v3871 = vunpack.c.h.b16 %v2912
    %v3872 = vunpack.c.l.b16 %v2913
    %v3873 = vunpack.c.l.b16 %v2914
    %v3874 = vunpack.c.h.b16 %v2914
    %v3875 = vunpack.c.l.b16 %v2915
    %v3876 = vunpack.c.h.b16 %v2915
    %v3877 = vunpack.c.l.b16 %v2916
    %v3878 = vunpack.c.h.b16 %v2916
    %v3879 = vunpack.c.l.b16 %v2917
    %v3880 = vunpack.c.l.b16 %v2918
    %v3881 = vunpack.c.h.b16 %v2918
    %v3882 = vunpack.c.l.b16 %v2919
    %v3883 = vunpack.c.h.b16 %v2919
    %v3884 = vunpack.c.l.b16 %v2920
    %v3885 = vunpack.c.h.b16 %v2920
    %v3886 = vunpack.c.l.b16 %v2921
    %v3887 = vunpack.c.l.b16 %v2922
    %v3888 = vunpack.c.h.b16 %v2922
    %v3889 = vunpack.c.l.b16 %v2923
    %v3890 = vunpack.c.h.b16 %v2923
    %v3891 = vunpack.c.l.b16 %v2924
    %v3892 = vunpack.c.h.b16 %v2924
    %v3893 = vunpack.c.l.b16 %v2925
    %v3894 = vunpack.c.l.b16 %v2926
    %v3895 = vunpack.c.h.b16 %v2926
    %v3896 = vunpack.c.l.b16 %v2927
    %v3897 = vunpack.c.h.b16 %v2927
    %v3898 = vunpack.c.l.b16 %v2928
    %v3899 = vunpack.c.h.b16 %v2928
    %v3900 = vunpack.c.l.b16 %v2929
    %v3901 = vunpack.c.l.b16 %v2930
    %v3902 = vunpack.c.h.b16 %v2930
    %v3903 = vunpack.c.l.b16 %v2931
    %v3904 = vunpack.c.h.b16 %v2931
    %v3905 = vunpack.c.l.b16 %v2932
    %v3906 = vunpack.c.h.b16 %v2932
    %v3907 = vunpack.c.l.b16 %v2933
    %v3908 = vunpack.c.l.b16 %v2934
    %v3909 = vunpack.c.h.b16 %v2934
    %v3910 = vunpack.c.l.b16 %v2935
    %v3911 = vunpack.c.h.b16 %v2935
    %v3912 = vunpack.c.l.b16 %v2936
    %v3913 = vunpack.c.h.b16 %v2936
    %v3914 = vunpack.c.l.b16 %v2937
    %v3915 = vunpack.c.l.b16 %v2938
    %v3916 = vunpack.c.h.b16 %v2938
    %v3917 = vunpack.c.l.b16 %v2939
    %v3918 = vunpack.c.h.b16 %v2939
    %v3919 = vunpack.c.l.b16 %v2940
    %v3920 = vunpack.c.h.b16 %v2940
    %v3921 = vunpack.c.l.b16 %v2941
    %v3922 = vunpack.c.l.b16 %v2942
    %v3923 = vunpack.c.h.b16 %v2942
    %v3924 = vunpack.c.l.b16 %v2943
    %v3925 = vunpack.c.h.b16 %v2943
    %v3926 = vunpack.c.l.b16 %v2944
    %v3927 = vunpack.c.h.b16 %v2944
    %v3928 = vunpack.c.l.b16 %v2945
    %v3929 = vunpack.c.l.b16 %v2946
    %v3930 = vunpack.c.h.b16 %v2946
    %v3931 = vunpack.c.l.b16 %v2947
    %v3932 = vunpack.c.h.b16 %v2947
    %v3933 = vunpack.c.l.b16 %v2948
    %v3934 = vunpack.c.h.b16 %v2948
    %v3935 = vunpack.c.l.b16 %v2949
    %v3936 = vunpack.c.l.b16 %v2950
    %v3937 = vunpack.c.h.b16 %v2950
    %v3938 = vunpack.c.l.b16 %v2951
    %v3939 = vunpack.c.h.b16 %v2951
    %v3940 = vunpack.c.l.b16 %v2952
    %v3941 = vunpack.c.h.b16 %v2952
    %v3942 = vunpack.c.l.b16 %v2953
    %v3943 = vunpack.c.l.b16 %v2954
    %v3944 = vunpack.c.h.b16 %v2954
    %v3945 = vunpack.c.l.b16 %v2955
    %v3946 = vunpack.c.h.b16 %v2955
    %v3947 = vunpack.c.l.b16 %v2956
    %v3948 = vunpack.c.h.b16 %v2956
    %v3949 = vunpack.c.l.b16 %v2957
    %v3950 = vunpack.c.l.b16 %v2958
    %v3951 = vunpack.c.h.b16 %v2958
    %v3952 = vunpack.c.l.b16 %v2959
    %v3953 = vunpack.c.h.b16 %v2959
    %v3954 = vunpack.c.l.b16 %v2960
    %v3955 = vunpack.c.h.b16 %v2960
    %v3956 = vunpack.c.l.b16 %v2961
    %v3957 = vunpack.c.l.b16 %v2962
    %v3958 = vunpack.c.h.b16 %v2962
    %v3959 = vunpack.c.l.b16 %v2963
    %v3960 = vunpack.c.h.b16 %v2963
    %v3961 = vunpack.c.l.b16 %v2964
    %v3962 = vunpack.c.h.b16 %v2964
    %v3963 = vunpack.c.l.b16 %v2965
    %v3964 = vunpack.c.l.b16 %v2966
    %v3965 = vunpack.c.h.b16 %v2966
    %v3966 = vunpack.c.l.b16 %v2967
    %v3967 = vunpack.c.h.b16 %v2967
    %v3968 = vunpack.c.l.b16 %v2968
    %v3969 = vunpack.c.h.b16 %v2968
    %v3970 = vunpack.c.l.b16 %v2969
    %v3971 = vunpack.c.l.b16 %v2970
    %v3972 = vunpack.c.h.b16 %v2970
    %v3973 = vunpack.c.l.b16 %v2971
    %v3974 = vunpack.c.h.b16 %v2971
    %v3975 = vunpack.c.l.b16 %v2972
    %v3976 = vunpack.c.h.b16 %v2972
    %v3977 = vunpack.c.l.b16 %v2973
    %v3978 = vunpack.c.l.b16 %v2974
    %v3979 = vunpack.c.h.b16 %v2974
    %v3980 = vunpack.c.l.b16 %v2975
    %v3981 = vunpack.c.h.b16 %v2975
    %v3982 = vunpack.c.l.b16 %v2976
    %v3983 = vunpack.c.h.b16 %v2976
    %v3984 = vunpack.c.l.b16 %v2977
    %v3985 = vunpack.c.l.b16 %v2978
    %v3986 = vunpack.c.h.b16 %v2978
    %v3987 = vunpack.c.l.b16 %v2979
    %v3988 = vunpack.c.h.b16 %v2979
    %v3989 = vunpack.c.l.b16 %v2980
    %v3990 = vunpack.c.h.b16 %v2980
    %v3991 = vunpack.c.l.b16 %v2981
    %v3992 = vunpack.c.l.b16 %v2982
    %v3993 = vunpack.c.h.b16 %v2982
    %v3994 = vunpack.c.l.b16 %v2983
    %v3995 = vunpack.c.h.b16 %v2983
    %v3996 = vunpack.c.l.b16 %v2984
    %v3997 = vunpack.c.h.b16 %v2984
    %v3998 = vunpack.c.l.b16 %v2985
    %v3999 = vunpack.c.l.b16 %v2986
    %v4000 = vunpack.c.h.b16 %v2986
    %v4001 = vunpack.c.l.b16 %v2987
    %v4002 = vunpack.c.h.b16 %v2987
    %v4003 = vunpack.c.l.b16 %v2988
    %v4004 = vunpack.c.h.b16 %v2988
    %v4005 = vunpack.c.l.b16 %v2989
    %v4006 = vunpack.c.l.b16 %v2990
    %v4007 = vunpack.c.h.b16 %v2990
    %v4008 = vunpack.c.l.b16 %v2991
    %v4009 = vunpack.c.h.b16 %v2991
    %v4010 = vunpack.c.l.b16 %v2992
    %v4011 = vunpack.c.h.b16 %v2992
    %v4012 = vunpack.c.l.b16 %v2993
    %v4013 = vunpack.c.l.b16 %v2994
    %v4014 = vunpack.c.h.b16 %v2994
    %v4015 = vunpack.c.l.b16 %v2995
    %v4016 = vunpack.c.h.b16 %v2995
    %v4017 = vunpack.c.l.b16 %v2996
    %v4018 = vunpack.c.h.b16 %v2996
    %v4019 = vunpack.c.l.b16 %v2997
    %v4020 = vunpack.c.l.b16 %v2998
    %v4021 = vunpack.c.h.b16 %v2998
    %v4022 = vunpack.c.l.b16 %v2999
    %v4023 = vunpack.c.h.b16 %v2999
    %v4024 = vunpack.c.l.b16 %v3000
    %v4025 = vunpack.c.h.b16 %v3000
    %v4026 = vunpack.c.l.b16 %v3001
    %v4027 = vunpack.c.l.b16 %v3002
    %v4028 = vunpack.c.h.b16 %v3002
    %v4029 = vunpack.c.l.b16 %v3003
    %v4030 = vunpack.c.h.b16 %v3003
    %v4031 = vunpack.c.l.b16 %v3004
    %v4032 = vunpack.c.h.b16 %v3004
    %v4033 = vunpack.c.l.b16 %v3005
    %v4034 = vunpack.c.l.b16 %v3006
    %v4035 = vunpack.c.h.b16 %v3006
    %v4036 = vunpack.c.l.b16 %v3007
    %v4037 = vunpack.c.h.b16 %v3007
    %v4038 = vunpack.c.l.b16 %v3008
    %v4039 = vunpack.c.h.b16 %v3008
    %v4040 = vunpack.c.l.b16 %v3009
    %v4041 = vunpack.c.l.b16 %v3010
    %v4042 = vunpack.c.h.b16 %v3010
    %v4043 = vunpack.c.l.b16 %v3011
    %v4044 = vunpack.c.h.b16 %v3011
    %v4045 = vunpack.c.l.b16 %v3012
    %v4046 = vunpack.c.h.b16 %v3012
    %v4047 = vunpack.c.l.b16 %v3013
    %v4048 = vunpack.c.l.b16 %v3014
    %v4049 = vunpack.c.h.b16 %v3014
    %v4050 = vunpack.c.l.b16 %v3015
    %v4051 = vunpack.c.h.b16 %v3015
    %v4052 = vunpack.c.l.b16 %v3016
    %v4053 = vunpack.c.h.b16 %v3016
    %v4054 = vunpack.c.l.b16 %v3017
    %v4055 = vunpack.c.l.b16 %v3018
    %v4056 = vunpack.c.h.b16 %v3018
    %v4057 = vunpack.c.l.b16 %v3019
    %v4058 = vunpack.c.h.b16 %v3019
    %v4059 = vunpack.c.l.b16 %v3020
    %v4060 = vunpack.c.h.b16 %v3020
    %v4061 = vunpack.c.l.b16 %v3021
    %v4062 = vunpack.c.l.b16 %v3022
    %v4063 = vunpack.c.h.b16 %v3022
    %v4064 = vunpack.c.l.b16 %v3023
    %v4065 = vunpack.c.h.b16 %v3023
    %v4066 = vunpack.c.l.b16 %v3024
    %v4067 = vunpack.c.h.b16 %v3024
    %v4068 = vunpack.c.l.b16 %v3025
    %v4069 = vunpack.c.l.b16 %v3026
    %v4070 = vunpack.c.h.b16 %v3026
    %v4071 = vunpack.c.l.b16 %v3027
    %v4072 = vunpack.c.h.b16 %v3027
    %v4073 = vunpack.c.l.b16 %v3028
    %v4074 = vunpack.c.h.b16 %v3028
    %v4075 = vunpack.c.l.b16 %v3029
    %v4076 = vunpack.c.l.b16 %v3030
    %v4077 = vunpack.c.h.b16 %v3030
    %v4078 = vunpack.c.l.b16 %v3031
    %v4079 = vunpack.c.h.b16 %v3031
    %v4080 = vunpack.c.l.b16 %v3032
    %v4081 = vunpack.c.h.b16 %v3032
    %v4082 = vunpack.c.l.b16 %v3033
    %v4083 = vunpack.c.l.b16 %v3034
    %v4084 = vunpack.c.h.b16 %v3034
    %v4085 = vunpack.c.l.b16 %v3035
    %v4086 = vunpack.c.h.b16 %v3035
    %v4087 = vunpack.c.l.b16 %v3036
    %v4088 = vunpack.c.h.b16 %v3036
    %v4089 = vunpack.c.l.b16 %v3037
    %v4090 = vunpack.c.l.b16 %v3038
    %v4091 = vunpack.c.h.b16 %v3038
    %v4092 = vunpack.c.l.b16 %v3039
    %v4093 = vunpack.c.h.b16 %v3039
    %v4094 = vunpack.c.l.b16 %v3040
    %v4095 = vunpack.c.h.b16 %v3040
    %v4096 = vunpack.c.l.b16 %v3041
    %v4097 = vunpack.c.l.b16 %v3042
    %v4098 = vunpack.c.h.b16 %v3042
    %v4099 = vunpack.c.l.b16 %v3043
    %v4100 = vunpack.c.h.b16 %v3043
    %v4101 = vunpack.c.l.b16 %v3044
    %v4102 = vunpack.c.h.b16 %v3044
    %v4103 = vunpack.c.l.b16 %v3045
    %v4104 = vunpack.c.l.b16 %v3046
    %v4105 = vunpack.c.h.b16 %v3046
    %v4106 = vunpack.c.l.b16 %v3047
    %v4107 = vunpack.c.h.b16 %v3047
    %v4108 = vunpack.c.l.b16 %v3048
    %v4109 = vunpack.c.h.b16 %v3048
    %v4110 = vunpack.c.l.b16 %v3049
    %v4111 = vunpack.c.l.b16 %v3050
    %v4112 = vunpack.c.h.b16 %v3050
    %v4113 = vunpack.c.l.b16 %v3051
    %v4114 = vunpack.c.h.b16 %v3051
    %v4115 = vunpack.c.l.b16 %v3052
    %v4116 = vunpack.c.h.b16 %v3052
    %v4117 = vunpack.c.l.b16 %v3053
    %v4118 = vunpack.c.l.b16 %v3054
    %v4119 = vunpack.c.h.b16 %v3054
    %v4120 = vunpack.c.l.b16 %v3055
    %v4121 = vunpack.c.h.b16 %v3055
    %v4122 = vunpack.c.l.b16 %v3056
    %v4123 = vunpack.c.h.b16 %v3056
    %v4124 = vunpack.c.l.b16 %v3057
    %v4125 = vunpack.c.l.b16 %v3058
    %v4126 = vunpack.c.h.b16 %v3058
    %v4127 = vunpack.c.l.b16 %v3059
    %v4128 = vunpack.c.h.b16 %v3059
    %v4129 = vunpack.c.l.b16 %v3060
    %v4130 = vunpack.c.h.b16 %v3060
    %v4131 = vunpack.c.l.b16 %v3061
    %v4132 = vunpack.c.l.b16 %v3062
    %v4133 = vunpack.c.h.b16 %v3062
    %v4134 = vunpack.c.l.b16 %v3063
    %v4135 = vunpack.c.h.b16 %v3063
    %v4136 = vunpack.c.l.b16 %v3064
    %v4137 = vunpack.c.h.b16 %v3064
    %v4138 = vunpack.c.l.b16 %v3065
    %v4139 = vunpack.c.l.b16 %v3066
    %v4140 = vunpack.c.h.b16 %v3066
    %v4141 = vunpack.c.l.b16 %v3067
    %v4142 = vunpack.c.h.b16 %v3067
    %v4143 = vunpack.c.l.b16 %v3068
    %v4144 = vunpack.c.h.b16 %v3068
    %v4145 = vunpack.c.l.b16 %v3069
    %v4146 = vunpack.c.l.b16 %v3070
    %v4147 = vunpack.c.h.b16 %v3070
    %v4148 = vunpack.c.l.b16 %v3071
    %v4149 = vunpack.c.h.b16 %v3071
    %v4150 = vunpack.c.l.b16 %v3072
    %v4151 = vunpack.c.h.b16 %v3072
    %v4152 = vunpack.c.l.b16 %v3073
    %v4153 = vunpack.c.l.b16 %v3074
    %v4154 = vunpack.c.h.b16 %v3074
    %v4155 = vunpack.c.l.b16 %v3075
    %v4156 = vunpack.c.h.b16 %v3075
    %v4157 = vunpack.c.l.b16 %v3076
    %v4158 = vunpack.c.h.b16 %v3076
    %v4159 = vunpack.c.l.b16 %v3077
    %v4160 = vunpack.c.l.b16 %v3078
    %v4161 = vunpack.c.h.b16 %v3078
    %v4162 = vunpack.c.l.b16 %v3079
    %v4163 = vunpack.c.h.b16 %v3079
    %v4164 = vunpack.c.l.b16 %v3080
    %v4165 = vunpack.c.h.b16 %v3080
    %v4166 = vunpack.c.l.b16 %v3081
    %v4167 = vunpack.c.l.b16 %v3082
    %v4168 = vunpack.c.h.b16 %v3082
    %v4169 = vunpack.c.l.b16 %v3083
    %v4170 = vunpack.c.h.b16 %v3083
    %v4171 = vunpack.c.l.b16 %v3084
    %v4172 = vunpack.c.h.b16 %v3084
    %v4173 = vunpack.c.l.b16 %v3085
    %v4174 = vunpack.c.l.b16 %v3086
    %v4175 = vunpack.c.h.b16 %v3086
    %v4176 = vunpack.c.l.b16 %v3087
    %v4177 = vunpack.c.h.b16 %v3087
    %v4178 = vunpack.c.l.b16 %v3088
    %v4179 = vunpack.c.h.b16 %v3088
    %v4180 = vunpack.c.l.b16 %v3089
    %v4181 = vunpack.c.l.b16 %v3090
    %v4182 = vunpack.c.h.b16 %v3090
    %v4183 = vunpack.c.l.b16 %v3091
    %v4184 = vunpack.c.h.b16 %v3091
    %v4185 = vunpack.c.l.b16 %v3092
    %v4186 = vunpack.c.h.b16 %v3092
    %v4187 = vunpack.c.l.b16 %v3093
    %v4188 = vunpack.c.l.b16 %v3094
    %v4189 = vunpack.c.h.b16 %v3094
    %v4190 = vunpack.c.l.b16 %v3095
    %v4191 = vunpack.c.h.b16 %v3095
    %v4192 = vunpack.c.l.b16 %v3096
    %v4193 = vunpack.c.h.b16 %v3096
    %v4194 = vunpack.c.l.b16 %v3097
    %v4195 = vunpack.c.l.b16 %v3098
    %v4196 = vunpack.c.h.b16 %v3098
    %v4197 = vunpack.c.l.b16 %v3099
    %v4198 = vunpack.c.h.b16 %v3099
    %v4199 = vunpack.c.l.b16 %v3100
    %v4200 = vunpack.c.h.b16 %v3100
    %v4201 = vunpack.c.l.b16 %v3101
    %v4202 = vunpack.c.l.b16 %v3102
    %v4203 = vunpack.c.h.b16 %v3102
    %v4204 = vunpack.c.l.b16 %v3103
    %v4205 = vunpack.c.h.b16 %v3103
    %v4206 = vunpack.c.l.b16 %v3104
    %v4207 = vunpack.c.h.b16 %v3104
    %v4208 = vunpack.c.l.b16 %v3105
    %v4209 = vunpack.c.l.b16 %v3106
    %v4210 = vunpack.c.h.b16 %v3106
    %v4211 = vunpack.c.l.b16 %v3107
    %v4212 = vunpack.c.h.b16 %v3107
    %v4213 = vunpack.c.l.b16 %v3108
    %v4214 = vunpack.c.h.b16 %v3108
    %v4215 = vunpack.c.l.b16 %v3109
    %v4216 = vunpack.c.l.b16 %v3110
    %v4217 = vunpack.c.h.b16 %v3110
    %v4218 = vunpack.c.l.b16 %v3111
    %v4219 = vunpack.c.h.b16 %v3111
    %v4220 = vunpack.c.l.b16 %v3112
    %v4221 = vunpack.c.h.b16 %v3112
    %v4222 = vunpack.c.l.b16 %v3113
    %v4223 = vunpack.c.l.b16 %v3114
    %v4224 = vunpack.c.h.b16 %v3114
    %v4225 = vunpack.c.l.b16 %v3115
    %v4226 = vunpack.c.h.b16 %v3115
    %v4227 = vunpack.c.l.b16 %v3116
    %v4228 = vunpack.c.h.b16 %v3116
    %v4229 = vunpack.c.l.b16 %v3117
    %v4230 = vunpack.c.l.b16 %v3118
    %v4231 = vunpack.c.h.b16 %v3118
    %v4232 = vunpack.c.l.b16 %v3119
    %v4233 = vunpack.c.h.b16 %v3119
    %v4234 = vunpack.c.l.b16 %v3120
    %v4235 = vunpack.c.h.b16 %v3120
    %v4236 = vunpack.c.l.b16 %v3121
    %v4237 = vpack.c.b16 %v3558, %v3551
    %v4238 = vpack.c.b16 %v3559, %v3552
    %v4239 = vpack.c.b16 %v3560, %v3553
    %v4240 = vpack.c.b16 %v3561, %v3554
    %v4241 = vpack.c.b16 %v3562, %v3555
    %v4242 = vpack.c.b16 %v3563, %v3556
    %v4243 = vpack.c.b16 %v3564, %v3557
    %v4244 = vpack.c.b16 %v3572, %v3565
    %v4245 = vpack.c.b16 %v3573, %v3566
    %v4246 = vpack.c.b16 %v3574, %v3567
    %v4247 = vpack.c.b16 %v3575, %v3568
    %v4248 = vpack.c.b16 %v3576, %v3569
    %v4249 = vpack.c.b16 %v3577, %v3570
    %v4250 = vpack.c.b16 %v3578, %v3571
    %v4251 = vpack.c.b16 %v3586, %v3579
    %v4252 = vpack.c.b16 %v3587, %v3580
    %v4253 = vpack.c.b16 %v3588, %v3581
    %v4254 = vpack.c.b16 %v3589, %v3582
    %v4255 = vpack.c.b16 %v3590, %v3583
    %v4256 = vpack.c.b16 %v3591, %v3584
    %v4257 = vpack.c.b16 %v3592, %v3585
    %v4258 = vpack.c.b16 %v3600, %v3593
    %v4259 = vpack.c.b16 %v3601, %v3594
    %v4260 = vpack.c.b16 %v3602, %v3595
    %v4261 = vpack.c.b16 %v3603, %v3596
    %v4262 = vpack.c.b16 %v3604, %v3597
    %v4263 = vpack.c.b16 %v3605, %v3598
    %v4264 = vpack.c.b16 %v3606, %v3599
    %v4265 = vpack.c.b16 %v3614, %v3607
    %v4266 = vpack.c.b16 %v3615, %v3608
    %v4267 = vpack.c.b16 %v3616, %v3609
    %v4268 = vpack.c.b16 %v3617, %v3610
    %v4269 = vpack.c.b16 %v3618, %v3611
    %v4270 = vpack.c.b16 %v3619, %v3612
    %v4271 = vpack.c.b16 %v3620, %v3613
    %v4272 = vpack.c.b16 %v3628, %v3621
    %v4273 = vpack.c.b16 %v3629, %v3622
    %v4274 = vpack.c.b16 %v3630, %v3623
    %v4275 = vpack.c.b16 %v3631, %v3624
    %v4276 = vpack.c.b16 %v3632, %v3625
    %v4277 = vpack.c.b16 %v3633, %v3626
    %v4278 = vpack.c.b16 %v3634, %v3627
    %v4279 = vpack.c.b16 %v3642, %v3635
    %v4280 = vpack.c.b16 %v3643, %v3636
    %v4281 = vpack.c.b16 %v3644, %v3637
    %v4282 = vpack.c.b16 %v3645, %v3638
    %v4283 = vpack.c.b16 %v3646, %v3639
    %v4284 = vpack.c.b16 %v3647, %v3640
    %v4285 = vpack.c.b16 %v3648, %v3641
    %v4286 = vpack.c.b16 %v3656, %v3649
    %v4287 = vpack.c.b16 %v3657, %v3650
    %v4288 = vpack.c.b16 %v3658, %v3651
    %v4289 = vpack.c.b16 %v3659, %v3652
    %v4290 = vpack.c.b16 %v3660, %v3653
    %v4291 = vpack.c.b16 %v3661, %v3654
    %v4292 = vpack.c.b16 %v3662, %v3655
    %v4293 = vpack.c.b16 %v3670, %v3663
    %v4294 = vpack.c.b16 %v3671, %v3664
    %v4295 = vpack.c.b16 %v3672, %v3665
    %v4296 = vpack.c.b16 %v3673, %v3666
    %v4297 = vpack.c.b16 %v3674, %v3667
    %v4298 = vpack.c.b16 %v3675, %v3668
    %v4299 = vpack.c.b16 %v3676, %v3669
    %v4300 = vpack.c.b16 %v3684, %v3677
    %v4301 = vpack.c.b16 %v3685, %v3678
    %v4302 = vpack.c.b16 %v3686, %v3679
    %v4303 = vpack.c.b16 %v3687, %v3680
    %v4304 = vpack.c.b16 %v3688, %v3681
    %v4305 = vpack.c.b16 %v3689, %v3682
    %v4306 = vpack.c.b16 %v3690, %v3683
    %v4307 = vpack.c.b16 %v3698, %v3691
    %v4308 = vpack.c.b16 %v3699, %v3692
    %v4309 = vpack.c.b16 %v3700, %v3693
    %v4310 = vpack.c.b16 %v3701, %v3694
    %v4311 = vpack.c.b16 %v3702, %v3695
    %v4312 = vpack.c.b16 %v3703, %v3696
    %v4313 = vpack.c.b16 %v3704, %v3697
    %v4314 = vpack.c.b16 %v3712, %v3705
    %v4315 = vpack.c.b16 %v3713, %v3706
    %v4316 = vpack.c.b16 %v3714, %v3707
    %v4317 = vpack.c.b16 %v3715, %v3708
    %v4318 = vpack.c.b16 %v3716, %v3709
    %v4319 = vpack.c.b16 %v3717, %v3710
    %v4320 = vpack.c.b16 %v3718, %v3711
    %v4321 = vpack.c.b16 %v3726, %v3719
    %v4322 = vpack.c.b16 %v3727, %v3720
    %v4323 = vpack.c.b16 %v3728, %v3721
    %v4324 = vpack.c.b16 %v3729, %v3722
    %v4325 = vpack.c.b16 %v3730, %v3723
    %v4326 = vpack.c.b16 %v3731, %v3724
    %v4327 = vpack.c.b16 %v3732, %v3725
    %v4328 = vpack.c.b16 %v3740, %v3733
    %v4329 = vpack.c.b16 %v3741, %v3734
    %v4330 = vpack.c.b16 %v3742, %v3735
    %v4331 = vpack.c.b16 %v3743, %v3736
    %v4332 = vpack.c.b16 %v3744, %v3737
    %v4333 = vpack.c.b16 %v3745, %v3738
    %v4334 = vpack.c.b16 %v3746, %v3739
    %v4335 = vpack.c.b16 %v3754, %v3747
    %v4336 = vpack.c.b16 %v3755, %v3748
    %v4337 = vpack.c.b16 %v3756, %v3749
    %v4338 = vpack.c.b16 %v3757, %v3750
    %v4339 = vpack.c.b16 %v3758, %v3751
    %v4340 = vpack.c.b16 %v3759, %v3752
    %v4341 = vpack.c.b16 %v3760, %v3753
    %v4342 = vpack.c.b16 %v3768, %v3761
    %v4343 = vpack.c.b16 %v3769, %v3762
    %v4344 = vpack.c.b16 %v3770, %v3763
    %v4345 = vpack.c.b16 %v3771, %v3764
    %v4346 = vpack.c.b16 %v3772, %v3765
    %v4347 = vpack.c.b16 %v3773, %v3766
    %v4348 = vpack.c.b16 %v3774, %v3767
    %v4349 = vpack.c.b16 %v3782, %v3775
    %v4350 = vpack.c.b16 %v3783, %v3776
    %v4351 = vpack.c.b16 %v3784, %v3777
    %v4352 = vpack.c.b16 %v3785, %v3778
    %v4353 = vpack.c.b16 %v3786, %v3779
    %v4354 = vpack.c.b16 %v3787, %v3780
    %v4355 = vpack.c.b16 %v3788, %v3781
    %v4356 = vpack.c.b16 %v3796, %v3789
    %v4357 = vpack.c.b16 %v3797, %v3790
    %v4358 = vpack.c.b16 %v3798, %v3791
    %v4359 = vpack.c.b16 %v3799, %v3792
    %v4360 = vpack.c.b16 %v3800, %v3793
    %v4361 = vpack.c.b16 %v3801, %v3794
    %v4362 = vpack.c.b16 %v3802, %v3795
    %v4363 = vpack.c.b16 %v3810, %v3803
    %v4364 = vpack.c.b16 %v3811, %v3804
    %v4365 = vpack.c.b16 %v3812, %v3805
    %v4366 = vpack.c.b16 %v3813, %v3806
    %v4367 = vpack.c.b16 %v3814, %v3807
    %v4368 = vpack.c.b16 %v3815, %v3808
    %v4369 = vpack.c.b16 %v3816, %v3809
    %v4370 = vpack.c.b16 %v3824, %v3817
    %v4371 = vpack.c.b16 %v3825, %v3818
    %v4372 = vpack.c.b16 %v3826, %v3819
    %v4373 = vpack.c.b16 %v3827, %v3820
    %v4374 = vpack.c.b16 %v3828, %v3821
    %v4375 = vpack.c.b16 %v3829, %v3822
    %v4376 = vpack.c.b16 %v3830, %v3823
    %v4377 = vpack.c.b16 %v3838, %v3831
    %v4378 = vpack.c.b16 %v3839, %v3832
    %v4379 = vpack.c.b16 %v3840, %v3833
    %v4380 = vpack.c.b16 %v3841, %v3834
    %v4381 = vpack.c.b16 %v3842, %v3835
    %v4382 = vpack.c.b16 %v3843, %v3836
    %v4383 = vpack.c.b16 %v3844, %v3837
    %v4384 = vpack.c.b16 %v3852, %v3845
    %v4385 = vpack.c.b16 %v3853, %v3846
    %v4386 = vpack.c.b16 %v3854, %v3847
    %v4387 = vpack.c.b16 %v3855, %v3848
    %v4388 = vpack.c.b16 %v3856, %v3849
    %v4389 = vpack.c.b16 %v3857, %v3850
    %v4390 = vpack.c.b16 %v3858, %v3851
    %v4391 = vpack.c.b16 %v3866, %v3859
    %v4392 = vpack.c.b16 %v3867, %v3860
    %v4393 = vpack.c.b16 %v3868, %v3861
    %v4394 = vpack.c.b16 %v3869, %v3862
    %v4395 = vpack.c.b16 %v3870, %v3863
    %v4396 = vpack.c.b16 %v3871, %v3864
    %v4397 = vpack.c.b16 %v3872, %v3865
    %v4398 = vpack.c.b16 %v3880, %v3873
    %v4399 = vpack.c.b16 %v3881, %v3874
    %v4400 = vpack.c.b16 %v3882, %v3875
    %v4401 = vpack.c.b16 %v3883, %v3876
    %v4402 = vpack.c.b16 %v3884, %v3877
    %v4403 = vpack.c.b16 %v3885, %v3878
    %v4404 = vpack.c.b16 %v3886, %v3879
    %v4405 = vpack.c.b16 %v3894, %v3887
    %v4406 = vpack.c.b16 %v3895, %v3888
    %v4407 = vpack.c.b16 %v3896, %v3889
    %v4408 = vpack.c.b16 %v3897, %v3890
    %v4409 = vpack.c.b16 %v3898, %v3891
    %v4410 = vpack.c.b16 %v3899, %v3892
    %v4411 = vpack.c.b16 %v3900, %v3893
    %v4412 = vpack.c.b16 %v3908, %v3901
    %v4413 = vpack.c.b16 %v3909, %v3902
    %v4414 = vpack.c.b16 %v3910, %v3903
    %v4415 = vpack.c.b16 %v3911, %v3904
    %v4416 = vpack.c.b16 %v3912, %v3905
    %v4417 = vpack.c.b16 %v3913, %v3906
    %v4418 = vpack.c.b16 %v3914, %v3907
    %v4419 = vpack.c.b16 %v3922, %v3915
    %v4420 = vpack.c.b16 %v3923, %v3916
    %v4421 = vpack.c.b16 %v3924, %v3917
    %v4422 = vpack.c.b16 %v3925, %v3918
    %v4423 = vpack.c.b16 %v3926, %v3919
    %v4424 = vpack.c.b16 %v3927, %v3920
    %v4425 = vpack.c.b16 %v3928, %v3921
    %v4426 = vpack.c.b16 %v3936, %v3929
    %v4427 = vpack.c.b16 %v3937, %v3930
    %v4428 = vpack.c.b16 %v3938, %v3931
    %v4429 = vpack.c.b16 %v3939, %v3932
    %v4430 = vpack.c.b16 %v3940, %v3933
    %v4431 = vpack.c.b16 %v3941, %v3934
    %v4432 = vpack.c.b16 %v3942, %v3935
    %v4433 = vpack.c.b16 %v3950, %v3943
    %v4434 = vpack.c.b16 %v3951, %v3944
    %v4435 = vpack.c.b16 %v3952, %v3945
    %v4436 = vpack.c.b16 %v3953, %v3946
    %v4437 = vpack.c.b16 %v3954, %v3947
    %v4438 = vpack.c.b16 %v3955, %v3948
    %v4439 = vpack.c.b16 %v3956, %v3949
    %v4440 = vpack.c.b16 %v3964, %v3957
    %v4441 = vpack.c.b16 %v3965, %v3958
    %v4442 = vpack.c.b16 %v3966, %v3959
    %v4443 = vpack.c.b16 %v3967, %v3960
    %v4444 = vpack.c.b16 %v3968, %v3961
    %v4445 = vpack.c.b16 %v3969, %v3962
    %v4446 = vpack.c.b16 %v3970, %v3963
    %v4447 = vpack.c.b16 %v3978, %v3971
    %v4448 = vpack.c.b16 %v3979, %v3972
    %v4449 = vpack.c.b16 %v3980, %v3973
    %v4450 = vpack.c.b16 %v3981, %v3974
    %v4451 = vpack.c.b16 %v3982, %v3975
    %v4452 = vpack.c.b16 %v3983, %v3976
    %v4453 = vpack.c.b16 %v3984, %v3977
    %v4454 = vpack.c.b16 %v3992, %v3985
    %v4455 = vpack.c.b16 %v3993, %v3986
    %v4456 = vpack.c.b16 %v3994, %v3987
    %v4457 = vpack.c.b16 %v3995, %v3988
    %v4458 = vpack.c.b16 %v3996, %v3989
    %v4459 = vpack.c.b16 %v3997, %v3990
    %v4460 = vpack.c.b16 %v3998, %v3991
    %v4461 = vpack.c.b16 %v4006, %v3999
    %v4462 = vpack.c.b16 %v4007, %v4000
    %v4463 = vpack.c.b16 %v4008, %v4001
    %v4464 = vpack.c.b16 %v4009, %v4002
    %v4465 = vpack.c.b16 %v4010, %v4003
    %v4466 = vpack.c.b16 %v4011, %v4004
    %v4467 = vpack.c.b16 %v4012, %v4005
    %v4468 = vpack.c.b16 %v4020, %v4013
    %v4469 = vpack.c.b16 %v4021, %v4014
    %v4470 = vpack.c.b16 %v4022, %v4015
    %v4471 = vpack.c.b16 %v4023, %v4016
    %v4472 = vpack.c.b16 %v4024, %v4017
    %v4473 = vpack.c.b16 %v4025, %v4018
    %v4474 = vpack.c.b16 %v4026, %v4019
    %v4475 = vpack.c.b16 %v4034, %v4027
    %v4476 = vpack.c.b16 %v4035, %v4028
    %v4477 = vpack.c.b16 %v4036, %v4029
    %v4478 = vpack.c.b16 %v4037, %v4030
    %v4479 = vpack.c.b16 %v4038, %v4031
    %v4480 = vpack.c.b16 %v4039, %v4032
    %v4481 = vpack.c.b16 %v4040, %v4033
    %v4482 = vpack.c.b16 %v4048, %v4041
    %v4483 = vpack.c.b16 %v4049, %v4042
    %v4484 = vpack.c.b16 %v4050, %v4043
    %v4485 = vpack.c.b16 %v4051, %v4044
    %v4486 = vpack.c.b16 %v4052, %v4045
    %v4487 = vpack.c.b16 %v4053, %v4046
    %v4488 = vpack.c.b16 %v4054, %v4047
    %v4489 = vpack.c.b16 %v4062, %v4055
    %v4490 = vpack.c.b16 %v4063, %v4056
    %v4491 = vpack.c.b16 %v4064, %v4057
    %v4492 = vpack.c.b16 %v4065, %v4058
    %v4493 = vpack.c.b16 %v4066, %v4059
    %v4494 = vpack.c.b16 %v4067, %v4060
    %v4495 = vpack.c.b16 %v4068, %v4061
    %v4496 = vpack.c.b16 %v4076, %v4069
    %v4497 = vpack.c.b16 %v4077, %v4070
    %v4498 = vpack.c.b16 %v4078, %v4071
    %v4499 = vpack.c.b16 %v4079, %v4072
    %v4500 = vpack.c.b16 %v4080, %v4073
    %v4501 = vpack.c.b16 %v4081, %v4074
    %v4502 = vpack.c.b16 %v4082, %v4075
    %v4503 = vpack.c.b16 %v4090, %v4083
    %v4504 = vpack.c.b16 %v4091, %v4084
    %v4505 = vpack.c.b16 %v4092, %v4085
    %v4506 = vpack.c.b16 %v4093, %v4086
    %v4507 = vpack.c.b16 %v4094, %v4087
    %v4508 = vpack.c.b16 %v4095, %v4088
    %v4509 = vpack.c.b16 %v4096, %v4089
    %v4510 = vpack.c.b16 %v4104, %v4097
    %v4511 = vpack.c.b16 %v4105, %v4098
    %v4512 = vpack.c.b16 %v4106, %v4099
    %v4513 = vpack.c.b16 %v4107, %v4100
    %v4514 = vpack.c.b16 %v4108, %v4101
    %v4515 = vpack.c.b16 %v4109, %v4102
    %v4516 = vpack.c.b16 %v4110, %v4103
    %v4517 = vpack.c.b16 %v4118, %v4111
    %v4518 = vpack.c.b16 %v4119, %v4112
    %v4519 = vpack.c.b16 %v4120, %v4113
    %v4520 = vpack.c.b16 %v4121, %v4114
    %v4521 = vpack.c.b16 %v4122, %v4115
    %v4522 = vpack.c.b16 %v4123, %v4116
    %v4523 = vpack.c.b16 %v4124, %v4117
    %v4524 = vpack.c.b16 %v4132, %v4125
    %v4525 = vpack.c.b16 %v4133, %v4126
    %v4526 = vpack.c.b16 %v4134, %v4127
    %v4527 = vpack.c.b16 %v4135, %v4128
    %v4528 = vpack.c.b16 %v4136, %v4129
    %v4529 = vpack.c.b16 %v4137, %v4130
    %v4530 = vpack.c.b16 %v4138, %v4131
    %v4531 = vpack.c.b16 %v4146, %v4139
    %v4532 = vpack.c.b16 %v4147, %v4140
    %v4533 = vpack.c.b16 %v4148, %v4141
    %v4534 = vpack.c.b16 %v4149, %v4142
    %v4535 = vpack.c.b16 %v4150, %v4143
    %v4536 = vpack.c.b16 %v4151, %v4144
    %v4537 = vpack.c.b16 %v4152, %v4145
    %v4538 = vpack.c.b16 %v4160, %v4153
    %v4539 = vpack.c.b16 %v4161, %v4154
    %v4540 = vpack.c.b16 %v4162, %v4155
    %v4541 = vpack.c.b16 %v4163, %v4156
    %v4542 = vpack.c.b16 %v4164, %v4157
    %v4543 = vpack.c.b16 %v4165, %v4158
    %v4544 = vpack.c.b16 %v4166, %v4159
    %v4545 = vpack.c.b16 %v4174, %v4167
    %v4546 = vpack.c.b16 %v4175, %v4168
    %v4547 = vpack.c.b16 %v4176, %v4169
    %v4548 = vpack.c.b16 %v4177, %v4170
    %v4549 = vpack.c.b16 %v4178, %v4171
    %v4550 = vpack.c.b16 %v4179, %v4172
    %v4551 = vpack.c.b16 %v4180, %v4173
    %v4552 = vpack.c.b16 %v4188, %v4181
    %v4553 = vpack.c.b16 %v4189, %v4182
    %v4554 = vpack.c.b16 %v4190, %v4183
    %v4555 = vpack.c.b16 %v4191, %v4184
    %v4556 = vpack.c.b16 %v4192, %v4185
    %v4557 = vpack.c.b16 %v4193, %v4186
    %v4558 = vpack.c.b16 %v4194, %v4187
    %v4559 = vpack.c.b16 %v4202, %v4195
    %v4560 = vpack.c.b16 %v4203, %v4196
    %v4561 = vpack.c.b16 %v4204, %v4197
    %v4562 = vpack.c.b16 %v4205, %v4198
    %v4563 = vpack.c.b16 %v4206, %v4199
    %v4564 = vpack.c.b16 %v4207, %v4200
    %v4565 = vpack.c.b16 %v4208, %v4201
    %v4566 = vpack.c.b16 %v4216, %v4209
    %v4567 = vpack.c.b16 %v4217, %v4210
    %v4568 = vpack.c.b16 %v4218, %v4211
    %v4569 = vpack.c.b16 %v4219, %v4212
    %v4570 = vpack.c.b16 %v4220, %v4213
    %v4571 = vpack.c.b16 %v4221, %v4214
    %v4572 = vpack.c.b16 %v4222, %v4215
    %v4573 = vpack.c.b16 %v4230, %v4223
    %v4574 = vpack.c.b16 %v4231, %v4224
    %v4575 = vpack.c.b16 %v4232, %v4225
    %v4576 = vpack.c.b16 %v4233, %v4226
    %v4577 = vpack.c.b16 %v4234, %v4227
    %v4578 = vpack.c.b16 %v4235, %v4228
    %v4579 = vpack.c.b16 %v4236, %v4229
    %vm4923 = vcmask 130048
    %v4925 = vsel %vm4923, %v2729, 0
    %4927 = vmatprep.subr.bf16.mxu0 %v4238
    %4928 = vmatpush1.bf16.msra.mxu0 %v4237
    %4929 = vmatprep.subr.bf16.mxu0 %v4245
    %4930 = vmatpush1.bf16.msra.mxu0 %v4244
    %4931 = vmatprep.subr.bf16.mxu0 %v4252
    %4932 = vmatpush1.bf16.msra.mxu0 %v4251
    %4933 = vmatprep.subr.bf16.mxu0 %v4259
    %4934 = vmatpush1.bf16.msra.mxu0 %v4258
    %4935 = vmatprep.subr.bf16.mxu0 %v4266
    %4936 = vmatpush1.bf16.msra.mxu0 %v4265
    %4937 = vmatprep.subr.bf16.mxu0 %v4273
    %4938 = vmatpush1.bf16.msra.mxu0 %v4272
    %4939 = vmatprep.subr.bf16.mxu0 %v4280
    %4940 = vmatpush1.bf16.msra.mxu0 %v4279
    %4941 = vmatprep.subr.bf16.mxu0 %v4287
    %4942 = vmatpush1.bf16.msra.mxu0 %v4286
    %4943 = vmatprep.subr.bf16.mxu0 %v4294
    %4944 = vmatpush1.bf16.msra.mxu0 %v4293
    %4945 = vmatprep.subr.bf16.mxu0 %v4301
    %4946 = vmatpush1.bf16.msra.mxu0 %v4300
    %4947 = vmatprep.subr.bf16.mxu0 %v4308
    %4948 = vmatpush1.bf16.msra.mxu0 %v4307
    %4949 = vmatprep.subr.bf16.mxu0 %v4315
    %4950 = vmatpush1.bf16.msra.mxu0 %v4314
    %4951 = vmatprep.subr.bf16.mxu0 %v4322
    %4952 = vmatpush1.bf16.msra.mxu0 %v4321
    %4953 = vmatprep.subr.bf16.mxu0 %v4329
    %4954 = vmatpush1.bf16.msra.mxu0 %v4328
    %4955 = vmatprep.subr.bf16.mxu0 %v4336
    %4956 = vmatpush1.bf16.msra.mxu0 %v4335
    %4957 = vmatprep.subr.bf16.mxu0 %v4343
    %4958 = vmatpush1.bf16.msra.mxu0 %v4342
    %4959 = vmatprep.mubr.bf16.mxu0 %v2724
    %4960 = vmatmul.mubr.bf16.gmra.mrb[0].mxu0 %v2723
    %v4961 = vpop.f32.mrb[0].mxu0
    %v4962 = vadd.f32 %v3127, %v4961
    %v4963 = vpop.f32.mrb[0].mxu0
    %v4964 = vadd.f32 %v3131, %v4963
    %v4965 = vpop.f32.mrb[0].mxu0
    %v4966 = vpop.f32.mrb[0].mxu0
    %4967 = vdwg.mxu0
    %4968 = vmatprep.subr.bf16.mxu0 %v4350
    %4969 = vmatpush1.bf16.msra.mxu0 %v4349
    %4970 = vmatprep.subr.bf16.mxu0 %v4357
    %4971 = vmatpush1.bf16.msra.mxu0 %v4356
    %4972 = vmatprep.subr.bf16.mxu0 %v4364
    %4973 = vmatpush1.bf16.msra.mxu0 %v4363
    %4974 = vmatprep.subr.bf16.mxu0 %v4371
    %4975 = vmatpush1.bf16.msra.mxu0 %v4370
    %4976 = vmatprep.subr.bf16.mxu0 %v4378
    %4977 = vmatpush1.bf16.msra.mxu0 %v4377
    %4978 = vmatprep.subr.bf16.mxu0 %v4385
    %4979 = vmatpush1.bf16.msra.mxu0 %v4384
    %4980 = vmatprep.subr.bf16.mxu0 %v4392
    %4981 = vmatpush1.bf16.msra.mxu0 %v4391
    %4982 = vmatprep.subr.bf16.mxu0 %v4399
    %4983 = vmatpush1.bf16.msra.mxu0 %v4398
    %4984 = vmatprep.subr.bf16.mxu0 %v4406
    %4985 = vmatpush1.bf16.msra.mxu0 %v4405
    %4986 = vmatprep.subr.bf16.mxu0 %v4413
    %4987 = vmatpush1.bf16.msra.mxu0 %v4412
    %4988 = vmatprep.subr.bf16.mxu0 %v4420
    %4989 = vmatpush1.bf16.msra.mxu0 %v4419
    %4990 = vmatprep.subr.bf16.mxu0 %v4427
    %4991 = vmatpush1.bf16.msra.mxu0 %v4426
    %4992 = vmatprep.subr.bf16.mxu0 %v4434
    %4993 = vmatpush1.bf16.msra.mxu0 %v4433
    %4994 = vmatprep.subr.bf16.mxu0 %v4441
    %4995 = vmatpush1.bf16.msra.mxu0 %v4440
    %4996 = vmatprep.subr.bf16.mxu0 %v4448
    %4997 = vmatpush1.bf16.msra.mxu0 %v4447
    %4998 = vmatprep.subr.bf16.mxu0 %v4455
    %4999 = vmatpush1.bf16.msra.mxu0 %v4454
    %5000 = vmatprep.mubr.bf16.mxu0 %v2726
    %5001 = vmatmul.mubr.bf16.gmra.mrb[0].mxu0 %v2725
    %v5002 = vpop.f32.mrb[0].mxu0
    %v5003 = vadd.f32 %v4962, %v5002
    %v5004 = vpop.f32.mrb[0].mxu0
    %v5005 = vadd.f32 %v4964, %v5004
    %v5006 = vpop.f32.mrb[0].mxu0
    %v5007 = vpop.f32.mrb[0].mxu0
    %5008 = vdwg.mxu0
    %5009 = vmatprep.subr.bf16.mxu0 %v4462
    %5010 = vmatpush1.bf16.msra.mxu0 %v4461
    %5011 = vmatprep.subr.bf16.mxu0 %v4469
    %5012 = vmatpush1.bf16.msra.mxu0 %v4468
    %5013 = vmatprep.subr.bf16.mxu0 %v4476
    %5014 = vmatpush1.bf16.msra.mxu0 %v4475
    %5015 = vmatprep.subr.bf16.mxu0 %v4483
    %5016 = vmatpush1.bf16.msra.mxu0 %v4482
    %5017 = vmatprep.subr.bf16.mxu0 %v4490
    %5018 = vmatpush1.bf16.msra.mxu0 %v4489
    %5019 = vmatprep.subr.bf16.mxu0 %v4497
    %5020 = vmatpush1.bf16.msra.mxu0 %v4496
    %5021 = vmatprep.subr.bf16.mxu0 %v4504
    %5022 = vmatpush1.bf16.msra.mxu0 %v4503
    %5023 = vmatprep.subr.bf16.mxu0 %v4511
    %5024 = vmatpush1.bf16.msra.mxu0 %v4510
    %5025 = vmatprep.subr.bf16.mxu0 %v4518
    %5026 = vmatpush1.bf16.msra.mxu0 %v4517
    %5027 = vmatprep.subr.bf16.mxu0 %v4525
    %5028 = vmatpush1.bf16.msra.mxu0 %v4524
    %5029 = vmatprep.subr.bf16.mxu0 %v4532
    %5030 = vmatpush1.bf16.msra.mxu0 %v4531
    %5031 = vmatprep.subr.bf16.mxu0 %v4539
    %5032 = vmatpush1.bf16.msra.mxu0 %v4538
    %5033 = vmatprep.subr.bf16.mxu0 %v4546
    %5034 = vmatpush1.bf16.msra.mxu0 %v4545
    %5035 = vmatprep.subr.bf16.mxu0 %v4553
    %5036 = vmatpush1.bf16.msra.mxu0 %v4552
    %5037 = vmatprep.subr.bf16.mxu0 %v4560
    %5038 = vmatpush1.bf16.msra.mxu0 %v4559
    %5039 = vmatprep.subr.bf16.mxu0 %v4567
    %5040 = vmatpush1.bf16.msra.mxu0 %v4566
    %5041 = vmatprep.mubr.bf16.mxu0 %v2728
    %5042 = vmatmul.mubr.bf16.gmra.mrb[0].mxu0 %v2727
    %v5043 = vpop.f32.mrb[0].mxu0
    %v5044 = vadd.f32 %v5003, %v5043
    %v5045 = vpop.f32.mrb[0].mxu0
    %v5046 = vadd.f32 %v5005, %v5045
    %v5047 = vpop.f32.mrb[0].mxu0
    %v5048 = vpop.f32.mrb[0].mxu0
    %5049 = vdwg.mxu0
    %5050 = vmatprep.subr.bf16.mxu0 %v4574
    %5051 = vmatpush1.bf16.msra.mxu0 %v4573
    %5052 = vmatprep.subr.bf16.mxu0 0
    %5053 = vmatpush1.bf16.msra.mxu0 0
    %5054 = vmatprep.subr.bf16.mxu0 0
    %5055 = vmatpush1.bf16.msra.mxu0 0
    %5056 = vmatprep.subr.bf16.mxu0 0
    %5057 = vmatpush1.bf16.msra.mxu0 0
    %5058 = vmatprep.subr.bf16.mxu0 0
    %5059 = vmatpush1.bf16.msra.mxu0 0
    %5060 = vmatprep.subr.bf16.mxu0 0
    %5061 = vmatpush1.bf16.msra.mxu0 0
    %5062 = vmatprep.subr.bf16.mxu0 0
    %5063 = vmatpush1.bf16.msra.mxu0 0
    %5064 = vmatprep.subr.bf16.mxu0 0
    %5065 = vmatpush1.bf16.msra.mxu0 0
    %5066 = vmatprep.subr.bf16.mxu0 0
    %5067 = vmatpush1.bf16.msra.mxu0 0
    %5068 = vmatprep.subr.bf16.mxu0 0
    %5069 = vmatpush1.bf16.msra.mxu0 0
    %5070 = vmatprep.subr.bf16.mxu0 0
    %5071 = vmatpush1.bf16.msra.mxu0 0
    %5072 = vmatprep.subr.bf16.mxu0 0
    %5073 = vmatpush1.bf16.msra.mxu0 0
    %5074 = vmatprep.subr.bf16.mxu0 0
    %5075 = vmatpush1.bf16.msra.mxu0 0
    %5076 = vmatprep.subr.bf16.mxu0 0
    %5077 = vmatpush1.bf16.msra.mxu0 0
    %5078 = vmatprep.subr.bf16.mxu0 0
    %5079 = vmatpush1.bf16.msra.mxu0 0
    %5080 = vmatprep.subr.bf16.mxu0 0
    %5081 = vmatpush1.bf16.msra.mxu0 0
    %5082 = vmatprep.mubr.bf16.mxu0 0
    %5083 = vmatmul.mubr.bf16.gmra.mrb[0].mxu0 %v4925
    %v5084 = vpop.f32.mrb[0].mxu0
    %v5085 = vadd.f32 %v5044, %v5084
    %v5086 = vpop.f32.mrb[0].mxu0
    %v5087 = vadd.f32 %v5046, %v5086
    %v5088 = vpop.f32.mrb[0].mxu0
    %v5089 = vpop.f32.mrb[0].mxu0
    %5090 = vdwg.mxu0
    %5091 = vmatprep.subr.bf16.mxu0 %v4240
    %5092 = vmatpush1.bf16.msra.mxu0 %v4239
    %5093 = vmatprep.subr.bf16.mxu0 %v4247
    %5094 = vmatpush1.bf16.msra.mxu0 %v4246
    %5095 = vmatprep.subr.bf16.mxu0 %v4254
    %5096 = vmatpush1.bf16.msra.mxu0 %v4253
    %5097 = vmatprep.subr.bf16.mxu0 %v4261
    %5098 = vmatpush1.bf16.msra.mxu0 %v4260
    %5099 = vmatprep.subr.bf16.mxu0 %v4268
    %5100 = vmatpush1.bf16.msra.mxu0 %v4267
    %5101 = vmatprep.subr.bf16.mxu0 %v4275
    %5102 = vmatpush1.bf16.msra.mxu0 %v4274
    %5103 = vmatprep.subr.bf16.mxu0 %v4282
    %5104 = vmatpush1.bf16.msra.mxu0 %v4281
    %5105 = vmatprep.subr.bf16.mxu0 %v4289
    %5106 = vmatpush1.bf16.msra.mxu0 %v4288
    %5107 = vmatprep.subr.bf16.mxu0 %v4296
    %5108 = vmatpush1.bf16.msra.mxu0 %v4295
    %5109 = vmatprep.subr.bf16.mxu0 %v4303
    %5110 = vmatpush1.bf16.msra.mxu0 %v4302
    %5111 = vmatprep.subr.bf16.mxu0 %v4310
    %5112 = vmatpush1.bf16.msra.mxu0 %v4309
    %5113 = vmatprep.subr.bf16.mxu0 %v4317
    %5114 = vmatpush1.bf16.msra.mxu0 %v4316
    %5115 = vmatprep.subr.bf16.mxu0 %v4324
    %5116 = vmatpush1.bf16.msra.mxu0 %v4323
    %5117 = vmatprep.subr.bf16.mxu0 %v4331
    %5118 = vmatpush1.bf16.msra.mxu0 %v4330
    %5119 = vmatprep.subr.bf16.mxu0 %v4338
    %5120 = vmatpush1.bf16.msra.mxu0 %v4337
    %5121 = vmatprep.subr.bf16.mxu0 %v4345
    %5122 = vmatpush1.bf16.msra.mxu0 %v4344
    %5123 = vmatprep.mubr.bf16.mxu0 %v2724
    %5124 = vmatmul.mubr.bf16.gmra.mrb[0].mxu0 %v2723
    %v5125 = vpop.f32.mrb[0].mxu0
    %v5126 = vadd.f32 %v3135, %v5125
    %v5127 = vpop.f32.mrb[0].mxu0
    %v5128 = vadd.f32 %v3139, %v5127
    %v5129 = vpop.f32.mrb[0].mxu0
    %v5130 = vpop.f32.mrb[0].mxu0
    %5131 = vdwg.mxu0
    %5132 = vmatprep.subr.bf16.mxu0 %v4352
    %5133 = vmatpush1.bf16.msra.mxu0 %v4351
    %5134 = vmatprep.subr.bf16.mxu0 %v4359
    %5135 = vmatpush1.bf16.msra.mxu0 %v4358
    %5136 = vmatprep.subr.bf16.mxu0 %v4366
    %5137 = vmatpush1.bf16.msra.mxu0 %v4365
    %5138 = vmatprep.subr.bf16.mxu0 %v4373
    %5139 = vmatpush1.bf16.msra.mxu0 %v4372
    %5140 = vmatprep.subr.bf16.mxu0 %v4380
    %5141 = vmatpush1.bf16.msra.mxu0 %v4379
    %5142 = vmatprep.subr.bf16.mxu0 %v4387
    %5143 = vmatpush1.bf16.msra.mxu0 %v4386
    %5144 = vmatprep.subr.bf16.mxu0 %v4394
    %5145 = vmatpush1.bf16.msra.mxu0 %v4393
    %5146 = vmatprep.subr.bf16.mxu0 %v4401
    %5147 = vmatpush1.bf16.msra.mxu0 %v4400
    %5148 = vmatprep.subr.bf16.mxu0 %v4408
    %5149 = vmatpush1.bf16.msra.mxu0 %v4407
    %5150 = vmatprep.subr.bf16.mxu0 %v4415
    %5151 = vmatpush1.bf16.msra.mxu0 %v4414
    %5152 = vmatprep.subr.bf16.mxu0 %v4422
    %5153 = vmatpush1.bf16.msra.mxu0 %v4421
    %5154 = vmatprep.subr.bf16.mxu0 %v4429
    %5155 = vmatpush1.bf16.msra.mxu0 %v4428
    %5156 = vmatprep.subr.bf16.mxu0 %v4436
    %5157 = vmatpush1.bf16.msra.mxu0 %v4435
    %5158 = vmatprep.subr.bf16.mxu0 %v4443
    %5159 = vmatpush1.bf16.msra.mxu0 %v4442
    %5160 = vmatprep.subr.bf16.mxu0 %v4450
    %5161 = vmatpush1.bf16.msra.mxu0 %v4449
    %5162 = vmatprep.subr.bf16.mxu0 %v4457
    %5163 = vmatpush1.bf16.msra.mxu0 %v4456
    %5164 = vmatprep.mubr.bf16.mxu0 %v2726
    %5165 = vmatmul.mubr.bf16.gmra.mrb[0].mxu0 %v2725
    %v5166 = vpop.f32.mrb[0].mxu0
    %v5167 = vadd.f32 %v5126, %v5166
    %v5168 = vpop.f32.mrb[0].mxu0
    %v5169 = vadd.f32 %v5128, %v5168
    %v5170 = vpop.f32.mrb[0].mxu0
    %v5171 = vpop.f32.mrb[0].mxu0
    %5172 = vdwg.mxu0
    %5173 = vmatprep.subr.bf16.mxu0 %v4464
    %5174 = vmatpush1.bf16.msra.mxu0 %v4463
    %5175 = vmatprep.subr.bf16.mxu0 %v4471
    %5176 = vmatpush1.bf16.msra.mxu0 %v4470
    %5177 = vmatprep.subr.bf16.mxu0 %v4478
    %5178 = vmatpush1.bf16.msra.mxu0 %v4477
    %5179 = vmatprep.subr.bf16.mxu0 %v4485
    %5180 = vmatpush1.bf16.msra.mxu0 %v4484
    %5181 = vmatprep.subr.bf16.mxu0 %v4492
    %5182 = vmatpush1.bf16.msra.mxu0 %v4491
    %5183 = vmatprep.subr.bf16.mxu0 %v4499
    %5184 = vmatpush1.bf16.msra.mxu0 %v4498
    %5185 = vmatprep.subr.bf16.mxu0 %v4506
    %5186 = vmatpush1.bf16.msra.mxu0 %v4505
    %5187 = vmatprep.subr.bf16.mxu0 %v4513
    %5188 = vmatpush1.bf16.msra.mxu0 %v4512
    %5189 = vmatprep.subr.bf16.mxu0 %v4520
    %5190 = vmatpush1.bf16.msra.mxu0 %v4519
    %5191 = vmatprep.subr.bf16.mxu0 %v4527
    %5192 = vmatpush1.bf16.msra.mxu0 %v4526
    %5193 = vmatprep.subr.bf16.mxu0 %v4534
    %5194 = vmatpush1.bf16.msra.mxu0 %v4533
    %5195 = vmatprep.subr.bf16.mxu0 %v4541
    %5196 = vmatpush1.bf16.msra.mxu0 %v4540
    %5197 = vmatprep.subr.bf16.mxu0 %v4548
    %5198 = vmatpush1.bf16.msra.mxu0 %v4547
    %5199 = vmatprep.subr.bf16.mxu0 %v4555
    %5200 = vmatpush1.bf16.msra.mxu0 %v4554
    %5201 = vmatprep.subr.bf16.mxu0 %v4562
    %5202 = vmatpush1.bf16.msra.mxu0 %v4561
    %5203 = vmatprep.subr.bf16.mxu0 %v4569
    %5204 = vmatpush1.bf16.msra.mxu0 %v4568
    %5205 = vmatprep.mubr.bf16.mxu0 %v2728
    %5206 = vmatmul.mubr.bf16.gmra.mrb[0].mxu0 %v2727
    %v5207 = vpop.f32.mrb[0].mxu0
    %v5208 = vadd.f32 %v5167, %v5207
    %v5209 = vpop.f32.mrb[0].mxu0
    %v5210 = vadd.f32 %v5169, %v5209
    %v5211 = vpop.f32.mrb[0].mxu0
    %v5212 = vpop.f32.mrb[0].mxu0
    %5213 = vdwg.mxu0
    %5214 = vmatprep.subr.bf16.mxu0 %v4576
    %5215 = vmatpush1.bf16.msra.mxu0 %v4575
    %5216 = vmatprep.subr.bf16.mxu0 0
    %5217 = vmatpush1.bf16.msra.mxu0 0
    %5218 = vmatprep.subr.bf16.mxu0 0
    %5219 = vmatpush1.bf16.msra.mxu0 0
    %5220 = vmatprep.subr.bf16.mxu0 0
    %5221 = vmatpush1.bf16.msra.mxu0 0
    %5222 = vmatprep.subr.bf16.mxu0 0
    %5223 = vmatpush1.bf16.msra.mxu0 0
    %5224 = vmatprep.subr.bf16.mxu0 0
    %5225 = vmatpush1.bf16.msra.mxu0 0
    %5226 = vmatprep.subr.bf16.mxu0 0
    %5227 = vmatpush1.bf16.msra.mxu0 0
    %5228 = vmatprep.subr.bf16.mxu0 0
    %5229 = vmatpush1.bf16.msra.mxu0 0
    %5230 = vmatprep.subr.bf16.mxu0 0
    %5231 = vmatpush1.bf16.msra.mxu0 0
    %5232 = vmatprep.subr.bf16.mxu0 0
    %5233 = vmatpush1.bf16.msra.mxu0 0
    %5234 = vmatprep.subr.bf16.mxu0 0
    %5235 = vmatpush1.bf16.msra.mxu0 0
    %5236 = vmatprep.subr.bf16.mxu0 0
    %5237 = vmatpush1.bf16.msra.mxu0 0
    %5238 = vmatprep.subr.bf16.mxu0 0
    %5239 = vmatpush1.bf16.msra.mxu0 0
    %5240 = vmatprep.subr.bf16.mxu0 0
    %5241 = vmatpush1.bf16.msra.mxu0 0
    %5242 = vmatprep.subr.bf16.mxu0 0
    %5243 = vmatpush1.bf16.msra.mxu0 0
    %5244 = vmatprep.subr.bf16.mxu0 0
    %5245 = vmatpush1.bf16.msra.mxu0 0
    %5246 = vmatprep.mubr.bf16.mxu0 0
    %5247 = vmatmul.mubr.bf16.gmra.mrb[0].mxu0 %v4925
    %v5248 = vpop.f32.mrb[0].mxu0
    %v5249 = vadd.f32 %v5208, %v5248
    %v5250 = vpop.f32.mrb[0].mxu0
    %v5251 = vadd.f32 %v5210, %v5250
    %v5252 = vpop.f32.mrb[0].mxu0
    %v5253 = vpop.f32.mrb[0].mxu0
    %5254 = vdwg.mxu0
    %5255 = vmatprep.subr.bf16.mxu0 %v4242
    %5256 = vmatpush1.bf16.msra.mxu0 %v4241
    %5257 = vmatprep.subr.bf16.mxu0 %v4249
    %5258 = vmatpush1.bf16.msra.mxu0 %v4248
    %5259 = vmatprep.subr.bf16.mxu0 %v4256
    %5260 = vmatpush1.bf16.msra.mxu0 %v4255
    %5261 = vmatprep.subr.bf16.mxu0 %v4263
    %5262 = vmatpush1.bf16.msra.mxu0 %v4262
    %5263 = vmatprep.subr.bf16.mxu0 %v4270
    %5264 = vmatpush1.bf16.msra.mxu0 %v4269
    %5265 = vmatprep.subr.bf16.mxu0 %v4277
    %5266 = vmatpush1.bf16.msra.mxu0 %v4276
    %5267 = vmatprep.subr.bf16.mxu0 %v4284
    %5268 = vmatpush1.bf16.msra.mxu0 %v4283
    %5269 = vmatprep.subr.bf16.mxu0 %v4291
    %5270 = vmatpush1.bf16.msra.mxu0 %v4290
    %5271 = vmatprep.subr.bf16.mxu0 %v4298
    %5272 = vmatpush1.bf16.msra.mxu0 %v4297
    %5273 = vmatprep.subr.bf16.mxu0 %v4305
    %5274 = vmatpush1.bf16.msra.mxu0 %v4304
    %5275 = vmatprep.subr.bf16.mxu0 %v4312
    %5276 = vmatpush1.bf16.msra.mxu0 %v4311
    %5277 = vmatprep.subr.bf16.mxu0 %v4319
    %5278 = vmatpush1.bf16.msra.mxu0 %v4318
    %5279 = vmatprep.subr.bf16.mxu0 %v4326
    %5280 = vmatpush1.bf16.msra.mxu0 %v4325
    %5281 = vmatprep.subr.bf16.mxu0 %v4333
    %5282 = vmatpush1.bf16.msra.mxu0 %v4332
    %5283 = vmatprep.subr.bf16.mxu0 %v4340
    %5284 = vmatpush1.bf16.msra.mxu0 %v4339
    %5285 = vmatprep.subr.bf16.mxu0 %v4347
    %5286 = vmatpush1.bf16.msra.mxu0 %v4346
    %5287 = vmatprep.mubr.bf16.mxu0 %v2724
    %5288 = vmatmul.mubr.bf16.gmra.mrb[0].mxu0 %v2723
    %v5289 = vpop.f32.mrb[0].mxu0
    %v5290 = vadd.f32 %v3143, %v5289
    %v5291 = vpop.f32.mrb[0].mxu0
    %v5292 = vadd.f32 %v3147, %v5291
    %v5293 = vpop.f32.mrb[0].mxu0
    %v5294 = vpop.f32.mrb[0].mxu0
    %5295 = vdwg.mxu0
    %5296 = vmatprep.subr.bf16.mxu0 %v4354
    %5297 = vmatpush1.bf16.msra.mxu0 %v4353
    %5298 = vmatprep.subr.bf16.mxu0 %v4361
    %5299 = vmatpush1.bf16.msra.mxu0 %v4360
    %5300 = vmatprep.subr.bf16.mxu0 %v4368
    %5301 = vmatpush1.bf16.msra.mxu0 %v4367
    %5302 = vmatprep.subr.bf16.mxu0 %v4375
    %5303 = vmatpush1.bf16.msra.mxu0 %v4374
    %5304 = vmatprep.subr.bf16.mxu0 %v4382
    %5305 = vmatpush1.bf16.msra.mxu0 %v4381
    %5306 = vmatprep.subr.bf16.mxu0 %v4389
    %5307 = vmatpush1.bf16.msra.mxu0 %v4388
    %5308 = vmatprep.subr.bf16.mxu0 %v4396
    %5309 = vmatpush1.bf16.msra.mxu0 %v4395
    %5310 = vmatprep.subr.bf16.mxu0 %v4403
    %5311 = vmatpush1.bf16.msra.mxu0 %v4402
    %5312 = vmatprep.subr.bf16.mxu0 %v4410
    %5313 = vmatpush1.bf16.msra.mxu0 %v4409
    %5314 = vmatprep.subr.bf16.mxu0 %v4417
    %5315 = vmatpush1.bf16.msra.mxu0 %v4416
    %5316 = vmatprep.subr.bf16.mxu0 %v4424
    %5317 = vmatpush1.bf16.msra.mxu0 %v4423
    %5318 = vmatprep.subr.bf16.mxu0 %v4431
    %5319 = vmatpush1.bf16.msra.mxu0 %v4430
    %5320 = vmatprep.subr.bf16.mxu0 %v4438
    %5321 = vmatpush1.bf16.msra.mxu0 %v4437
    %5322 = vmatprep.subr.bf16.mxu0 %v4445
    %5323 = vmatpush1.bf16.msra.mxu0 %v4444
    %5324 = vmatprep.subr.bf16.mxu0 %v4452
    %5325 = vmatpush1.bf16.msra.mxu0 %v4451
    %5326 = vmatprep.subr.bf16.mxu0 %v4459
    %5327 = vmatpush1.bf16.msra.mxu0 %v4458
    %5328 = vmatprep.mubr.bf16.mxu0 %v2726
    %5329 = vmatmul.mubr.bf16.gmra.mrb[0].mxu0 %v2725
    %v5330 = vpop.f32.mrb[0].mxu0
    %v5331 = vadd.f32 %v5290, %v5330
    %v5332 = vpop.f32.mrb[0].mxu0
    %v5333 = vadd.f32 %v5292, %v5332
    %v5334 = vpop.f32.mrb[0].mxu0
    %v5335 = vpop.f32.mrb[0].mxu0
    %5336 = vdwg.mxu0
    %5337 = vmatprep.subr.bf16.mxu0 %v4466
    %5338 = vmatpush1.bf16.msra.mxu0 %v4465
    %5339 = vmatprep.subr.bf16.mxu0 %v4473
    %5340 = vmatpush1.bf16.msra.mxu0 %v4472
    %5341 = vmatprep.subr.bf16.mxu0 %v4480
    %5342 = vmatpush1.bf16.msra.mxu0 %v4479
    %5343 = vmatprep.subr.bf16.mxu0 %v4487
    %5344 = vmatpush1.bf16.msra.mxu0 %v4486
    %5345 = vmatprep.subr.bf16.mxu0 %v4494
    %5346 = vmatpush1.bf16.msra.mxu0 %v4493
    %5347 = vmatprep.subr.bf16.mxu0 %v4501
    %5348 = vmatpush1.bf16.msra.mxu0 %v4500
    %5349 = vmatprep.subr.bf16.mxu0 %v4508
    %5350 = vmatpush1.bf16.msra.mxu0 %v4507
    %5351 = vmatprep.subr.bf16.mxu0 %v4515
    %5352 = vmatpush1.bf16.msra.mxu0 %v4514
    %5353 = vmatprep.subr.bf16.mxu0 %v4522
    %5354 = vmatpush1.bf16.msra.mxu0 %v4521
    %5355 = vmatprep.subr.bf16.mxu0 %v4529
    %5356 = vmatpush1.bf16.msra.mxu0 %v4528
    %5357 = vmatprep.subr.bf16.mxu0 %v4536
    %5358 = vmatpush1.bf16.msra.mxu0 %v4535
    %5359 = vmatprep.subr.bf16.mxu0 %v4543
    %5360 = vmatpush1.bf16.msra.mxu0 %v4542
    %5361 = vmatprep.subr.bf16.mxu0 %v4550
    %5362 = vmatpush1.bf16.msra.mxu0 %v4549
    %5363 = vmatprep.subr.bf16.mxu0 %v4557
    %5364 = vmatpush1.bf16.msra.mxu0 %v4556
    %5365 = vmatprep.subr.bf16.mxu0 %v4564
    %5366 = vmatpush1.bf16.msra.mxu0 %v4563
    %5367 = vmatprep.subr.bf16.mxu0 %v4571
    %5368 = vmatpush1.bf16.msra.mxu0 %v4570
    %5369 = vmatprep.mubr.bf16.mxu0 %v2728
    %5370 = vmatmul.mubr.bf16.gmra.mrb[0].mxu0 %v2727
    %v5371 = vpop.f32.mrb[0].mxu0
    %v5372 = vadd.f32 %v5331, %v5371
    %v5373 = vpop.f32.mrb[0].mxu0
    %v5374 = vadd.f32 %v5333, %v5373
    %v5375 = vpop.f32.mrb[0].mxu0
    %v5376 = vpop.f32.mrb[0].mxu0
    %5377 = vdwg.mxu0
    %5378 = vmatprep.subr.bf16.mxu0 %v4578
    %5379 = vmatpush1.bf16.msra.mxu0 %v4577
    %5380 = vmatprep.subr.bf16.mxu0 0
    %5381 = vmatpush1.bf16.msra.mxu0 0
    %5382 = vmatprep.subr.bf16.mxu0 0
    %5383 = vmatpush1.bf16.msra.mxu0 0
    %5384 = vmatprep.subr.bf16.mxu0 0
    %5385 = vmatpush1.bf16.msra.mxu0 0
    %5386 = vmatprep.subr.bf16.mxu0 0
    %5387 = vmatpush1.bf16.msra.mxu0 0
    %5388 = vmatprep.subr.bf16.mxu0 0
    %5389 = vmatpush1.bf16.msra.mxu0 0
    %5390 = vmatprep.subr.bf16.mxu0 0
    %5391 = vmatpush1.bf16.msra.mxu0 0
    %5392 = vmatprep.subr.bf16.mxu0 0
    %5393 = vmatpush1.bf16.msra.mxu0 0
    %5394 = vmatprep.subr.bf16.mxu0 0
    %5395 = vmatpush1.bf16.msra.mxu0 0
    %5396 = vmatprep.subr.bf16.mxu0 0
    %5397 = vmatpush1.bf16.msra.mxu0 0
    %5398 = vmatprep.subr.bf16.mxu0 0
    %5399 = vmatpush1.bf16.msra.mxu0 0
    %5400 = vmatprep.subr.bf16.mxu0 0
    %5401 = vmatpush1.bf16.msra.mxu0 0
    %5402 = vmatprep.subr.bf16.mxu0 0
    %5403 = vmatpush1.bf16.msra.mxu0 0
    %5404 = vmatprep.subr.bf16.mxu0 0
    %5405 = vmatpush1.bf16.msra.mxu0 0
    %5406 = vmatprep.subr.bf16.mxu0 0
    %5407 = vmatpush1.bf16.msra.mxu0 0
    %5408 = vmatprep.subr.bf16.mxu0 0
    %5409 = vmatpush1.bf16.msra.mxu0 0
    %5410 = vmatprep.mubr.bf16.mxu0 0
    %5411 = vmatmul.mubr.bf16.gmra.mrb[0].mxu0 %v4925
    %v5412 = vpop.f32.mrb[0].mxu0
    %v5413 = vadd.f32 %v5372, %v5412
    %v5414 = vpop.f32.mrb[0].mxu0
    %v5415 = vadd.f32 %v5374, %v5414
    %v5416 = vpop.f32.mrb[0].mxu0
    %v5417 = vpop.f32.mrb[0].mxu0
    %5418 = vdwg.mxu0
    %5419 = vmatprep.subr.bf16.mxu0 0
    %5420 = vmatpush1.bf16.msra.mxu0 %v4243
    %5421 = vmatprep.subr.bf16.mxu0 0
    %5422 = vmatpush1.bf16.msra.mxu0 %v4250
    %5423 = vmatprep.subr.bf16.mxu0 0
    %5424 = vmatpush1.bf16.msra.mxu0 %v4257
    %5425 = vmatprep.subr.bf16.mxu0 0
    %5426 = vmatpush1.bf16.msra.mxu0 %v4264
    %5427 = vmatprep.subr.bf16.mxu0 0
    %5428 = vmatpush1.bf16.msra.mxu0 %v4271
    %5429 = vmatprep.subr.bf16.mxu0 0
    %5430 = vmatpush1.bf16.msra.mxu0 %v4278
    %5431 = vmatprep.subr.bf16.mxu0 0
    %5432 = vmatpush1.bf16.msra.mxu0 %v4285
    %5433 = vmatprep.subr.bf16.mxu0 0
    %5434 = vmatpush1.bf16.msra.mxu0 %v4292
    %5435 = vmatprep.subr.bf16.mxu0 0
    %5436 = vmatpush1.bf16.msra.mxu0 %v4299
    %5437 = vmatprep.subr.bf16.mxu0 0
    %5438 = vmatpush1.bf16.msra.mxu0 %v4306
    %5439 = vmatprep.subr.bf16.mxu0 0
    %5440 = vmatpush1.bf16.msra.mxu0 %v4313
    %5441 = vmatprep.subr.bf16.mxu0 0
    %5442 = vmatpush1.bf16.msra.mxu0 %v4320
    %5443 = vmatprep.subr.bf16.mxu0 0
    %5444 = vmatpush1.bf16.msra.mxu0 %v4327
    %5445 = vmatprep.subr.bf16.mxu0 0
    %5446 = vmatpush1.bf16.msra.mxu0 %v4334
    %5447 = vmatprep.subr.bf16.mxu0 0
    %5448 = vmatpush1.bf16.msra.mxu0 %v4341
    %5449 = vmatprep.subr.bf16.mxu0 0
    %5450 = vmatpush1.bf16.msra.mxu0 %v4348
    %5451 = vmatprep.mubr.bf16.mxu0 %v2724
    %5452 = vmatmul.mubr.bf16.gmra.mrb[0].mxu0 %v2723
    %v5453 = vpop.f32.mrb[0].mxu0
    %v5454 = vadd.f32 %v3151, %v5453
    %v5455 = vpop.f32.mrb[0].mxu0
    %v5456 = vpop.f32.mrb[0].mxu0
    %v5457 = vpop.f32.mrb[0].mxu0
    %5458 = vdwg.mxu0
    %5459 = vmatprep.subr.bf16.mxu0 0
    %5460 = vmatpush1.bf16.msra.mxu0 %v4355
    %5461 = vmatprep.subr.bf16.mxu0 0
    %5462 = vmatpush1.bf16.msra.mxu0 %v4362
    %5463 = vmatprep.subr.bf16.mxu0 0
    %5464 = vmatpush1.bf16.msra.mxu0 %v4369
    %5465 = vmatprep.subr.bf16.mxu0 0
    %5466 = vmatpush1.bf16.msra.mxu0 %v4376
    %5467 = vmatprep.subr.bf16.mxu0 0
    %5468 = vmatpush1.bf16.msra.mxu0 %v4383
    %5469 = vmatprep.subr.bf16.mxu0 0
    %5470 = vmatpush1.bf16.msra.mxu0 %v4390
    %5471 = vmatprep.subr.bf16.mxu0 0
    %5472 = vmatpush1.bf16.msra.mxu0 %v4397
    %5473 = vmatprep.subr.bf16.mxu0 0
    %5474 = vmatpush1.bf16.msra.mxu0 %v4404
    %5475 = vmatprep.subr.bf16.mxu0 0
    %5476 = vmatpush1.bf16.msra.mxu0 %v4411
    %5477 = vmatprep.subr.bf16.mxu0 0
    %5478 = vmatpush1.bf16.msra.mxu0 %v4418
    %5479 = vmatprep.subr.bf16.mxu0 0
    %5480 = vmatpush1.bf16.msra.mxu0 %v4425
    %5481 = vmatprep.subr.bf16.mxu0 0
    %5482 = vmatpush1.bf16.msra.mxu0 %v4432
    %5483 = vmatprep.subr.bf16.mxu0 0
    %5484 = vmatpush1.bf16.msra.mxu0 %v4439
    %5485 = vmatprep.subr.bf16.mxu0 0
    %5486 = vmatpush1.bf16.msra.mxu0 %v4446
    %5487 = vmatprep.subr.bf16.mxu0 0
    %5488 = vmatpush1.bf16.msra.mxu0 %v4453
    %5489 = vmatprep.subr.bf16.mxu0 0
    %5490 = vmatpush1.bf16.msra.mxu0 %v4460
    %5491 = vmatprep.mubr.bf16.mxu0 %v2726
    %5492 = vmatmul.mubr.bf16.gmra.mrb[0].mxu0 %v2725
    %v5493 = vpop.f32.mrb[0].mxu0
    %v5494 = vadd.f32 %v5454, %v5493
    %v5495 = vpop.f32.mrb[0].mxu0
    %v5496 = vpop.f32.mrb[0].mxu0
    %v5497 = vpop.f32.mrb[0].mxu0
    %5498 = vdwg.mxu0
    %5499 = vmatprep.subr.bf16.mxu0 0
    %5500 = vmatpush1.bf16.msra.mxu0 %v4467
    %5501 = vmatprep.subr.bf16.mxu0 0
    %5502 = vmatpush1.bf16.msra.mxu0 %v4474
    %5503 = vmatprep.subr.bf16.mxu0 0
    %5504 = vmatpush1.bf16.msra.mxu0 %v4481
    %5505 = vmatprep.subr.bf16.mxu0 0
    %5506 = vmatpush1.bf16.msra.mxu0 %v4488
    %5507 = vmatprep.subr.bf16.mxu0 0
    %5508 = vmatpush1.bf16.msra.mxu0 %v4495
    %5509 = vmatprep.subr.bf16.mxu0 0
    %5510 = vmatpush1.bf16.msra.mxu0 %v4502
    %5511 = vmatprep.subr.bf16.mxu0 0
    %5512 = vmatpush1.bf16.msra.mxu0 %v4509
    %5513 = vmatprep.subr.bf16.mxu0 0
    %5514 = vmatpush1.bf16.msra.mxu0 %v4516
    %5515 = vmatprep.subr.bf16.mxu0 0
    %5516 = vmatpush1.bf16.msra.mxu0 %v4523
    %5517 = vmatprep.subr.bf16.mxu0 0
    %5518 = vmatpush1.bf16.msra.mxu0 %v4530
    %5519 = vmatprep.subr.bf16.mxu0 0
    %5520 = vmatpush1.bf16.msra.mxu0 %v4537
    %5521 = vmatprep.subr.bf16.mxu0 0
    %5522 = vmatpush1.bf16.msra.mxu0 %v4544
    %5523 = vmatprep.subr.bf16.mxu0 0
    %5524 = vmatpush1.bf16.msra.mxu0 %v4551
    %5525 = vmatprep.subr.bf16.mxu0 0
    %5526 = vmatpush1.bf16.msra.mxu0 %v4558
    %5527 = vmatprep.subr.bf16.mxu0 0
    %5528 = vmatpush1.bf16.msra.mxu0 %v4565
    %5529 = vmatprep.subr.bf16.mxu0 0
    %5530 = vmatpush1.bf16.msra.mxu0 %v4572
    %5531 = vmatprep.mubr.bf16.mxu0 %v2728
    %5532 = vmatmul.mubr.bf16.gmra.mrb[0].mxu0 %v2727
    %v5533 = vpop.f32.mrb[0].mxu0
    %v5534 = vadd.f32 %v5494, %v5533
    %v5535 = vpop.f32.mrb[0].mxu0
    %v5536 = vpop.f32.mrb[0].mxu0
    %v5537 = vpop.f32.mrb[0].mxu0
    %5538 = vdwg.mxu0
    %5539 = vmatprep.subr.bf16.mxu0 0
    %5540 = vmatpush1.bf16.msra.mxu0 %v4579
    %5541 = vmatprep.subr.bf16.mxu0 0
    %5542 = vmatpush1.bf16.msra.mxu0 0
    %5543 = vmatprep.subr.bf16.mxu0 0
    %5544 = vmatpush1.bf16.msra.mxu0 0
    %5545 = vmatprep.subr.bf16.mxu0 0
    %5546 = vmatpush1.bf16.msra.mxu0 0
    %5547 = vmatprep.subr.bf16.mxu0 0
    %5548 = vmatpush1.bf16.msra.mxu0 0
    %5549 = vmatprep.subr.bf16.mxu0 0
    %5550 = vmatpush1.bf16.msra.mxu0 0
    %5551 = vmatprep.subr.bf16.mxu0 0
    %5552 = vmatpush1.bf16.msra.mxu0 0
    %5553 = vmatprep.subr.bf16.mxu0 0
    %5554 = vmatpush1.bf16.msra.mxu0 0
    %5555 = vmatprep.subr.bf16.mxu0 0
    %5556 = vmatpush1.bf16.msra.mxu0 0
    %5557 = vmatprep.subr.bf16.mxu0 0
    %5558 = vmatpush1.bf16.msra.mxu0 0
    %5559 = vmatprep.subr.bf16.mxu0 0
    %5560 = vmatpush1.bf16.msra.mxu0 0
    %5561 = vmatprep.subr.bf16.mxu0 0
    %5562 = vmatpush1.bf16.msra.mxu0 0
    %5563 = vmatprep.subr.bf16.mxu0 0
    %5564 = vmatpush1.bf16.msra.mxu0 0
    %5565 = vmatprep.subr.bf16.mxu0 0
    %5566 = vmatpush1.bf16.msra.mxu0 0
    %5567 = vmatprep.subr.bf16.mxu0 0
    %5568 = vmatpush1.bf16.msra.mxu0 0
    %5569 = vmatprep.subr.bf16.mxu0 0
    %5570 = vmatpush1.bf16.msra.mxu0 0
    %5571 = vmatprep.mubr.bf16.mxu0 0
    %5572 = vmatmul.mubr.bf16.gmra.mrb[0].mxu0 %v4925
    %v5573 = vpop.f32.mrb[0].mxu0
    %v5574 = vadd.f32 %v5534, %v5573
    %v5575 = vpop.f32.mrb[0].mxu0
    %v5576 = vpop.f32.mrb[0].mxu0
    %v5577 = vpop.f32.mrb[0].mxu0
    %5578 = vdwg.mxu0
    %v5579 = vmax.f32 %v5085, 0.0
    %v5580 = vmax.f32 %v5087, 0.0
    %v5581 = vmax.f32 %v5249, 0.0
    %v5582 = vmax.f32 %v5251, 0.0
    %v5583 = vmax.f32 %v5413, 0.0
    %v5584 = vmax.f32 %v5415, 0.0
    %v5585 = vmax.f32 %v5574, 0.0
    %v5586 = vld [vmem:[%s1] sm:$0x3]
    %v5587 = vpack.c.bf16 %v5586, %v5586
    %v5588 = vld [vmem:[%s6] sm:$0xf]
    %v5589 = vld [vmem:[%s7] sm:$0x1]
    %v5591 = vlaneseq
    %v5592 = vshrl.u32 %v5591, 7
    %v5593 = vsub.s32 0, %v5592
    %v5594 = vrot.slane %v5589, %v5593
    %vm5596 = vcmask 64512
    %v5598 = vsel %vm5596, %v5587, 0
    %vm5600 = vcmask 1043456
    %v5602 = vsel %vm5600, %v5588, 0
    %5604 = vmatprep.subr.bf16.mxu0 0
    %5605 = vmatpush1.bf16.msra.mxu0 %v5602
    %5606 = vmatprep.subr.bf16.mxu0 0
    %5607 = vmatpush1.bf16.msra.mxu0 0
    %5608 = vmatprep.subr.bf16.mxu0 0
    %5609 = vmatpush1.bf16.msra.mxu0 0
    %5610 = vmatprep.subr.bf16.mxu0 0
    %5611 = vmatpush1.bf16.msra.mxu0 0
    %5612 = vmatprep.subr.bf16.mxu0 0
    %5613 = vmatpush1.bf16.msra.mxu0 0
    %5614 = vmatprep.subr.bf16.mxu0 0
    %5615 = vmatpush1.bf16.msra.mxu0 0
    %5616 = vmatprep.subr.bf16.mxu0 0
    %5617 = vmatpush1.bf16.msra.mxu0 0
    %5618 = vmatprep.subr.bf16.mxu0 0
    %5619 = vmatpush1.bf16.msra.mxu0 0
    %5620 = vmatprep.subr.bf16.mxu0 0
    %5621 = vmatpush1.bf16.msra.mxu0 0
    %5622 = vmatprep.subr.bf16.mxu0 0
    %5623 = vmatpush1.bf16.msra.mxu0 0
    %5624 = vmatprep.subr.bf16.mxu0 0
    %5625 = vmatpush1.bf16.msra.mxu0 0
    %5626 = vmatprep.subr.bf16.mxu0 0
    %5627 = vmatpush1.bf16.msra.mxu0 0
    %5628 = vmatprep.subr.bf16.mxu0 0
    %5629 = vmatpush1.bf16.msra.mxu0 0
    %5630 = vmatprep.subr.bf16.mxu0 0
    %5631 = vmatpush1.bf16.msra.mxu0 0
    %5632 = vmatprep.subr.bf16.mxu0 0
    %5633 = vmatpush1.bf16.msra.mxu0 0
    %5634 = vmatprep.subr.bf16.mxu0 0
    %5635 = vmatpush1.bf16.msra.mxu0 0
    %5636 = vmatprep.mubr.bf16.mxu0 0
    %5637 = vmatmul.mubr.bf16.gmra.mrb[0].mxu0 %v5598
    %v5638 = vpop.f32.mrb[0].mxu0
    %v5639 = vadd.f32 %v5594, %v5638
    %v5640 = vpop.f32.mrb[0].mxu0
    %v5641 = vpop.f32.mrb[0].mxu0
    %v5642 = vpop.f32.mrb[0].mxu0
    %5643 = vdwg.mxu0
    %v5644 = vmax.f32 %v5639, 0.0
    %v5645 = vpack.c.bf16 %v5644, %v5644
    %v5646 = vld [vmem:[%s8] sm:$0xf]
    %v5647 = vld [vmem:[%s8 + $0x4] sm:$0xf]
    %v5648 = vld [vmem:[%s8 + $0x8] sm:$0xf]
    %v5649 = vld [vmem:[%s8 + $0xc] sm:$0xf]
    %v5650 = vld [vmem:[%s9] sm:$0x1]
    %v5652 = vlaneseq
    %v5653 = vshrl.u32 %v5652, 7
    %v5654 = vsub.s32 0, %v5653
    %v5655 = vrot.slane %v5650, %v5654
    %v5661 = vunpack.c.l.b16 %v5646
    %v5662 = vunpack.c.l.b16 %v5647
    %v5663 = vunpack.c.l.b16 %v5648
    %v5664 = vunpack.c.l.b16 %v5649
    %v5665 = vpack.c.b16 %v5662, %v5661
    %v5666 = vpack.c.b16 %v5664, %v5663
    %vm5669 = vcmask 261120
    %v5671 = vsel %vm5669, %v5645, 0
    %5673 = vmatprep.subr.bf16.mxu0 0
    %5674 = vmatpush1.bf16.msra.mxu0 %v5665
    %5675 = vmatprep.subr.bf16.mxu0 0
    %5676 = vmatpush1.bf16.msra.mxu0 %v5666
    %5677 = vmatprep.subr.bf16.mxu0 0
    %5678 = vmatpush1.bf16.msra.mxu0 0
    %5679 = vmatprep.subr.bf16.mxu0 0
    %5680 = vmatpush1.bf16.msra.mxu0 0
    %5681 = vmatprep.subr.bf16.mxu0 0
    %5682 = vmatpush1.bf16.msra.mxu0 0
    %5683 = vmatprep.subr.bf16.mxu0 0
    %5684 = vmatpush1.bf16.msra.mxu0 0
    %5685 = vmatprep.subr.bf16.mxu0 0
    %5686 = vmatpush1.bf16.msra.mxu0 0
    %5687 = vmatprep.subr.bf16.mxu0 0
    %5688 = vmatpush1.bf16.msra.mxu0 0
    %5689 = vmatprep.subr.bf16.mxu0 0
    %5690 = vmatpush1.bf16.msra.mxu0 0
    %5691 = vmatprep.subr.bf16.mxu0 0
    %5692 = vmatpush1.bf16.msra.mxu0 0
    %5693 = vmatprep.subr.bf16.mxu0 0
    %5694 = vmatpush1.bf16.msra.mxu0 0
    %5695 = vmatprep.subr.bf16.mxu0 0
    %5696 = vmatpush1.bf16.msra.mxu0 0
    %5697 = vmatprep.subr.bf16.mxu0 0
    %5698 = vmatpush1.bf16.msra.mxu0 0
    %5699 = vmatprep.subr.bf16.mxu0 0
    %5700 = vmatpush1.bf16.msra.mxu0 0
    %5701 = vmatprep.subr.bf16.mxu0 0
    %5702 = vmatpush1.bf16.msra.mxu0 0
    %5703 = vmatprep.subr.bf16.mxu0 0
    %5704 = vmatpush1.bf16.msra.mxu0 0
    %5705 = vmatprep.mubr.bf16.mxu0 0
    %5706 = vmatmul.mubr.bf16.gmra.mrb[0].mxu0 %v5671
    %v5707 = vpop.f32.mrb[0].mxu0
    %v5708 = vadd.f32 %v5655, %v5707
    %v5709 = vpop.f32.mrb[0].mxu0
    %v5710 = vpop.f32.mrb[0].mxu0
    %v5711 = vpop.f32.mrb[0].mxu0
    %5712 = vdwg.mxu0
    %v5713 = vmax.f32 %v5708, 0.0
    %v5721 = vcombine.low %v5579, %v5580
    %v5722 = vcombine.low %v5581, %v5582
    %v5724 = vunpack.c.l.s4 1983009808
    %v5725 = vunpack.c.0.s8 %v5724
    %v5726 = vlaneseq
    %v5727 = vshrl.u32 %v5726, 7
    %v5728 = vsub.s32 %v5725, %v5727
    %v5729 = vrot.slane %v5721, %v5728
    %v5731 = vunpack.c.l.s4 1983009808
    %v5732 = vunpack.c.0.s8 %v5731
    %v5733 = vlaneseq
    %v5734 = vshrl.u32 %v5733, 7
    %v5735 = vsub.s32 %v5732, %v5734
    %v5736 = vrot.slane %v5722, %v5735
    %v5737 = vcombine.low %v5729, %v5736
    %v5738 = vcombine.low %v5583, %v5584
    %v5740 = vunpack.c.l.s4 1983009808
    %v5741 = vunpack.c.0.s8 %v5740
    %v5742 = vlaneseq
    %v5743 = vshrl.u32 %v5742, 7
    %v5744 = vsub.s32 %v5741, %v5743
    %v5745 = vrot.slane %v5738, %v5744
    %v5747 = vunpack.c.l.s4 1983009808
    %v5748 = vunpack.c.0.s8 %v5747
    %v5749 = vlaneseq
    %v5750 = vshrl.u32 %v5749, 7
    %v5751 = vsub.s32 %v5748, %v5750
    %v5752 = vrot.slane %v5585, %v5751
    %v5753 = vcombine.low %v5745, %v5752
    %5756 = vst [vmem:[#allocation2] sm:$0xff] %v5737
    %vm5757 = vcmask 1041408
    %vm5758 = vcmask 1043458
    %vm5759 = vmor %vm5758, %vm5757
    %vm5760 = vcmask 259076
    %vm5761 = vmor %vm5760, %vm5759
    %5762 = vst.msk [vmem:[#allocation2 + $0x8] sm:$0x3f] %vm5761, %v5753
    %v5765 = vunpack.c.l.s4 1983009808
    %v5766 = vunpack.c.0.s8 %v5765
    %v5767 = vlaneseq
    %v5768 = vshrl.u32 %v5767, 7
    %v5769 = vsub.s32 %v5766, %v5768
    %v5770 = vrot.slane %v5713, %v5769
    %5771 = vrot.lane.b32.xlu0 %v5770, 32
    %v5772 = vpop.permute.xlu0 %5771
    %vm5774 = vcmask 517376
    %5775 = vst.msk [vmem:[#allocation2 + $0xc] sm:$0x3] %vm5774, %v5772
    // Predicated region
    $region42: #{_forward_impl.1} parent=1 // pred_check
      _
    $region43: #{_forward_impl.1} parent=1 // pred_check_branch
      %5777 = sbr.rel (0) target = $region45
    $region44: #{_forward_impl.1} parent=1 // pred_region
      %s5779 = ssub.s32 224, 224
      %5780 = vsyncadd [#allocation3], %s5779
      %s5782 = sshll.u32 [#allocation2], 4
      %s5783 = int_to_ptr.vmem [resolvable:$true] %s5782
      %5785 = dma.vmem_to_hbm [thread:$0]  %s5783, 224, %s10, [#allocation3]
    $region45: #{_forward_impl.1} parent=1 // pred_fallthru
      _
    // Predicated region
    $region46: #{_forward_impl.1} parent=1 // pred_check
      _
    $region47: #{_forward_impl.1} parent=1 // pred_check_branch
      %5787 = sbr.rel (0) target = $region49
    $region48: #{_forward_impl.1} parent=1 // pred_region
      %5788 = dma.done [#allocation3], 224
    $region49: #{_forward_impl.1} parent=1 // pred_fallthru
      _
    %5789 = vsyncpa [#allocation3], 1

</llo_original>
